<compile_context>
chip_gen: v7x
topology: tpu7x:2x2x1
jax: 0.10.0
libtpu: 0.0.40
codegen_flags: <defaults>
</compile_context>

<pallas_src>
import jax
import jax.numpy as jnp
from jax.experimental import pallas as pl
from jax.experimental.pallas import tpu as pltpu


# ----------------------------------------------------------------------------
# Kernel
# ----------------------------------------------------------------------------
def _generator_kernel(latent_ref, w1_ref, b1_ref, w2_ref, b2_ref,
                      w3_ref, b3_ref, out_ref, h2_ref):
    # Hoisted mini-MLP: run only on the first inner-axis step.  Because the
    # inner grid axis is "arbitrary" (serialized per core), every core sees
    # k == 0 before it uses h2_ref, even when the outer "parallel" axis is
    # split across TensorCores on v7x (scratch is per-core).
    @pl.when(pl.program_id(1) == 0)
    def _():
        h1 = jnp.dot(latent_ref[...], w1_ref[...],
                     preferred_element_type=jnp.float32) + b1_ref[...]
        h1 = jnp.maximum(h1, 0.0)
        h2 = jnp.dot(h1, w2_ref[...],
                     preferred_element_type=jnp.float32) + b2_ref[...]
        h2_ref[...] = jnp.maximum(h2, 0.0).astype(h2_ref.dtype)

    # Hot path: (1, 32) bf16 @ (32, TN) bf16 on the MXU, f32 accumulate,
    # bias add on VPU, sigmoid on EUP.
    z = jnp.dot(h2_ref[...], w3_ref[...],
                preferred_element_type=jnp.float32) + b3_ref[...]
    out_ref[...] = jax.nn.sigmoid(z)


# ----------------------------------------------------------------------------
# Wrapper
# ----------------------------------------------------------------------------
def generator_forward(latent, w1, b1, w2, b2, w3, b3, *, tn=12288):
    """Pallas forward pass. latent: (1, 100) float32 -> (3, 128, 128)."""
    k_hidden, n_out = w3.shape            # (32, 3*128*128 = 49152)
    assert n_out % tn == 0, "output dim must be divisible by the tile width"
    n_tiles = n_out // tn                  # 4 with the default tn

    # Small leading "parallel" axis so a v7x megacore can shard the W3 stream
    # across both TensorCores; the inner "arbitrary" axis carries the tiles.
    outer = 2 if n_tiles % 2 == 0 else 1
    inner = n_tiles // outer

    # 2-D views of the biases so they tile cleanly as (1, K) / (1, TN).
    b1_2d = b1.reshape(1, -1)
    b2_2d = b2.reshape(1, -1)
    b3_2d = b3.reshape(1, -1)

    # The only HBM-heavy operand: stream it as bf16 (halves bytes).
    w3_bf16 = w3.astype(jnp.bfloat16)

    cost = pl.CostEstimate(
        flops=2 * k_hidden * n_out,                  # dominant matmul
        transcendentals=n_out,                       # sigmoid
        bytes_accessed=w3_bf16.size * 2 + n_out * 4 + n_out * 4,
    )

    out_flat = pl.pallas_call(
        _generator_kernel,
        out_shape=jax.ShapeDtypeStruct((1, n_out), jnp.float32),
        grid_spec=pltpu.PrefetchScalarGridSpec(
            num_scalar_prefetch=0,
            grid=(outer, inner),
            in_specs=[
                pl.BlockSpec((1, latent.shape[1]), lambda i, k: (0, 0)),   # latent
                pl.BlockSpec(w1.shape, lambda i, k: (0, 0)),               # W1
                pl.BlockSpec((1, b1.shape[0]), lambda i, k: (0, 0)),       # b1
                pl.BlockSpec(w2.shape, lambda i, k: (0, 0)),               # W2
                pl.BlockSpec((1, b2.shape[0]), lambda i, k: (0, 0)),       # b2
                pl.BlockSpec((k_hidden, tn),
                             lambda i, k: (0, i * inner + k)),             # W3 tile
                pl.BlockSpec((1, tn),
                             lambda i, k: (0, i * inner + k)),             # b3 tile
            ],
            out_specs=pl.BlockSpec((1, tn), lambda i, k: (0, i * inner + k)),
            scratch_shapes=[pltpu.VMEM((1, k_hidden), jnp.bfloat16)],      # h2
        ),
        compiler_params=pltpu.CompilerParams(
            dimension_semantics=("parallel", "arbitrary"),
        ),
        cost_estimate=cost,
    )(latent, w1, b1_2d, w2, b2_2d, w3_bf16, b3_2d)

    # torch.reshape(output, (3, 128, 128)) — valid because batch == 1.
    return out_flat.reshape(3, 128, 128)


# ----------------------------------------------------------------------------
# Reference + driver
# ----------------------------------------------------------------------------
def _init_linear(key, fan_in, fan_out):
    """Deterministic PyTorch-style nn.Linear init: U(-1/sqrt(fan_in), +)."""
    kw, kb = jax.random.split(key)
    bound = 1.0 / jnp.sqrt(jnp.float32(fan_in))
    # Stored as (fan_in, fan_out) so forward is x @ W + b.
    w = jax.random.uniform(kw, (fan_in, fan_out), jnp.float32, -bound, bound)
    b = jax.random.uniform(kb, (fan_out,), jnp.float32, -bound, bound)
    return w, b


def _reference_forward(latent, w1, b1, w2, b2, w3, b3):
    h1 = jnp.maximum(latent @ w1 + b1, 0.0)
    h2 = jnp.maximum(h1 @ w2 + b2, 0.0)
    out = jax.nn.sigmoid(h2 @ w3 + b3)
    return out.reshape(3, 128, 128)


if __name__ == "__main__":
    key = jax.random.PRNGKey(0)
    k_lat, k1, k2, k3 = jax.random.split(key, 4)

    input_dim = 100
    hidden = 32
    output_dim = (3, 128, 128)
    n_out = 3 * 128 * 128

    # Parameters (deterministic synthetic init, no checkpoint load).
    # TODO(synk): optimizer / criterion / load_state_dict are training infra,
    # not part of the forward pass, and are not translated.
    w1, b1 = _init_linear(k1, input_dim, hidden)
    w2, b2 = _init_linear(k2, hidden, hidden)
    w3, b3 = _init_linear(k3, hidden, n_out)

    # Default latent in the module: torch.rand(1, 100) ~ U[0, 1).
    latent = jax.random.uniform(k_lat, (1, input_dim), jnp.float32)

    out = generator_forward(latent, w1, b1, w2, b2, w3, b3)
    out = jax.block_until_ready(out)

    assert out.shape == output_dim, out.shape
    ref = _reference_forward(latent, w1, b1, w2, b2, w3, b3)
    # Tolerance loosened: W3 (and h2) go through bf16 for the big matmul.
    assert jnp.allclose(out, ref, atol=1e-2, rtol=0.0), "mismatch vs reference"

    print("KERNEL_OK")
</pallas_src>

<mosaic_0001>
module attributes {stable_mosaic.version = 11 : i64} {
  func.func @_generator_kernel(%arg0: i32, %arg1: i32, %arg2: memref<1x100xf32, #tpu.memory_space<vmem>>, %arg3: memref<100x32xf32, #tpu.memory_space<vmem>>, %arg4: memref<1x32xf32, #tpu.memory_space<vmem>>, %arg5: memref<32x32xf32, #tpu.memory_space<vmem>>, %arg6: memref<1x32xf32, #tpu.memory_space<vmem>>, %arg7: memref<32x12288xbf16, #tpu.memory_space<vmem>>, %arg8: memref<1x12288xf32, #tpu.memory_space<vmem>>, %arg9: memref<1x12288xf32, #tpu.memory_space<vmem>>, %arg10: memref<1x32xbf16, #tpu.memory_space<vmem>>) attributes {dimension_semantics = [#tpu.dimension_semantics<parallel>, #tpu.dimension_semantics<arbitrary>], iteration_bounds = array<i64: 2, 2>, scalar_prefetch = 0 : i64, scratch_operands = 1 : i64, tpu.core_type = #tpu.core_type<tc>, window_params = [{pipeline_mode = #tpu.pipeline_mode<synchronous>, transform_indices = @transform_0, window_bounds = array<i64: 1, 100>}, {pipeline_mode = #tpu.pipeline_mode<synchronous>, transform_indices = @transform_1, window_bounds = array<i64: 100, 32>}, {pipeline_mode = #tpu.pipeline_mode<synchronous>, transform_indices = @transform_2, window_bounds = array<i64: 1, 32>}, {pipeline_mode = #tpu.pipeline_mode<synchronous>, transform_indices = @transform_3, window_bounds = array<i64: 32, 32>}, {pipeline_mode = #tpu.pipeline_mode<synchronous>, transform_indices = @transform_4, window_bounds = array<i64: 1, 32>}, {transform_indices = @transform_5, window_bounds = array<i64: 32, 12288>}, {transform_indices = @transform_6, window_bounds = array<i64: 1, 12288>}, {transform_indices = @transform_7, window_bounds = array<i64: 1, 12288>}]} {
    %c0_i32 = arith.constant 0 : i32
    %0 = arith.cmpi eq, %arg1, %c0_i32 : i32
    %1 = arith.extui %0 : i1 to i32
    %c0_i32_0 = arith.constant 0 : i32
    %2 = arith.cmpi ne, %1, %c0_i32_0 : i32
    scf.if %2 {
      %c0_9 = arith.constant 0 : index
      %c0_10 = arith.constant 0 : index
      %14 = vector.load %arg2[%c0_9, %c0_10] : memref<1x100xf32, #tpu.memory_space<vmem>>, vector<1x100xf32>
      %c0_11 = arith.constant 0 : index
      %c0_12 = arith.constant 0 : index
      %15 = vector.load %arg3[%c0_11, %c0_12] : memref<100x32xf32, #tpu.memory_space<vmem>>, vector<100x32xf32>
      %cst_13 = arith.constant dense<0.000000e+00> : vector<1x32xf32>
      %16 = tpu.matmul %14, %15, %cst_13 {dimension_numbers = #tpu.dot_dimension_numbers<[1], [0], [0], [1], [0, 0, 1, 1], [], []>} : vector<1x100xf32>, vector<100x32xf32>, vector<1x32xf32> -> vector<1x32xf32>
      %c0_14 = arith.constant 0 : index
      %c0_15 = arith.constant 0 : index
      %17 = vector.load %arg4[%c0_14, %c0_15] : memref<1x32xf32, #tpu.memory_space<vmem>>, vector<1x32xf32>
      %18 = arith.addf %16, %17 : vector<1x32xf32>
      %cst_16 = arith.constant 0.000000e+00 : f32
      %19 = vector.broadcast %cst_16 : f32 to vector<1x32xf32>
      %20 = arith.maximumf %18, %19 : vector<1x32xf32>
      %c0_17 = arith.constant 0 : index
      %c0_18 = arith.constant 0 : index
      %21 = vector.load %arg5[%c0_17, %c0_18] : memref<32x32xf32, #tpu.memory_space<vmem>>, vector<32x32xf32>
      %cst_19 = arith.constant dense<0.000000e+00> : vector<1x32xf32>
      %22 = tpu.matmul %20, %21, %cst_19 {dimension_numbers = #tpu.dot_dimension_numbers<[1], [0], [0], [1], [0, 0, 1, 1], [], []>} : vector<1x32xf32>, vector<32x32xf32>, vector<1x32xf32> -> vector<1x32xf32>
      %c0_20 = arith.constant 0 : index
      %c0_21 = arith.constant 0 : index
      %23 = vector.load %arg6[%c0_20, %c0_21] : memref<1x32xf32, #tpu.memory_space<vmem>>, vector<1x32xf32>
      %24 = arith.addf %22, %23 : vector<1x32xf32>
      %cst_22 = arith.constant 0.000000e+00 : f32
      %25 = vector.broadcast %cst_22 : f32 to vector<1x32xf32>
      %26 = arith.maximumf %24, %25 : vector<1x32xf32>
      %27 = arith.truncf %26 : vector<1x32xf32> to vector<1x32xbf16>
      %c0_23 = arith.constant 0 : index
      %c0_24 = arith.constant 0 : index
      %28 = vector.load %arg10[%c0_23, %c0_24] : memref<1x32xbf16, #tpu.memory_space<vmem>>, vector<1x32xbf16>
      tpu.vector_store %arg10[%c0_23, %c0_24], %27 {strides = array<i32>} : memref<1x32xbf16, #tpu.memory_space<vmem>>, vector<1x32xbf16>,
    } else {
    }
    %c0 = arith.constant 0 : index
    %c0_1 = arith.constant 0 : index
    %3 = vector.load %arg10[%c0, %c0_1] : memref<1x32xbf16, #tpu.memory_space<vmem>>, vector<1x32xbf16>
    %c0_2 = arith.constant 0 : index
    %c0_3 = arith.constant 0 : index
    %4 = vector.load %arg7[%c0_2, %c0_3] : memref<32x12288xbf16, #tpu.memory_space<vmem>>, vector<32x12288xbf16>
    %cst = arith.constant dense<0.000000e+00> : vector<1x12288xf32>
    %5 = tpu.matmul %3, %4, %cst {dimension_numbers = #tpu.dot_dimension_numbers<[1], [0], [0], [1], [0, 0, 1, 1], [], []>} : vector<1x32xbf16>, vector<32x12288xbf16>, vector<1x12288xf32> -> vector<1x12288xf32>
    %c0_4 = arith.constant 0 : index
    %c0_5 = arith.constant 0 : index
    %6 = vector.load %arg8[%c0_4, %c0_5] : memref<1x12288xf32, #tpu.memory_space<vmem>>, vector<1x12288xf32>
    %7 = arith.addf %5, %6 : vector<1x12288xf32>
    %8 = arith.negf %7 : vector<1x12288xf32>
    %9 = math.exp %8 : vector<1x12288xf32>
    %cst_6 = arith.constant 1.000000e+00 : f32
    %10 = vector.broadcast %cst_6 : f32 to vector<1x12288xf32>
    %11 = arith.addf %10, %9 : vector<1x12288xf32>
    %12 = arith.divf %10, %11 : vector<1x12288xf32>
    %c0_7 = arith.constant 0 : index
    %c0_8 = arith.constant 0 : index
    %13 = vector.load %arg9[%c0_7, %c0_8] : memref<1x12288xf32, #tpu.memory_space<vmem>>, vector<1x12288xf32>
    tpu.vector_store %arg9[%c0_7, %c0_8], %12 {strides = array<i32>} : memref<1x12288xf32, #tpu.memory_space<vmem>>, vector<1x12288xf32>,
    return
  }
  func.func @transform_0(%arg0: i32, %arg1: i32) -> (i32, i32) {
    %c0_i32 = arith.constant 0 : i32
    %c0_i32_0 = arith.constant 0 : i32
    %c0_i32_1 = arith.constant 0 : i32
    return %c0_i32, %c0_i32_0 : i32, i32
  }
  func.func @transform_1(%arg0: i32, %arg1: i32) -> (i32, i32) {
    %c0_i32 = arith.constant 0 : i32
    %c0_i32_0 = arith.constant 0 : i32
    %c0_i32_1 = arith.constant 0 : i32
    return %c0_i32, %c0_i32_0 : i32, i32
  }
  func.func @transform_2(%arg0: i32, %arg1: i32) -> (i32, i32) {
    %c0_i32 = arith.constant 0 : i32
    %c0_i32_0 = arith.constant 0 : i32
    %c0_i32_1 = arith.constant 0 : i32
    return %c0_i32, %c0_i32_0 : i32, i32
  }
  func.func @transform_3(%arg0: i32, %arg1: i32) -> (i32, i32) {
    %c0_i32 = arith.constant 0 : i32
    %c0_i32_0 = arith.constant 0 : i32
    %c0_i32_1 = arith.constant 0 : i32
    return %c0_i32, %c0_i32_0 : i32, i32
  }
  func.func @transform_4(%arg0: i32, %arg1: i32) -> (i32, i32) {
    %c0_i32 = arith.constant 0 : i32
    %c0_i32_0 = arith.constant 0 : i32
    %c0_i32_1 = arith.constant 0 : i32
    return %c0_i32, %c0_i32_0 : i32, i32
  }
  func.func @transform_5(%arg0: i32, %arg1: i32) -> (i32, i32) {
    %c2_i32 = arith.constant 2 : i32
    %0 = arith.muli %arg0, %c2_i32 : i32
    %1 = arith.addi %0, %arg1 : i32
    %c0_i32 = arith.constant 0 : i32
    %c0_i32_0 = arith.constant 0 : i32
    return %c0_i32, %1 : i32, i32
  }
  func.func @transform_6(%arg0: i32, %arg1: i32) -> (i32, i32) {
    %c2_i32 = arith.constant 2 : i32
    %0 = arith.muli %arg0, %c2_i32 : i32
    %1 = arith.addi %0, %arg1 : i32
    %c0_i32 = arith.constant 0 : i32
    %c0_i32_0 = arith.constant 0 : i32
    return %c0_i32, %1 : i32, i32
  }
  func.func @transform_7(%arg0: i32, %arg1: i32) -> (i32, i32) {
    %c2_i32 = arith.constant 2 : i32
    %0 = arith.muli %arg0, %c2_i32 : i32
    %1 = arith.addi %0, %arg1 : i32
    %c0_i32 = arith.constant 0 : i32
    %c0_i32_0 = arith.constant 0 : i32
    return %c0_i32, %1 : i32, i32
  }
}

</mosaic_0001>

<llo_original>
// kernel: tpu_custom_call.1
$region0: #{tpu_custom_call.1}
  #allocation0 [shape = 'u32[]', space=smem, size = 0x4, offset = 0x4, fixed_abs, tag = 'smem constant byte address 0x4 - core index']
  #allocation1 [shape = 'u32[144,128]{1,0:T(1,128)}', space=vmem, size = 0x12000, scoped, tag = 'internal scratch']
  #allocation2 [shape = 'bf16[1,32]{1,0:T(2,128)(2,1)}', space=vmem, size = 0x200, scoped, tag = 'scratch operand']
  %s0 = inlined_call_operand.hbm [shape: f32[1,100], index: 0, kind: input, shape index: {}]
  %s1 = inlined_call_operand.vmem [shape: f32[100,32], index: 1, kind: input, shape index: {}]
  %s2 = inlined_call_operand.hbm [shape: f32[1,32], index: 2, kind: input, shape index: {}]
  %s3 = inlined_call_operand.hbm [shape: f32[32,32], index: 3, kind: input, shape index: {}]
  %s4 = inlined_call_operand.hbm [shape: f32[1,32], index: 4, kind: input, shape index: {}]
  %s5 = inlined_call_operand.hbm [shape: bf16[32,49152], index: 5, kind: input, shape index: {}]
  %s6 = inlined_call_operand.hbm [shape: f32[1,49152], index: 6, kind: input, shape index: {}]
  %s7 = inlined_call_operand.hbm [shape: f32[1,49152], index: 7, kind: output, shape index: {}]
  %s8 = sld [smem:[#allocation0]]
  $region89: #{tpu_custom_call.1} parent=0
    _
  %s10 = ssub.s32 1, %s8
  %s11 = scalar_select 0, %s10, %s8
  $region1: #{tpu_custom_call.1} parent=0
    #allocation3 [shape = 'u8[512]{0}', space=vmem, size = 0x400, scoped, tag = 'input window, operand 0, single buffered']
    #allocation4 [shape = 's32[2]{0}', space=sflag, size = 0x8, scoped, tag = 'scoped memory for tpu_custom_call.1']
    #allocation5 [shape = 's32[2]{0}', space=sflag, size = 0x8, scoped, tag = 'scoped memory for tpu_custom_call.1']
    #allocation6 [shape = 'u8[512]{0}', space=vmem, size = 0x400, scoped, tag = 'input window, operand 2, single buffered']
    #allocation7 [shape = 's32[1]{0}', space=sflag, size = 0x4, scoped, tag = 'scoped memory for tpu_custom_call.1']
    #allocation8 [shape = 'u8[16384]{0}', space=vmem, size = 0x4000, scoped, tag = 'input window, operand 3, single buffered']
    #allocation9 [shape = 'u8[512]{0}', space=vmem, size = 0x400, scoped, tag = 'input window, operand 4, single buffered']
    #allocation10 [shape = 's32[1]{0}', space=sflag, size = 0x4, scoped, tag = 'scoped memory for tpu_custom_call.1']
    #allocation11 [shape = 'u8[1572864]{0}', space=vmem, size = 0x180000, scoped, tag = 'input window, operand 5']
    #allocation12 [shape = 'u8[98304]{0}', space=vmem, size = 0x18000, scoped, tag = 'input window, operand 6']
    #allocation13 [shape = 'u8[98304]{0}', space=vmem, size = 0x18000, scoped, tag = 'output window, operand 0']
    %12 = vsyncpa [#allocation4], 0
    %13 = vsyncpa [#allocation7], 0
    %14 = vsyncpa [#allocation10], 0
    %15 = vsyncpa [#allocation5], 0
    %s16 = scalar_lea.sflag [#allocation5], 1
    %17 = vsyncpa %s16, 0
    loop: start=0, step=1, limit=6
    $region2: #{tpu_custom_call.1} parent=1 // loop_pre_header
      _
    $region3: #{tpu_custom_call.1} parent=1 // loop_header
      %s19 = sphi 0, %s23
      %p20 = scmp.ge.s32.totalorder %s19, 6
      %s26 = sphi 0, %s38
      %s27 = sphi 0, %s34
      %s28 = sphi 0, %s26
      %s29 = sphi 0, %s27
      %s30 = sphi 0, %s28
      %s31 = sphi 0, %s29
      %s39 = sphi 0, %s39
      %s41 = sphi 0, %s39
      %s42 = sphi 0, %s41
      %s56 = sphi 0, %s42
      %s60 = sphi 0, %s60
      %s62 = sphi 0, %s60
      %s63 = sphi 0, %s62
      %s77 = sphi 0, %s63
      %s81 = sphi 0, %s81
      %s83 = sphi 0, %s81
      %s84 = sphi 0, %s83
      %s98 = sphi 0, %s84
      %s102 = sphi 0, %s102
      %s104 = sphi 0, %s102
      %s105 = sphi 0, %s104
      %s119 = sphi 0, %s105
      %s123 = sphi 0, %s123
      %s125 = sphi 0, %s123
      %s126 = sphi 0, %s125
      %s140 = sphi 0, %s126
      %s150 = sphi 0, %s152
      %s153 = sphi 0, %s150
      %s154 = sphi 0, %s153
      %s170 = sphi 0, %s154
      %s180 = sphi 0, %s182
      %s183 = sphi 0, %s180
      %s184 = sphi 0, %s183
      %s200 = sphi 0, %s184
      %s210 = sphi 0, %s212
      %s213 = sphi 0, %s210
      %s214 = sphi 0, %s213
      %s230 = sphi 0, %s214
    $region4: #{tpu_custom_call.1} parent=1 // loop_header_branch
      %22 = sbr.rel (%p20) target = $region8
    $region5: #{tpu_custom_call.1} parent=1 // loop_body
      %s24 = ssub.s32 %s19, 1
      %s25 = ssub.s32 %s19, 2
      %s32 = sadd.s32 1, %s27
      %p33 = scmp.ge.s32.totalorder %s32, 2
      %s34 = scalar_select %p33, 0, %s32
      %s35 = sadd.s32 1, %s26
      %s36 = scalar_select %p33, %s35, %s26
      %p37 = scmp.ge.s32.totalorder %s36, 2
      %s38 = scalar_select %p37, 0, %s36
      %s40 = sadd.s32 %s39, 1
      %p43 = scmp.eq.s32.totalorder %s19, 3
      %p44 = scmp.ne.s32.totalorder %s39, %s41
      %p45 = scmp.eq.s32.totalorder %s19, 0
      %p46 = por %p44, %p45
      %p47 = scmp.ne.s32.totalorder %s39, %s41
      %p48 = scmp.eq.s32.totalorder %s24, 3
      %p49 = por %p47, %p48
      %p50 = scmp.ne.s32.totalorder %s41, %s42
      %p51 = scmp.eq.s32.totalorder %s24, 0
      %p52 = por %p50, %p51
      %p53 = scmp.ne.s32.totalorder %s41, %s42
      %p54 = scmp.eq.s32.totalorder %s25, 3
      %p55 = por %p53, %p54
      %p57 = scmp.ne.s32.totalorder %s42, %s56
      %p58 = scmp.eq.s32.totalorder %s25, 0
      %p59 = por %p57, %p58
      %s61 = sadd.s32 %s60, 1
      %p64 = scmp.eq.s32.totalorder %s19, 3
      %p65 = scmp.ne.s32.totalorder %s60, %s62
      %p66 = scmp.eq.s32.totalorder %s19, 0
      %p67 = por %p65, %p66
      %p68 = scmp.ne.s32.totalorder %s60, %s62
      %p69 = scmp.eq.s32.totalorder %s24, 3
      %p70 = por %p68, %p69
      %p71 = scmp.ne.s32.totalorder %s62, %s63
      %p72 = scmp.eq.s32.totalorder %s24, 0
      %p73 = por %p71, %p72
      %p74 = scmp.ne.s32.totalorder %s62, %s63
      %p75 = scmp.eq.s32.totalorder %s25, 3
      %p76 = por %p74, %p75
      %p78 = scmp.ne.s32.totalorder %s63, %s77
      %p79 = scmp.eq.s32.totalorder %s25, 0
      %p80 = por %p78, %p79
      %s82 = sadd.s32 %s81, 1
      %p85 = scmp.eq.s32.totalorder %s19, 3
      %p86 = scmp.ne.s32.totalorder %s81, %s83
      %p87 = scmp.eq.s32.totalorder %s19, 0
      %p88 = por %p86, %p87
      %p89 = scmp.ne.s32.totalorder %s81, %s83
      %p90 = scmp.eq.s32.totalorder %s24, 3
      %p91 = por %p89, %p90
      %p92 = scmp.ne.s32.totalorder %s83, %s84
      %p93 = scmp.eq.s32.totalorder %s24, 0
      %p94 = por %p92, %p93
      %p95 = scmp.ne.s32.totalorder %s83, %s84
      %p96 = scmp.eq.s32.totalorder %s25, 3
      %p97 = por %p95, %p96
      %p99 = scmp.ne.s32.totalorder %s84, %s98
      %p100 = scmp.eq.s32.totalorder %s25, 0
      %p101 = por %p99, %p100
      %s103 = sadd.s32 %s102, 1
      %p106 = scmp.eq.s32.totalorder %s19, 3
      %p107 = scmp.ne.s32.totalorder %s102, %s104
      %p108 = scmp.eq.s32.totalorder %s19, 0
      %p109 = por %p107, %p108
      %p110 = scmp.ne.s32.totalorder %s102, %s104
      %p111 = scmp.eq.s32.totalorder %s24, 3
      %p112 = por %p110, %p111
      %p113 = scmp.ne.s32.totalorder %s104, %s105
      %p114 = scmp.eq.s32.totalorder %s24, 0
      %p115 = por %p113, %p114
      %p116 = scmp.ne.s32.totalorder %s104, %s105
      %p117 = scmp.eq.s32.totalorder %s25, 3
      %p118 = por %p116, %p117
      %p120 = scmp.ne.s32.totalorder %s105, %s119
      %p121 = scmp.eq.s32.totalorder %s25, 0
      %p122 = por %p120, %p121
      %s124 = sadd.s32 %s123, 1
      %p127 = scmp.eq.s32.totalorder %s19, 3
      %p128 = scmp.ne.s32.totalorder %s123, %s125
      %p129 = scmp.eq.s32.totalorder %s19, 0
      %p130 = por %p128, %p129
      %p131 = scmp.ne.s32.totalorder %s123, %s125
      %p132 = scmp.eq.s32.totalorder %s24, 3
      %p133 = por %p131, %p132
      %p134 = scmp.ne.s32.totalorder %s125, %s126
      %p135 = scmp.eq.s32.totalorder %s24, 0
      %p136 = por %p134, %p135
      %p137 = scmp.ne.s32.totalorder %s125, %s126
      %p138 = scmp.eq.s32.totalorder %s25, 3
      %p139 = por %p137, %p138
      %p141 = scmp.ne.s32.totalorder %s126, %s140
      %p142 = scmp.eq.s32.totalorder %s25, 0
      %p143 = por %p141, %p142
      %s144 = smul.u32 %s26, 2
      %s145 = sadd.s32 %s144, %s27
      %s146 = smul.u32 %s38, 2
      %s147 = sadd.s32 %s146, %s34
      %s148 = ssub.s32 %s145, %s147
      %p149 = scmp.eq.s32.totalorder %s148, 0
      %s151 = sadd.s32 %s150, 1
      %s152 = scalar_select %p149, %s150, %s151
      %p155 = pneg %p149
      %p156 = scmp.eq.s32.totalorder %s19, 3
      %p157 = por %p155, %p156
      %p158 = scmp.ne.s32.totalorder %s150, %s153
      %p159 = scmp.eq.s32.totalorder %s19, 0
      %p160 = por %p158, %p159
      %p161 = scmp.ne.s32.totalorder %s150, %s153
      %p162 = scmp.eq.s32.totalorder %s24, 3
      %p163 = por %p161, %p162
      %p164 = scmp.ne.s32.totalorder %s153, %s154
      %p165 = scmp.eq.s32.totalorder %s24, 0
      %p166 = por %p164, %p165
      %p167 = scmp.ne.s32.totalorder %s153, %s154
      %p168 = scmp.eq.s32.totalorder %s25, 3
      %p169 = por %p167, %p168
      %p171 = scmp.ne.s32.totalorder %s154, %s170
      %p172 = scmp.eq.s32.totalorder %s25, 0
      %p173 = por %p171, %p172
      %s174 = smul.u32 %s26, 2
      %s175 = sadd.s32 %s174, %s27
      %s176 = smul.u32 %s38, 2
      %s177 = sadd.s32 %s176, %s34
      %s178 = ssub.s32 %s175, %s177
      %p179 = scmp.eq.s32.totalorder %s178, 0
      %s181 = sadd.s32 %s180, 1
      %s182 = scalar_select %p179, %s180, %s181
      %p185 = pneg %p179
      %p186 = scmp.eq.s32.totalorder %s19, 3
      %p187 = por %p185, %p186
      %p188 = scmp.ne.s32.totalorder %s180, %s183
      %p189 = scmp.eq.s32.totalorder %s19, 0
      %p190 = por %p188, %p189
      %p191 = scmp.ne.s32.totalorder %s180, %s183
      %p192 = scmp.eq.s32.totalorder %s24, 3
      %p193 = por %p191, %p192
      %p194 = scmp.ne.s32.totalorder %s183, %s184
      %p195 = scmp.eq.s32.totalorder %s24, 0
      %p196 = por %p194, %p195
      %p197 = scmp.ne.s32.totalorder %s183, %s184
      %p198 = scmp.eq.s32.totalorder %s25, 3
      %p199 = por %p197, %p198
      %p201 = scmp.ne.s32.totalorder %s184, %s200
      %p202 = scmp.eq.s32.totalorder %s25, 0
      %p203 = por %p201, %p202
      %s204 = smul.u32 %s26, 2
      %s205 = sadd.s32 %s204, %s27
      %s206 = smul.u32 %s38, 2
      %s207 = sadd.s32 %s206, %s34
      %s208 = ssub.s32 %s205, %s207
      %p209 = scmp.eq.s32.totalorder %s208, 0
      %s211 = sadd.s32 %s210, 1
      %s212 = scalar_select %p209, %s210, %s211
      %p215 = pneg %p209
      %p216 = scmp.eq.s32.totalorder %s19, 3
      %p217 = por %p215, %p216
      %p218 = scmp.ne.s32.totalorder %s210, %s213
      %p219 = scmp.eq.s32.totalorder %s19, 0
      %p220 = por %p218, %p219
      %p221 = scmp.ne.s32.totalorder %s210, %s213
      %p222 = scmp.eq.s32.totalorder %s24, 3
      %p223 = por %p221, %p222
      %p224 = scmp.ne.s32.totalorder %s213, %s214
      %p225 = scmp.eq.s32.totalorder %s24, 0
      %p226 = por %p224, %p225
      %p227 = scmp.ne.s32.totalorder %s213, %s214
      %p228 = scmp.eq.s32.totalorder %s25, 3
      %p229 = por %p227, %p228
      %p231 = scmp.ne.s32.totalorder %s214, %s230
      %p232 = scmp.eq.s32.totalorder %s25, 0
      %p233 = por %p231, %p232
      %p234 = scmp.le.s32.totalorder 1, %s19
      %p235 = scmp.lt.s32.totalorder %s19, 5
      %p236 = pnand %p234, %p235
      %p237 = pneg %p236
      // Predicated region
      $region9: #{tpu_custom_call.1} parent=5 // pred_check
        _
      $region10: #{tpu_custom_call.1} parent=5 // pred_check_branch
        %239 = sbr.rel (%p236) target = $region12
      $region11: #{tpu_custom_call.1} parent=5 // pred_region
        %s240 = ssub.s32 %s19, 1
        // Predicated region
        $region13: #{tpu_custom_call.1} parent=11 // pred_check
          %p241 = pneg %p52
        $region14: #{tpu_custom_call.1} parent=11 // pred_check_branch
          %243 = sbr.rel (%p241) target = $region16
        $region15: #{tpu_custom_call.1} parent=11 // pred_region
          %s245 = ssub.s32 16, 16
          %246 = vsyncadd [#allocation4], %s245
          %s248 = sshll.u32 [#allocation3], 4
          %s249 = int_to_ptr.vmem [resolvable:$true] %s248
          %251 = dma.hbm_to_vmem [thread:$0]  %s0, 16, %s249, [#allocation4]
        $region16: #{tpu_custom_call.1} parent=11 // pred_fallthru
          _
        // Predicated region
        $region17: #{tpu_custom_call.1} parent=11 // pred_check
          %p252 = pneg %p73
        $region18: #{tpu_custom_call.1} parent=11 // pred_check_branch
          %254 = sbr.rel (%p252) target = $region20
        $region19: #{tpu_custom_call.1} parent=11 // pred_region
          _
        $region20: #{tpu_custom_call.1} parent=11 // pred_fallthru
          _
        // Predicated region
        $region21: #{tpu_custom_call.1} parent=11 // pred_check
          %p255 = pneg %p94
        $region22: #{tpu_custom_call.1} parent=11 // pred_check_branch
          %257 = sbr.rel (%p255) target = $region24
        $region23: #{tpu_custom_call.1} parent=11 // pred_region
          %s259 = ssub.s32 16, 16
          %260 = vsyncadd [#allocation7], %s259
          %s262 = sshll.u32 [#allocation6], 4
          %s263 = int_to_ptr.vmem [resolvable:$true] %s262
          %265 = dma.hbm_to_vmem [thread:$0]  %s2, 16, %s263, [#allocation7]
        $region24: #{tpu_custom_call.1} parent=11 // pred_fallthru
          _
        // Predicated region
        $region25: #{tpu_custom_call.1} parent=11 // pred_check
          %p266 = pneg %p115
        $region26: #{tpu_custom_call.1} parent=11 // pred_check_branch
          %268 = sbr.rel (%p266) target = $region28
        $region27: #{tpu_custom_call.1} parent=11 // pred_region
          %s270 = ssub.s32 512, 512
          %271 = vsyncadd [#allocation7], %s270
          %s272 = sshll.u32 [#allocation8], 4
          %s273 = int_to_ptr.vmem [resolvable:$true] %s272
          %278 = dma.hbm_to_vmem [thread:$0]  %s3, 512, %s273, [#allocation7], 128, 128, 8
        $region28: #{tpu_custom_call.1} parent=11 // pred_fallthru
          _
        // Predicated region
        $region29: #{tpu_custom_call.1} parent=11 // pred_check
          %p279 = pneg %p136
        $region30: #{tpu_custom_call.1} parent=11 // pred_check_branch
          %281 = sbr.rel (%p279) target = $region32
        $region31: #{tpu_custom_call.1} parent=11 // pred_region
          %s283 = ssub.s32 16, 16
          %284 = vsyncadd [#allocation10], %s283
          %s286 = sshll.u32 [#allocation9], 4
          %s287 = int_to_ptr.vmem [resolvable:$true] %s286
          %289 = dma.hbm_to_vmem [thread:$0]  %s4, 16, %s287, [#allocation10]
        $region32: #{tpu_custom_call.1} parent=11 // pred_fallthru
          _
      $region12: #{tpu_custom_call.1} parent=5 // pred_fallthru
        _
      %p290 = scmp.lt.s32.totalorder %s19, 4
      // Predicated region
      $region33: #{tpu_custom_call.1} parent=5 // pred_check
        %p291 = pneg %p290
      $region34: #{tpu_custom_call.1} parent=5 // pred_check_branch
        %293 = sbr.rel (%p291) target = $region36
      $region35: #{tpu_custom_call.1} parent=5 // pred_region
        // Predicated region
        $region37: #{tpu_custom_call.1} parent=35 // pred_check
          %p294 = pneg %p160
        $region38: #{tpu_custom_call.1} parent=35 // pred_check_branch
          %296 = sbr.rel (%p294) target = $region40
        $region39: #{tpu_custom_call.1} parent=35 // pred_region
          %s297 = sand.u32 %s19, 1
          %s298 = scalar_lea.sflag [#allocation4], %s297
          %s299 = sand.u32 %s150, 1
          %s300 = smul.addr %s299, 1536
          %s301 = scalar_lea.vmem [#allocation11], %s300
          %s302 = smul.u32 %s26, 2
          %s303 = sadd.s32 %s302, %s27
          %s304 = smul.u32 96, %s303
          %s306 = ssub.s32 24576, 24576
          %307 = vsyncadd %s298, %s306
          %s308 = smul.addr %s304, 64
          %s309 = scalar_lea.hbm %s5, %s308
          %s310 = sshll.u32 %s301, 4
          %s311 = int_to_ptr.vmem [resolvable:$true] %s310
          %316 = dma.hbm_to_vmem [thread:$0]  %s309, 24576, %s311, %s298, 24576, 6144, 384
        $region40: #{tpu_custom_call.1} parent=35 // pred_fallthru
          _
        // Predicated region
        $region41: #{tpu_custom_call.1} parent=35 // pred_check
          %p317 = pneg %p190
        $region42: #{tpu_custom_call.1} parent=35 // pred_check_branch
          %319 = sbr.rel (%p317) target = $region44
        $region43: #{tpu_custom_call.1} parent=35 // pred_region
          %s320 = sand.u32 %s19, 1
          %s321 = scalar_lea.sflag [#allocation4], %s320
          %s322 = sand.u32 %s180, 1
          %s323 = smul.addr %s322, 96
          %s324 = scalar_lea.vmem [#allocation12], %s323
          %s325 = smul.u32 %s26, 2
          %s326 = sadd.s32 %s325, %s27
          %s327 = smul.u32 96, %s326
          %s329 = ssub.s32 1536, 1536
          %330 = vsyncadd %s321, %s329
          %s331 = smul.addr %s327, 16
          %s332 = scalar_lea.hbm %s6, %s331
          %s334 = sshll.u32 %s324, 4
          %s335 = int_to_ptr.vmem [resolvable:$true] %s334
          %337 = dma.hbm_to_vmem [thread:$0]  %s332, 1536, %s335, %s321
        $region44: #{tpu_custom_call.1} parent=35 // pred_fallthru
          _
      $region36: #{tpu_custom_call.1} parent=5 // pred_fallthru
        _
      %p338 = scmp.le.s32.totalorder 1, %s19
      %p339 = scmp.lt.s32.totalorder %s19, 5
      %p340 = pnand %p338, %p339
      %p341 = pneg %p340
      // Predicated region
      $region45: #{tpu_custom_call.1} parent=5 // pred_check
        _
      $region46: #{tpu_custom_call.1} parent=5 // pred_check_branch
        %343 = sbr.rel (%p340) target = $region48
      $region47: #{tpu_custom_call.1} parent=5 // pred_region
        %s344 = ssub.s32 %s19, 1
        // Predicated region
        $region49: #{tpu_custom_call.1} parent=47 // pred_check
          %p345 = pneg %p52
        $region50: #{tpu_custom_call.1} parent=47 // pred_check_branch
          %347 = sbr.rel (%p345) target = $region52
        $region51: #{tpu_custom_call.1} parent=47 // pred_region
          %348 = dma.done [#allocation4], 16
        $region52: #{tpu_custom_call.1} parent=47 // pred_fallthru
          _
        // Predicated region
        $region53: #{tpu_custom_call.1} parent=47 // pred_check
          %p349 = pneg %p94
        $region54: #{tpu_custom_call.1} parent=47 // pred_check_branch
          %351 = sbr.rel (%p349) target = $region56
        $region55: #{tpu_custom_call.1} parent=47 // pred_region
          %352 = dma.done [#allocation7], 16
        $region56: #{tpu_custom_call.1} parent=47 // pred_fallthru
          _
        // Predicated region
        $region57: #{tpu_custom_call.1} parent=47 // pred_check
          %p353 = pneg %p115
        $region58: #{tpu_custom_call.1} parent=47 // pred_check_branch
          %355 = sbr.rel (%p353) target = $region60
        $region59: #{tpu_custom_call.1} parent=47 // pred_region
          %356 = dma.done [#allocation7], 512
        $region60: #{tpu_custom_call.1} parent=47 // pred_fallthru
          _
        // Predicated region
        $region61: #{tpu_custom_call.1} parent=47 // pred_check
          %p357 = pneg %p136
        $region62: #{tpu_custom_call.1} parent=47 // pred_check_branch
          %359 = sbr.rel (%p357) target = $region64
        $region63: #{tpu_custom_call.1} parent=47 // pred_region
          %360 = dma.done [#allocation10], 16
        $region64: #{tpu_custom_call.1} parent=47 // pred_fallthru
          _
        %s361 = sand.u32 %s24, 1
        %s362 = scalar_lea.sflag [#allocation4], %s361
        %s363 = sand.u32 %s153, 1
        %s364 = smul.addr %s363, 1536
        %s365 = scalar_lea.vmem [#allocation11], %s364
        // Predicated region
        $region65: #{tpu_custom_call.1} parent=47 // pred_check
          %p366 = pneg %p166
        $region66: #{tpu_custom_call.1} parent=47 // pred_check_branch
          %368 = sbr.rel (%p366) target = $region68
        $region67: #{tpu_custom_call.1} parent=47 // pred_region
          %369 = dma.done %s362, 24576
        $region68: #{tpu_custom_call.1} parent=47 // pred_fallthru
          _
        %s370 = sand.u32 %s24, 1
        %s371 = scalar_lea.sflag [#allocation4], %s370
        %s372 = sand.u32 %s183, 1
        %s373 = smul.addr %s372, 96
        %s374 = scalar_lea.vmem [#allocation12], %s373
        // Predicated region
        $region69: #{tpu_custom_call.1} parent=47 // pred_check
          %p375 = pneg %p196
        $region70: #{tpu_custom_call.1} parent=47 // pred_check_branch
          %377 = sbr.rel (%p375) target = $region72
        $region71: #{tpu_custom_call.1} parent=47 // pred_region
          %378 = dma.done %s371, 1536
        $region72: #{tpu_custom_call.1} parent=47 // pred_fallthru
          _
        %p379 = pneg %p52
        %p380 = pneg %p49
        %p381 = pneg %p73
        %p382 = pneg %p70
        %p383 = pneg %p94
        %p384 = pneg %p91
        %p385 = pneg %p115
        %p386 = pneg %p112
        %p387 = pneg %p136
        %p388 = pneg %p133
        %s389 = sand.u32 %s24, 1
        %s390 = scalar_lea.sflag [#allocation4], %s389
        %s391 = sand.u32 %s153, 1
        %s392 = smul.addr %s391, 1536
        %s393 = scalar_lea.vmem [#allocation11], %s392
        %p394 = pneg %p166
        %p395 = pneg %p163
        %s396 = sand.u32 %s24, 1
        %s397 = scalar_lea.sflag [#allocation4], %s396
        %s398 = sand.u32 %s183, 1
        %s399 = smul.addr %s398, 96
        %s400 = scalar_lea.vmem [#allocation12], %s399
        %p401 = pneg %p196
        %p402 = pneg %p193
        %p403 = pneg %p226
        %p404 = pneg %p223
        %s405 = sand.u32 %s213, 1
        %s406 = scalar_lea.sflag [#allocation5], %s405
        %s407 = sand.u32 %s213, 1
        %s408 = smul.addr %s407, 96
        %s409 = scalar_lea.vmem [#allocation13], %s408
        %s410 = smul.u32 %s28, 2
        %s411 = sadd.s32 %s410, %s29
        %s412 = smul.u32 96, %s411
        %s413 = smul.u32 %s28, 2
        %s414 = sadd.s32 %s413, %s29
        %s415 = smul.u32 96, %s414
        %s416 = smul.u32 %s28, 2
        %s417 = sadd.s32 %s416, %s29
        %s418 = smul.u32 96, %s417
        %p420 = scmp.eq.s32.totalorder %s29, 0
        // Predicated region
        $region73: #{tpu_custom_call.1} parent=47 // pred_check
          %p421 = pneg %p420
        $region74: #{tpu_custom_call.1} parent=47 // pred_check_branch
          %423 = sbr.rel (%p421) target = $region76
        $region75: #{tpu_custom_call.1} parent=47 // pred_region
          %v424 = vld [vmem:[#allocation3] sm:$0x1]
          %v425 = vld [vmem:[%s1] sm:$0xff]
          %v426 = vld [vmem:[%s1 + $0x8] sm:$0xff]
          %v427 = vld [vmem:[%s1 + $0x10] sm:$0xff]
          %v428 = vld [vmem:[%s1 + $0x18] sm:$0xff]
          %v429 = vld [vmem:[%s1 + $0x20] sm:$0xff]
          %v430 = vld [vmem:[%s1 + $0x28] sm:$0xff]
          %v431 = vld [vmem:[%s1 + $0x30] sm:$0xff]
          %v432 = vld [vmem:[%s1 + $0x38] sm:$0xff]
          %v433 = vld [vmem:[%s1 + $0x40] sm:$0xff]
          %v434 = vld [vmem:[%s1 + $0x48] sm:$0xff]
          %v435 = vld [vmem:[%s1 + $0x50] sm:$0xff]
          %v436 = vld [vmem:[%s1 + $0x58] sm:$0xff]
          %v437 = vld [vmem:[%s1 + $0x60] sm:$0xf]
          %v438 = vld [vmem:[#allocation6] sm:$0x1]
          %vm439 = vcmask 818176
          %v441 = vsel %vm439, %v424, 0
          %vm443 = vcmask 1043456
          %v445 = vsel %vm443, %v437, 0
          %447 = vmatprep.subr.mxu0 0.0
          %448 = vmatpush1.msra.mxu0 %v425
          %449 = vmatprep.subr.mxu0 0.0
          %450 = vmatpush1.msra.mxu0 %v426
          %451 = vmatprep.subr.mxu0 0.0
          %452 = vmatpush1.msra.mxu0 %v427
          %453 = vmatprep.subr.mxu0 0.0
          %454 = vmatpush1.msra.mxu0 %v428
          %455 = vmatprep.subr.mxu0 0.0
          %456 = vmatpush1.msra.mxu0 %v429
          %457 = vmatprep.subr.mxu0 0.0
          %458 = vmatpush1.msra.mxu0 %v430
          %459 = vmatprep.subr.mxu0 0.0
          %460 = vmatpush1.msra.mxu0 %v431
          %461 = vmatprep.subr.mxu0 0.0
          %462 = vmatpush1.msra.mxu0 %v432
          %463 = vmatprep.subr.mxu0 0.0
          %464 = vmatpush1.msra.mxu0 %v433
          %465 = vmatprep.subr.mxu0 0.0
          %466 = vmatpush1.msra.mxu0 %v434
          %467 = vmatprep.subr.mxu0 0.0
          %468 = vmatpush1.msra.mxu0 %v435
          %469 = vmatprep.subr.mxu0 0.0
          %470 = vmatpush1.msra.mxu0 %v436
          %471 = vmatprep.subr.mxu0 0.0
          %472 = vmatpush1.msra.mxu0 %v445
          %473 = vmatprep.subr.mxu0 0.0
          %474 = vmatpush1.msra.mxu0 0.0
          %475 = vmatprep.subr.mxu0 0.0
          %476 = vmatpush1.msra.mxu0 0.0
          %477 = vmatprep.subr.mxu0 0.0
          %478 = vmatpush1.msra.mxu0 0.0
          %479 = vmatprep.subr.mxu0 0.0
          %480 = vmatpush1.msra.mxu0 0.0
          %481 = vmatprep.subr.mxu0 0.0
          %482 = vmatpush1.msra.mxu0 0.0
          %483 = vmatprep.subr.mxu0 0.0
          %484 = vmatpush1.msra.mxu0 0.0
          %485 = vmatprep.subr.mxu0 0.0
          %486 = vmatpush1.msra.mxu0 0.0
          %487 = vmatprep.subr.mxu0 0.0
          %488 = vmatpush1.msra.mxu0 0.0
          %489 = vmatprep.subr.mxu0 0.0
          %490 = vmatpush1.msra.mxu0 0.0
          %491 = vmatprep.subr.mxu0 0.0
          %492 = vmatpush1.msra.mxu0 0.0
          %493 = vmatprep.subr.mxu0 0.0
          %494 = vmatpush1.msra.mxu0 0.0
          %495 = vmatprep.subr.mxu0 0.0
          %496 = vmatpush1.msra.mxu0 0.0
          %497 = vmatprep.subr.mxu0 0.0
          %498 = vmatpush1.msra.mxu0 0.0
          %499 = vmatprep.subr.mxu0 0.0
          %500 = vmatpush1.msra.mxu0 0.0
          %501 = vmatprep.subr.mxu0 0.0
          %502 = vmatpush1.msra.mxu0 0.0
          %503 = vmatprep.subr.mxu0 0.0
          %504 = vmatpush1.msra.mxu0 0.0
          %505 = vmatprep.subr.mxu0 0.0
          %506 = vmatpush1.msra.mxu0 0.0
          %507 = vmatprep.subr.mxu0 0.0
          %508 = vmatpush1.msra.mxu0 0.0
          %509 = vmatprep.subr.mxu0 0.0
          %510 = vmatpush1.msra.mxu0 0.0
          %511 = vmatprep.mubr.f32.mxu0 0.0
          %512 = vmatmul.mubr.f32.gmra.mrb[0].mxu0 %v441
          %v513 = vpop.f32.mrb[0].mxu0
          %v514 = vadd.f32 %v438, %v513
          %v515 = vpop.f32.mrb[0].mxu0
          %516 = vdwg.mxu0
          %v517 = vmax.f32 %v514, 0.0
          %v518 = vld [vmem:[#allocation8] sm:$0xff]
          %v519 = vld [vmem:[#allocation8 + $0x8] sm:$0xff]
          %v520 = vld [vmem:[#allocation8 + $0x10] sm:$0xff]
          %v521 = vld [vmem:[#allocation8 + $0x18] sm:$0xff]
          %v522 = vld [vmem:[#allocation9] sm:$0x1]
          %vm523 = vcmask 261120
          %v525 = vsel %vm523, %v517, 0
          %527 = vmatprep.subr.mxu0 0.0
          %528 = vmatpush1.msra.mxu0 %v518
          %529 = vmatprep.subr.mxu0 0.0
          %530 = vmatpush1.msra.mxu0 %v519
          %531 = vmatprep.subr.mxu0 0.0
          %532 = vmatpush1.msra.mxu0 %v520
          %533 = vmatprep.subr.mxu0 0.0
          %534 = vmatpush1.msra.mxu0 %v521
          %535 = vmatprep.subr.mxu0 0.0
          %536 = vmatpush1.msra.mxu0 0.0
          %537 = vmatprep.subr.mxu0 0.0
          %538 = vmatpush1.msra.mxu0 0.0
          %539 = vmatprep.subr.mxu0 0.0
          %540 = vmatpush1.msra.mxu0 0.0
          %541 = vmatprep.subr.mxu0 0.0
          %542 = vmatpush1.msra.mxu0 0.0
          %543 = vmatprep.subr.mxu0 0.0
          %544 = vmatpush1.msra.mxu0 0.0
          %545 = vmatprep.subr.mxu0 0.0
          %546 = vmatpush1.msra.mxu0 0.0
          %547 = vmatprep.subr.mxu0 0.0
          %548 = vmatpush1.msra.mxu0 0.0
          %549 = vmatprep.subr.mxu0 0.0
          %550 = vmatpush1.msra.mxu0 0.0
          %551 = vmatprep.subr.mxu0 0.0
          %552 = vmatpush1.msra.mxu0 0.0
          %553 = vmatprep.subr.mxu0 0.0
          %554 = vmatpush1.msra.mxu0 0.0
          %555 = vmatprep.subr.mxu0 0.0
          %556 = vmatpush1.msra.mxu0 0.0
          %557 = vmatprep.subr.mxu0 0.0
          %558 = vmatpush1.msra.mxu0 0.0
          %559 = vmatprep.subr.mxu0 0.0
          %560 = vmatpush1.msra.mxu0 0.0
          %561 = vmatprep.subr.mxu0 0.0
          %562 = vmatpush1.msra.mxu0 0.0
          %563 = vmatprep.subr.mxu0 0.0
          %564 = vmatpush1.msra.mxu0 0.0
          %565 = vmatprep.subr.mxu0 0.0
          %566 = vmatpush1.msra.mxu0 0.0
          %567 = vmatprep.subr.mxu0 0.0
          %568 = vmatpush1.msra.mxu0 0.0
          %569 = vmatprep.subr.mxu0 0.0
          %570 = vmatpush1.msra.mxu0 0.0
          %571 = vmatprep.subr.mxu0 0.0
          %572 = vmatpush1.msra.mxu0 0.0
          %573 = vmatprep.subr.mxu0 0.0
          %574 = vmatpush1.msra.mxu0 0.0
          %575 = vmatprep.subr.mxu0 0.0
          %576 = vmatpush1.msra.mxu0 0.0
          %577 = vmatprep.subr.mxu0 0.0
          %578 = vmatpush1.msra.mxu0 0.0
          %579 = vmatprep.subr.mxu0 0.0
          %580 = vmatpush1.msra.mxu0 0.0
          %581 = vmatprep.subr.mxu0 0.0
          %582 = vmatpush1.msra.mxu0 0.0
          %583 = vmatprep.subr.mxu0 0.0
          %584 = vmatpush1.msra.mxu0 0.0
          %585 = vmatprep.subr.mxu0 0.0
          %586 = vmatpush1.msra.mxu0 0.0
          %587 = vmatprep.subr.mxu0 0.0
          %588 = vmatpush1.msra.mxu0 0.0
          %589 = vmatprep.subr.mxu0 0.0
          %590 = vmatpush1.msra.mxu0 0.0
          %591 = vmatprep.mubr.f32.mxu0 0.0
          %592 = vmatmul.mubr.f32.gmra.mrb[0].mxu0 %v525
          %v593 = vpop.f32.mrb[0].mxu0
          %v594 = vadd.f32 %v522, %v593
          %v595 = vpop.f32.mrb[0].mxu0
          %596 = vdwg.mxu0
          %v597 = vmax.f32 %v594, 0.0
          %v598 = vpack.c.bf16 %v597, %v597
          %vm599 = vcmask 253952
          %vm600 = vsmask.f32 256
          %vm601 = vmand %vm599, %vm600
          %v602 = vld [vmem:[#allocation2] sm:$0x1]
          %v603 = vsel %vm601, %v598, %v602
          %604 = vst [vmem:[#allocation2] sm:$0x1] %v603
        $region76: #{tpu_custom_call.1} parent=47 // pred_fallthru
          _
        %v605 = vld [vmem:[#allocation2] sm:$0x1]
        %v606 = vld [vmem:[%s365] sm:$0xff]
        %v607 = vld [vmem:[%s365 + $0x8] sm:$0xff]
        %v608 = vld [vmem:[%s365 + $0x10] sm:$0xff]
        %v609 = vld [vmem:[%s365 + $0x18] sm:$0xff]
        %v610 = vld [vmem:[%s365 + $0x20] sm:$0xff]
        %v611 = vld [vmem:[%s365 + $0x28] sm:$0xff]
        %v612 = vld [vmem:[%s365 + $0x30] sm:$0xff]
        %v613 = vld [vmem:[%s365 + $0x38] sm:$0xff]
        %v614 = vld [vmem:[%s365 + $0x40] sm:$0xff]
        %v615 = vld [vmem:[%s365 + $0x48] sm:$0xff]
        %v616 = vld [vmem:[%s365 + $0x50] sm:$0xff]
        %v617 = vld [vmem:[%s365 + $0x58] sm:$0xff]
        %v618 = vld [vmem:[%s365 + $0x60] sm:$0xff]
        %v619 = vld [vmem:[%s365 + $0x68] sm:$0xff]
        %v620 = vld [vmem:[%s365 + $0x70] sm:$0xff]
        %v621 = vld [vmem:[%s365 + $0x78] sm:$0xff]
        %v622 = vld [vmem:[%s365 + $0x80] sm:$0xff]
        %v623 = vld [vmem:[%s365 + $0x88] sm:$0xff]
        %v624 = vld [vmem:[%s365 + $0x90] sm:$0xff]
        %v625 = vld [vmem:[%s365 + $0x98] sm:$0xff]
        %v626 = vld [vmem:[%s365 + $0xa0] sm:$0xff]
        %v627 = vld [vmem:[%s365 + $0xa8] sm:$0xff]
        %v628 = vld [vmem:[%s365 + $0xb0] sm:$0xff]
        %v629 = vld [vmem:[%s365 + $0xb8] sm:$0xff]
        %v630 = vld [vmem:[%s365 + $0xc0] sm:$0xff]
        %v631 = vld [vmem:[%s365 + $0xc8] sm:$0xff]
        %v632 = vld [vmem:[%s365 + $0xd0] sm:$0xff]
        %v633 = vld [vmem:[%s365 + $0xd8] sm:$0xff]
        %v634 = vld [vmem:[%s365 + $0xe0] sm:$0xff]
        %v635 = vld [vmem:[%s365 + $0xe8] sm:$0xff]
        %v636 = vld [vmem:[%s365 + $0xf0] sm:$0xff]
        %v637 = vld [vmem:[%s365 + $0xf8] sm:$0xff]
        %v638 = vld [vmem:[%s365 + $0x100] sm:$0xff]
        %v639 = vld [vmem:[%s365 + $0x108] sm:$0xff]
        %v640 = vld [vmem:[%s365 + $0x110] sm:$0xff]
        %v641 = vld [vmem:[%s365 + $0x118] sm:$0xff]
        %v642 = vld [vmem:[%s365 + $0x120] sm:$0xff]
        %v643 = vld [vmem:[%s365 + $0x128] sm:$0xff]
        %v644 = vld [vmem:[%s365 + $0x130] sm:$0xff]
        %v645 = vld [vmem:[%s365 + $0x138] sm:$0xff]
        %v646 = vld [vmem:[%s365 + $0x140] sm:$0xff]
        %v647 = vld [vmem:[%s365 + $0x148] sm:$0xff]
        %v648 = vld [vmem:[%s365 + $0x150] sm:$0xff]
        %v649 = vld [vmem:[%s365 + $0x158] sm:$0xff]
        %v650 = vld [vmem:[%s365 + $0x160] sm:$0xff]
        %v651 = vld [vmem:[%s365 + $0x168] sm:$0xff]
        %v652 = vld [vmem:[%s365 + $0x170] sm:$0xff]
        %v653 = vld [vmem:[%s365 + $0x178] sm:$0xff]
        %v654 = vld [vmem:[%s365 + $0x180] sm:$0xff]
        %v655 = vld [vmem:[%s365 + $0x188] sm:$0xff]
        %v656 = vld [vmem:[%s365 + $0x190] sm:$0xff]
        %v657 = vld [vmem:[%s365 + $0x198] sm:$0xff]
        %v658 = vld [vmem:[%s365 + $0x1a0] sm:$0xff]
        %v659 = vld [vmem:[%s365 + $0x1a8] sm:$0xff]
        %v660 = vld [vmem:[%s365 + $0x1b0] sm:$0xff]
        %v661 = vld [vmem:[%s365 + $0x1b8] sm:$0xff]
        %v662 = vld [vmem:[%s365 + $0x1c0] sm:$0xff]
        %v663 = vld [vmem:[%s365 + $0x1c8] sm:$0xff]
        %v664 = vld [vmem:[%s365 + $0x1d0] sm:$0xff]
        %v665 = vld [vmem:[%s365 + $0x1d8] sm:$0xff]
        %v666 = vld [vmem:[%s365 + $0x1e0] sm:$0xff]
        %v667 = vld [vmem:[%s365 + $0x1e8] sm:$0xff]
        %v668 = vld [vmem:[%s365 + $0x1f0] sm:$0xff]
        %v669 = vld [vmem:[%s365 + $0x1f8] sm:$0xff]
        %v670 = vld [vmem:[%s365 + $0x200] sm:$0xff]
        %v671 = vld [vmem:[%s365 + $0x208] sm:$0xff]
        %v672 = vld [vmem:[%s365 + $0x210] sm:$0xff]
        %v673 = vld [vmem:[%s365 + $0x218] sm:$0xff]
        %v674 = vld [vmem:[%s365 + $0x220] sm:$0xff]
        %v675 = vld [vmem:[%s365 + $0x228] sm:$0xff]
        %v676 = vld [vmem:[%s365 + $0x230] sm:$0xff]
        %v677 = vld [vmem:[%s365 + $0x238] sm:$0xff]
        %v678 = vld [vmem:[%s365 + $0x240] sm:$0xff]
        %v679 = vld [vmem:[%s365 + $0x248] sm:$0xff]
        %v680 = vld [vmem:[%s365 + $0x250] sm:$0xff]
        %v681 = vld [vmem:[%s365 + $0x258] sm:$0xff]
        %v682 = vld [vmem:[%s365 + $0x260] sm:$0xff]
        %v683 = vld [vmem:[%s365 + $0x268] sm:$0xff]
        %v684 = vld [vmem:[%s365 + $0x270] sm:$0xff]
        %v685 = vld [vmem:[%s365 + $0x278] sm:$0xff]
        %v686 = vld [vmem:[%s365 + $0x280] sm:$0xff]
        %v687 = vld [vmem:[%s365 + $0x288] sm:$0xff]
        %v688 = vld [vmem:[%s365 + $0x290] sm:$0xff]
        %v689 = vld [vmem:[%s365 + $0x298] sm:$0xff]
        %v690 = vld [vmem:[%s365 + $0x2a0] sm:$0xff]
        %v691 = vld [vmem:[%s365 + $0x2a8] sm:$0xff]
        %v692 = vld [vmem:[%s365 + $0x2b0] sm:$0xff]
        %v693 = vld [vmem:[%s365 + $0x2b8] sm:$0xff]
        %v694 = vld [vmem:[%s365 + $0x2c0] sm:$0xff]
        %v695 = vld [vmem:[%s365 + $0x2c8] sm:$0xff]
        %v696 = vld [vmem:[%s365 + $0x2d0] sm:$0xff]
        %v697 = vld [vmem:[%s365 + $0x2d8] sm:$0xff]
        %v698 = vld [vmem:[%s365 + $0x2e0] sm:$0xff]
        %v699 = vld [vmem:[%s365 + $0x2e8] sm:$0xff]
        %v700 = vld [vmem:[%s365 + $0x2f0] sm:$0xff]
        %v701 = vld [vmem:[%s365 + $0x2f8] sm:$0xff]
        %v702 = vld [vmem:[%s365 + $0x300] sm:$0xff]
        %v703 = vld [vmem:[%s365 + $0x308] sm:$0xff]
        %v704 = vld [vmem:[%s365 + $0x310] sm:$0xff]
        %v705 = vld [vmem:[%s365 + $0x318] sm:$0xff]
        %v706 = vld [vmem:[%s365 + $0x320] sm:$0xff]
        %v707 = vld [vmem:[%s365 + $0x328] sm:$0xff]
        %v708 = vld [vmem:[%s365 + $0x330] sm:$0xff]
        %v709 = vld [vmem:[%s365 + $0x338] sm:$0xff]
        %v710 = vld [vmem:[%s365 + $0x340] sm:$0xff]
        %v711 = vld [vmem:[%s365 + $0x348] sm:$0xff]
        %v712 = vld [vmem:[%s365 + $0x350] sm:$0xff]
        %v713 = vld [vmem:[%s365 + $0x358] sm:$0xff]
        %v714 = vld [vmem:[%s365 + $0x360] sm:$0xff]
        %v715 = vld [vmem:[%s365 + $0x368] sm:$0xff]
        %v716 = vld [vmem:[%s365 + $0x370] sm:$0xff]
        %v717 = vld [vmem:[%s365 + $0x378] sm:$0xff]
        %v718 = vld [vmem:[%s365 + $0x380] sm:$0xff]
        %v719 = vld [vmem:[%s365 + $0x388] sm:$0xff]
        %v720 = vld [vmem:[%s365 + $0x390] sm:$0xff]
        %v721 = vld [vmem:[%s365 + $0x398] sm:$0xff]
        %v722 = vld [vmem:[%s365 + $0x3a0] sm:$0xff]
        %v723 = vld [vmem:[%s365 + $0x3a8] sm:$0xff]
        %v724 = vld [vmem:[%s365 + $0x3b0] sm:$0xff]
        %v725 = vld [vmem:[%s365 + $0x3b8] sm:$0xff]
        %v726 = vld [vmem:[%s365 + $0x3c0] sm:$0xff]
        %v727 = vld [vmem:[%s365 + $0x3c8] sm:$0xff]
        %v728 = vld [vmem:[%s365 + $0x3d0] sm:$0xff]
        %v729 = vld [vmem:[%s365 + $0x3d8] sm:$0xff]
        %v730 = vld [vmem:[%s365 + $0x3e0] sm:$0xff]
        %v731 = vld [vmem:[%s365 + $0x3e8] sm:$0xff]
        %v732 = vld [vmem:[%s365 + $0x3f0] sm:$0xff]
        %v733 = vld [vmem:[%s365 + $0x3f8] sm:$0xff]
        %v734 = vld [vmem:[%s365 + $0x400] sm:$0xff]
        %v735 = vld [vmem:[%s365 + $0x408] sm:$0xff]
        %v736 = vld [vmem:[%s365 + $0x410] sm:$0xff]
        %v737 = vld [vmem:[%s365 + $0x418] sm:$0xff]
        %v738 = vld [vmem:[%s365 + $0x420] sm:$0xff]
        %v739 = vld [vmem:[%s365 + $0x428] sm:$0xff]
        %v740 = vld [vmem:[%s365 + $0x430] sm:$0xff]
        %v741 = vld [vmem:[%s365 + $0x438] sm:$0xff]
        %v742 = vld [vmem:[%s365 + $0x440] sm:$0xff]
        %v743 = vld [vmem:[%s365 + $0x448] sm:$0xff]
        %v744 = vld [vmem:[%s365 + $0x450] sm:$0xff]
        %v745 = vld [vmem:[%s365 + $0x458] sm:$0xff]
        %v746 = vld [vmem:[%s365 + $0x460] sm:$0xff]
        %v747 = vld [vmem:[%s365 + $0x468] sm:$0xff]
        %v748 = vld [vmem:[%s365 + $0x470] sm:$0xff]
        %v749 = vld [vmem:[%s365 + $0x478] sm:$0xff]
        %v750 = vld [vmem:[%s365 + $0x480] sm:$0xff]
        %v751 = vld [vmem:[%s365 + $0x488] sm:$0xff]
        %v752 = vld [vmem:[%s365 + $0x490] sm:$0xff]
        %v753 = vld [vmem:[%s365 + $0x498] sm:$0xff]
        %v754 = vld [vmem:[%s365 + $0x4a0] sm:$0xff]
        %v755 = vld [vmem:[%s365 + $0x4a8] sm:$0xff]
        %v756 = vld [vmem:[%s365 + $0x4b0] sm:$0xff]
        %v757 = vld [vmem:[%s365 + $0x4b8] sm:$0xff]
        %v758 = vld [vmem:[%s365 + $0x4c0] sm:$0xff]
        %v759 = vld [vmem:[%s365 + $0x4c8] sm:$0xff]
        %v760 = vld [vmem:[%s365 + $0x4d0] sm:$0xff]
        %v761 = vld [vmem:[%s365 + $0x4d8] sm:$0xff]
        %v762 = vld [vmem:[%s365 + $0x4e0] sm:$0xff]
        %v763 = vld [vmem:[%s365 + $0x4e8] sm:$0xff]
        %v764 = vld [vmem:[%s365 + $0x4f0] sm:$0xff]
        %v765 = vld [vmem:[%s365 + $0x4f8] sm:$0xff]
        %v766 = vld [vmem:[%s365 + $0x500] sm:$0xff]
        %v767 = vld [vmem:[%s365 + $0x508] sm:$0xff]
        %v768 = vld [vmem:[%s365 + $0x510] sm:$0xff]
        %v769 = vld [vmem:[%s365 + $0x518] sm:$0xff]
        %v770 = vld [vmem:[%s365 + $0x520] sm:$0xff]
        %v771 = vld [vmem:[%s365 + $0x528] sm:$0xff]
        %v772 = vld [vmem:[%s365 + $0x530] sm:$0xff]
        %v773 = vld [vmem:[%s365 + $0x538] sm:$0xff]
        %v774 = vld [vmem:[%s365 + $0x540] sm:$0xff]
        %v775 = vld [vmem:[%s365 + $0x548] sm:$0xff]
        %v776 = vld [vmem:[%s365 + $0x550] sm:$0xff]
        %v777 = vld [vmem:[%s365 + $0x558] sm:$0xff]
        %v778 = vld [vmem:[%s365 + $0x560] sm:$0xff]
        %v779 = vld [vmem:[%s365 + $0x568] sm:$0xff]
        %v780 = vld [vmem:[%s365 + $0x570] sm:$0xff]
        %v781 = vld [vmem:[%s365 + $0x578] sm:$0xff]
        %v782 = vld [vmem:[%s365 + $0x580] sm:$0xff]
        %v783 = vld [vmem:[%s365 + $0x588] sm:$0xff]
        %v784 = vld [vmem:[%s365 + $0x590] sm:$0xff]
        %v785 = vld [vmem:[%s365 + $0x598] sm:$0xff]
        %v786 = vld [vmem:[%s365 + $0x5a0] sm:$0xff]
        %v787 = vld [vmem:[%s365 + $0x5a8] sm:$0xff]
        %v788 = vld [vmem:[%s365 + $0x5b0] sm:$0xff]
        %v789 = vld [vmem:[%s365 + $0x5b8] sm:$0xff]
        %v790 = vld [vmem:[%s365 + $0x5c0] sm:$0xff]
        %v791 = vld [vmem:[%s365 + $0x5c8] sm:$0xff]
        %v792 = vld [vmem:[%s365 + $0x5d0] sm:$0xff]
        %v793 = vld [vmem:[%s365 + $0x5d8] sm:$0xff]
        %v794 = vld [vmem:[%s365 + $0x5e0] sm:$0xff]
        %v795 = vld [vmem:[%s365 + $0x5e8] sm:$0xff]
        %v796 = vld [vmem:[%s365 + $0x5f0] sm:$0xff]
        %v797 = vld [vmem:[%s365 + $0x5f8] sm:$0xff]
        %v798 = vld [vmem:[%s374] sm:$0xff]
        %v799 = vld [vmem:[%s374 + $0x8] sm:$0xff]
        %v800 = vld [vmem:[%s374 + $0x10] sm:$0xff]
        %v801 = vld [vmem:[%s374 + $0x18] sm:$0xff]
        %v802 = vld [vmem:[%s374 + $0x20] sm:$0xff]
        %v803 = vld [vmem:[%s374 + $0x28] sm:$0xff]
        %v804 = vld [vmem:[%s374 + $0x30] sm:$0xff]
        %v805 = vld [vmem:[%s374 + $0x38] sm:$0xff]
        %v806 = vld [vmem:[%s374 + $0x40] sm:$0xff]
        %v807 = vld [vmem:[%s374 + $0x48] sm:$0xff]
        %v808 = vld [vmem:[%s374 + $0x50] sm:$0xff]
        %v809 = vld [vmem:[%s374 + $0x58] sm:$0xff]
        %v1002 = vunpack.c.l.b16 %v606
        %v1003 = vunpack.c.h.b16 %v606
        %v1004 = vunpack.c.l.b16 %v607
        %v1005 = vunpack.c.h.b16 %v607
        %v1006 = vunpack.c.l.b16 %v608
        %v1007 = vunpack.c.h.b16 %v608
        %v1008 = vunpack.c.l.b16 %v609
        %v1009 = vunpack.c.h.b16 %v609
        %v1010 = vunpack.c.l.b16 %v610
        %v1011 = vunpack.c.h.b16 %v610
        %v1012 = vunpack.c.l.b16 %v611
        %v1013 = vunpack.c.h.b16 %v611
        %v1014 = vunpack.c.l.b16 %v612
        %v1015 = vunpack.c.h.b16 %v612
        %v1016 = vunpack.c.l.b16 %v613
        %v1017 = vunpack.c.h.b16 %v613
        %v1018 = vunpack.c.l.b16 %v614
        %v1019 = vunpack.c.h.b16 %v614
        %v1020 = vunpack.c.l.b16 %v615
        %v1021 = vunpack.c.h.b16 %v615
        %v1022 = vunpack.c.l.b16 %v616
        %v1023 = vunpack.c.h.b16 %v616
        %v1024 = vunpack.c.l.b16 %v617
        %v1025 = vunpack.c.h.b16 %v617
        %v1026 = vunpack.c.l.b16 %v618
        %v1027 = vunpack.c.h.b16 %v618
        %v1028 = vunpack.c.l.b16 %v619
        %v1029 = vunpack.c.h.b16 %v619
        %v1030 = vunpack.c.l.b16 %v620
        %v1031 = vunpack.c.h.b16 %v620
        %v1032 = vunpack.c.l.b16 %v621
        %v1033 = vunpack.c.h.b16 %v621
        %v1034 = vunpack.c.l.b16 %v622
        %v1035 = vunpack.c.h.b16 %v622
        %v1036 = vunpack.c.l.b16 %v623
        %v1037 = vunpack.c.h.b16 %v623
        %v1038 = vunpack.c.l.b16 %v624
        %v1039 = vunpack.c.h.b16 %v624
        %v1040 = vunpack.c.l.b16 %v625
        %v1041 = vunpack.c.h.b16 %v625
        %v1042 = vunpack.c.l.b16 %v626
        %v1043 = vunpack.c.h.b16 %v626
        %v1044 = vunpack.c.l.b16 %v627
        %v1045 = vunpack.c.h.b16 %v627
        %v1046 = vunpack.c.l.b16 %v628
        %v1047 = vunpack.c.h.b16 %v628
        %v1048 = vunpack.c.l.b16 %v629
        %v1049 = vunpack.c.h.b16 %v629
        %v1050 = vunpack.c.l.b16 %v630
        %v1051 = vunpack.c.h.b16 %v630
        %v1052 = vunpack.c.l.b16 %v631
        %v1053 = vunpack.c.h.b16 %v631
        %v1054 = vunpack.c.l.b16 %v632
        %v1055 = vunpack.c.h.b16 %v632
        %v1056 = vunpack.c.l.b16 %v633
        %v1057 = vunpack.c.h.b16 %v633
        %v1058 = vunpack.c.l.b16 %v634
        %v1059 = vunpack.c.h.b16 %v634
        %v1060 = vunpack.c.l.b16 %v635
        %v1061 = vunpack.c.h.b16 %v635
        %v1062 = vunpack.c.l.b16 %v636
        %v1063 = vunpack.c.h.b16 %v636
        %v1064 = vunpack.c.l.b16 %v637
        %v1065 = vunpack.c.h.b16 %v637
        %v1066 = vunpack.c.l.b16 %v638
        %v1067 = vunpack.c.h.b16 %v638
        %v1068 = vunpack.c.l.b16 %v639
        %v1069 = vunpack.c.h.b16 %v639
        %v1070 = vunpack.c.l.b16 %v640
        %v1071 = vunpack.c.h.b16 %v640
        %v1072 = vunpack.c.l.b16 %v641
        %v1073 = vunpack.c.h.b16 %v641
        %v1074 = vunpack.c.l.b16 %v642
        %v1075 = vunpack.c.h.b16 %v642
        %v1076 = vunpack.c.l.b16 %v643
        %v1077 = vunpack.c.h.b16 %v643
        %v1078 = vunpack.c.l.b16 %v644
        %v1079 = vunpack.c.h.b16 %v644
        %v1080 = vunpack.c.l.b16 %v645
        %v1081 = vunpack.c.h.b16 %v645
        %v1082 = vunpack.c.l.b16 %v646
        %v1083 = vunpack.c.h.b16 %v646
        %v1084 = vunpack.c.l.b16 %v647
        %v1085 = vunpack.c.h.b16 %v647
        %v1086 = vunpack.c.l.b16 %v648
        %v1087 = vunpack.c.h.b16 %v648
        %v1088 = vunpack.c.l.b16 %v649
        %v1089 = vunpack.c.h.b16 %v649
        %v1090 = vunpack.c.l.b16 %v650
        %v1091 = vunpack.c.h.b16 %v650
        %v1092 = vunpack.c.l.b16 %v651
        %v1093 = vunpack.c.h.b16 %v651
        %v1094 = vunpack.c.l.b16 %v652
        %v1095 = vunpack.c.h.b16 %v652
        %v1096 = vunpack.c.l.b16 %v653
        %v1097 = vunpack.c.h.b16 %v653
        %v1098 = vunpack.c.l.b16 %v654
        %v1099 = vunpack.c.h.b16 %v654
        %v1100 = vunpack.c.l.b16 %v655
        %v1101 = vunpack.c.h.b16 %v655
        %v1102 = vunpack.c.l.b16 %v656
        %v1103 = vunpack.c.h.b16 %v656
        %v1104 = vunpack.c.l.b16 %v657
        %v1105 = vunpack.c.h.b16 %v657
        %v1106 = vunpack.c.l.b16 %v658
        %v1107 = vunpack.c.h.b16 %v658
        %v1108 = vunpack.c.l.b16 %v659
        %v1109 = vunpack.c.h.b16 %v659
        %v1110 = vunpack.c.l.b16 %v660
        %v1111 = vunpack.c.h.b16 %v660
        %v1112 = vunpack.c.l.b16 %v661
        %v1113 = vunpack.c.h.b16 %v661
        %v1114 = vunpack.c.l.b16 %v662
        %v1115 = vunpack.c.h.b16 %v662
        %v1116 = vunpack.c.l.b16 %v663
        %v1117 = vunpack.c.h.b16 %v663
        %v1118 = vunpack.c.l.b16 %v664
        %v1119 = vunpack.c.h.b16 %v664
        %v1120 = vunpack.c.l.b16 %v665
        %v1121 = vunpack.c.h.b16 %v665
        %v1122 = vunpack.c.l.b16 %v666
        %v1123 = vunpack.c.h.b16 %v666
        %v1124 = vunpack.c.l.b16 %v667
        %v1125 = vunpack.c.h.b16 %v667
        %v1126 = vunpack.c.l.b16 %v668
        %v1127 = vunpack.c.h.b16 %v668
        %v1128 = vunpack.c.l.b16 %v669
        %v1129 = vunpack.c.h.b16 %v669
        %v1130 = vunpack.c.l.b16 %v670
        %v1131 = vunpack.c.h.b16 %v670
        %v1132 = vunpack.c.l.b16 %v671
        %v1133 = vunpack.c.h.b16 %v671
        %v1134 = vunpack.c.l.b16 %v672
        %v1135 = vunpack.c.h.b16 %v672
        %v1136 = vunpack.c.l.b16 %v673
        %v1137 = vunpack.c.h.b16 %v673
        %v1138 = vunpack.c.l.b16 %v674
        %v1139 = vunpack.c.h.b16 %v674
        %v1140 = vunpack.c.l.b16 %v675
        %v1141 = vunpack.c.h.b16 %v675
        %v1142 = vunpack.c.l.b16 %v676
        %v1143 = vunpack.c.h.b16 %v676
        %v1144 = vunpack.c.l.b16 %v677
        %v1145 = vunpack.c.h.b16 %v677
        %v1146 = vunpack.c.l.b16 %v678
        %v1147 = vunpack.c.h.b16 %v678
        %v1148 = vunpack.c.l.b16 %v679
        %v1149 = vunpack.c.h.b16 %v679
        %v1150 = vunpack.c.l.b16 %v680
        %v1151 = vunpack.c.h.b16 %v680
        %v1152 = vunpack.c.l.b16 %v681
        %v1153 = vunpack.c.h.b16 %v681
        %v1154 = vunpack.c.l.b16 %v682
        %v1155 = vunpack.c.h.b16 %v682
        %v1156 = vunpack.c.l.b16 %v683
        %v1157 = vunpack.c.h.b16 %v683
        %v1158 = vunpack.c.l.b16 %v684
        %v1159 = vunpack.c.h.b16 %v684
        %v1160 = vunpack.c.l.b16 %v685
        %v1161 = vunpack.c.h.b16 %v685
        %v1162 = vunpack.c.l.b16 %v686
        %v1163 = vunpack.c.h.b16 %v686
        %v1164 = vunpack.c.l.b16 %v687
        %v1165 = vunpack.c.h.b16 %v687
        %v1166 = vunpack.c.l.b16 %v688
        %v1167 = vunpack.c.h.b16 %v688
        %v1168 = vunpack.c.l.b16 %v689
        %v1169 = vunpack.c.h.b16 %v689
        %v1170 = vunpack.c.l.b16 %v690
        %v1171 = vunpack.c.h.b16 %v690
        %v1172 = vunpack.c.l.b16 %v691
        %v1173 = vunpack.c.h.b16 %v691
        %v1174 = vunpack.c.l.b16 %v692
        %v1175 = vunpack.c.h.b16 %v692
        %v1176 = vunpack.c.l.b16 %v693
        %v1177 = vunpack.c.h.b16 %v693
        %v1178 = vunpack.c.l.b16 %v694
        %v1179 = vunpack.c.h.b16 %v694
        %v1180 = vunpack.c.l.b16 %v695
        %v1181 = vunpack.c.h.b16 %v695
        %v1182 = vunpack.c.l.b16 %v696
        %v1183 = vunpack.c.h.b16 %v696
        %v1184 = vunpack.c.l.b16 %v697
        %v1185 = vunpack.c.h.b16 %v697
        %v1186 = vunpack.c.l.b16 %v698
        %v1187 = vunpack.c.h.b16 %v698
        %v1188 = vunpack.c.l.b16 %v699
        %v1189 = vunpack.c.h.b16 %v699
        %v1190 = vunpack.c.l.b16 %v700
        %v1191 = vunpack.c.h.b16 %v700
        %v1192 = vunpack.c.l.b16 %v701
        %v1193 = vunpack.c.h.b16 %v701
        %v1194 = vunpack.c.l.b16 %v702
        %v1195 = vunpack.c.h.b16 %v702
        %v1196 = vunpack.c.l.b16 %v703
        %v1197 = vunpack.c.h.b16 %v703
        %v1198 = vunpack.c.l.b16 %v704
        %v1199 = vunpack.c.h.b16 %v704
        %v1200 = vunpack.c.l.b16 %v705
        %v1201 = vunpack.c.h.b16 %v705
        %v1202 = vunpack.c.l.b16 %v706
        %v1203 = vunpack.c.h.b16 %v706
        %v1204 = vunpack.c.l.b16 %v707
        %v1205 = vunpack.c.h.b16 %v707
        %v1206 = vunpack.c.l.b16 %v708
        %v1207 = vunpack.c.h.b16 %v708
        %v1208 = vunpack.c.l.b16 %v709
        %v1209 = vunpack.c.h.b16 %v709
        %v1210 = vunpack.c.l.b16 %v710
        %v1211 = vunpack.c.h.b16 %v710
        %v1212 = vunpack.c.l.b16 %v711
        %v1213 = vunpack.c.h.b16 %v711
        %v1214 = vunpack.c.l.b16 %v712
        %v1215 = vunpack.c.h.b16 %v712
        %v1216 = vunpack.c.l.b16 %v713
        %v1217 = vunpack.c.h.b16 %v713
        %v1218 = vunpack.c.l.b16 %v714
        %v1219 = vunpack.c.h.b16 %v714
        %v1220 = vunpack.c.l.b16 %v715
        %v1221 = vunpack.c.h.b16 %v715
        %v1222 = vunpack.c.l.b16 %v716
        %v1223 = vunpack.c.h.b16 %v716
        %v1224 = vunpack.c.l.b16 %v717
        %v1225 = vunpack.c.h.b16 %v717
        %v1226 = vunpack.c.l.b16 %v718
        %v1227 = vunpack.c.h.b16 %v718
        %v1228 = vunpack.c.l.b16 %v719
        %v1229 = vunpack.c.h.b16 %v719
        %v1230 = vunpack.c.l.b16 %v720
        %v1231 = vunpack.c.h.b16 %v720
        %v1232 = vunpack.c.l.b16 %v721
        %v1233 = vunpack.c.h.b16 %v721
        %v1234 = vunpack.c.l.b16 %v722
        %v1235 = vunpack.c.h.b16 %v722
        %v1236 = vunpack.c.l.b16 %v723
        %v1237 = vunpack.c.h.b16 %v723
        %v1238 = vunpack.c.l.b16 %v724
        %v1239 = vunpack.c.h.b16 %v724
        %v1240 = vunpack.c.l.b16 %v725
        %v1241 = vunpack.c.h.b16 %v725
        %v1242 = vunpack.c.l.b16 %v726
        %v1243 = vunpack.c.h.b16 %v726
        %v1244 = vunpack.c.l.b16 %v727
        %v1245 = vunpack.c.h.b16 %v727
        %v1246 = vunpack.c.l.b16 %v728
        %v1247 = vunpack.c.h.b16 %v728
        %v1248 = vunpack.c.l.b16 %v729
        %v1249 = vunpack.c.h.b16 %v729
        %v1250 = vunpack.c.l.b16 %v730
        %v1251 = vunpack.c.h.b16 %v730
        %v1252 = vunpack.c.l.b16 %v731
        %v1253 = vunpack.c.h.b16 %v731
        %v1254 = vunpack.c.l.b16 %v732
        %v1255 = vunpack.c.h.b16 %v732
        %v1256 = vunpack.c.l.b16 %v733
        %v1257 = vunpack.c.h.b16 %v733
        %v1258 = vunpack.c.l.b16 %v734
        %v1259 = vunpack.c.h.b16 %v734
        %v1260 = vunpack.c.l.b16 %v735
        %v1261 = vunpack.c.h.b16 %v735
        %v1262 = vunpack.c.l.b16 %v736
        %v1263 = vunpack.c.h.b16 %v736
        %v1264 = vunpack.c.l.b16 %v737
        %v1265 = vunpack.c.h.b16 %v737
        %v1266 = vunpack.c.l.b16 %v738
        %v1267 = vunpack.c.h.b16 %v738
        %v1268 = vunpack.c.l.b16 %v739
        %v1269 = vunpack.c.h.b16 %v739
        %v1270 = vunpack.c.l.b16 %v740
        %v1271 = vunpack.c.h.b16 %v740
        %v1272 = vunpack.c.l.b16 %v741
        %v1273 = vunpack.c.h.b16 %v741
        %v1274 = vunpack.c.l.b16 %v742
        %v1275 = vunpack.c.h.b16 %v742
        %v1276 = vunpack.c.l.b16 %v743
        %v1277 = vunpack.c.h.b16 %v743
        %v1278 = vunpack.c.l.b16 %v744
        %v1279 = vunpack.c.h.b16 %v744
        %v1280 = vunpack.c.l.b16 %v745
        %v1281 = vunpack.c.h.b16 %v745
        %v1282 = vunpack.c.l.b16 %v746
        %v1283 = vunpack.c.h.b16 %v746
        %v1284 = vunpack.c.l.b16 %v747
        %v1285 = vunpack.c.h.b16 %v747
        %v1286 = vunpack.c.l.b16 %v748
        %v1287 = vunpack.c.h.b16 %v748
        %v1288 = vunpack.c.l.b16 %v749
        %v1289 = vunpack.c.h.b16 %v749
        %v1290 = vunpack.c.l.b16 %v750
        %v1291 = vunpack.c.h.b16 %v750
        %v1292 = vunpack.c.l.b16 %v751
        %v1293 = vunpack.c.h.b16 %v751
        %v1294 = vunpack.c.l.b16 %v752
        %v1295 = vunpack.c.h.b16 %v752
        %v1296 = vunpack.c.l.b16 %v753
        %v1297 = vunpack.c.h.b16 %v753
        %v1298 = vunpack.c.l.b16 %v754
        %v1299 = vunpack.c.h.b16 %v754
        %v1300 = vunpack.c.l.b16 %v755
        %v1301 = vunpack.c.h.b16 %v755
        %v1302 = vunpack.c.l.b16 %v756
        %v1303 = vunpack.c.h.b16 %v756
        %v1304 = vunpack.c.l.b16 %v757
        %v1305 = vunpack.c.h.b16 %v757
        %v1306 = vunpack.c.l.b16 %v758
        %v1307 = vunpack.c.h.b16 %v758
        %v1308 = vunpack.c.l.b16 %v759
        %v1309 = vunpack.c.h.b16 %v759
        %v1310 = vunpack.c.l.b16 %v760
        %v1311 = vunpack.c.h.b16 %v760
        %v1312 = vunpack.c.l.b16 %v761
        %v1313 = vunpack.c.h.b16 %v761
        %v1314 = vunpack.c.l.b16 %v762
        %v1315 = vunpack.c.h.b16 %v762
        %v1316 = vunpack.c.l.b16 %v763
        %v1317 = vunpack.c.h.b16 %v763
        %v1318 = vunpack.c.l.b16 %v764
        %v1319 = vunpack.c.h.b16 %v764
        %v1320 = vunpack.c.l.b16 %v765
        %v1321 = vunpack.c.h.b16 %v765
        %v1322 = vunpack.c.l.b16 %v766
        %v1323 = vunpack.c.h.b16 %v766
        %v1324 = vunpack.c.l.b16 %v767
        %v1325 = vunpack.c.h.b16 %v767
        %v1326 = vunpack.c.l.b16 %v768
        %v1327 = vunpack.c.h.b16 %v768
        %v1328 = vunpack.c.l.b16 %v769
        %v1329 = vunpack.c.h.b16 %v769
        %v1330 = vunpack.c.l.b16 %v770
        %v1331 = vunpack.c.h.b16 %v770
        %v1332 = vunpack.c.l.b16 %v771
        %v1333 = vunpack.c.h.b16 %v771
        %v1334 = vunpack.c.l.b16 %v772
        %v1335 = vunpack.c.h.b16 %v772
        %v1336 = vunpack.c.l.b16 %v773
        %v1337 = vunpack.c.h.b16 %v773
        %v1338 = vunpack.c.l.b16 %v774
        %v1339 = vunpack.c.h.b16 %v774
        %v1340 = vunpack.c.l.b16 %v775
        %v1341 = vunpack.c.h.b16 %v775
        %v1342 = vunpack.c.l.b16 %v776
        %v1343 = vunpack.c.h.b16 %v776
        %v1344 = vunpack.c.l.b16 %v777
        %v1345 = vunpack.c.h.b16 %v777
        %v1346 = vunpack.c.l.b16 %v778
        %v1347 = vunpack.c.h.b16 %v778
        %v1348 = vunpack.c.l.b16 %v779
        %v1349 = vunpack.c.h.b16 %v779
        %v1350 = vunpack.c.l.b16 %v780
        %v1351 = vunpack.c.h.b16 %v780
        %v1352 = vunpack.c.l.b16 %v781
        %v1353 = vunpack.c.h.b16 %v781
        %v1354 = vunpack.c.l.b16 %v782
        %v1355 = vunpack.c.h.b16 %v782
        %v1356 = vunpack.c.l.b16 %v783
        %v1357 = vunpack.c.h.b16 %v783
        %v1358 = vunpack.c.l.b16 %v784
        %v1359 = vunpack.c.h.b16 %v784
        %v1360 = vunpack.c.l.b16 %v785
        %v1361 = vunpack.c.h.b16 %v785
        %v1362 = vunpack.c.l.b16 %v786
        %v1363 = vunpack.c.h.b16 %v786
        %v1364 = vunpack.c.l.b16 %v787
        %v1365 = vunpack.c.h.b16 %v787
        %v1366 = vunpack.c.l.b16 %v788
        %v1367 = vunpack.c.h.b16 %v788
        %v1368 = vunpack.c.l.b16 %v789
        %v1369 = vunpack.c.h.b16 %v789
        %v1370 = vunpack.c.l.b16 %v790
        %v1371 = vunpack.c.h.b16 %v790
        %v1372 = vunpack.c.l.b16 %v791
        %v1373 = vunpack.c.h.b16 %v791
        %v1374 = vunpack.c.l.b16 %v792
        %v1375 = vunpack.c.h.b16 %v792
        %v1376 = vunpack.c.l.b16 %v793
        %v1377 = vunpack.c.h.b16 %v793
        %v1378 = vunpack.c.l.b16 %v794
        %v1379 = vunpack.c.h.b16 %v794
        %v1380 = vunpack.c.l.b16 %v795
        %v1381 = vunpack.c.h.b16 %v795
        %v1382 = vunpack.c.l.b16 %v796
        %v1383 = vunpack.c.h.b16 %v796
        %v1384 = vunpack.c.l.b16 %v797
        %v1385 = vunpack.c.h.b16 %v797
        %v1386 = vpack.c.b16 %v1098, %v1002
        %v1387 = vpack.c.b16 %v1099, %v1003
        %v1388 = vpack.c.b16 %v1100, %v1004
        %v1389 = vpack.c.b16 %v1101, %v1005
        %v1390 = vpack.c.b16 %v1102, %v1006
        %v1391 = vpack.c.b16 %v1103, %v1007
        %v1392 = vpack.c.b16 %v1104, %v1008
        %v1393 = vpack.c.b16 %v1105, %v1009
        %v1394 = vpack.c.b16 %v1106, %v1010
        %v1395 = vpack.c.b16 %v1107, %v1011
        %v1396 = vpack.c.b16 %v1108, %v1012
        %v1397 = vpack.c.b16 %v1109, %v1013
        %v1398 = vpack.c.b16 %v1110, %v1014
        %v1399 = vpack.c.b16 %v1111, %v1015
        %v1400 = vpack.c.b16 %v1112, %v1016
        %v1401 = vpack.c.b16 %v1113, %v1017
        %v1402 = vpack.c.b16 %v1114, %v1018
        %v1403 = vpack.c.b16 %v1115, %v1019
        %v1404 = vpack.c.b16 %v1116, %v1020
        %v1405 = vpack.c.b16 %v1117, %v1021
        %v1406 = vpack.c.b16 %v1118, %v1022
        %v1407 = vpack.c.b16 %v1119, %v1023
        %v1408 = vpack.c.b16 %v1120, %v1024
        %v1409 = vpack.c.b16 %v1121, %v1025
        %v1410 = vpack.c.b16 %v1122, %v1026
        %v1411 = vpack.c.b16 %v1123, %v1027
        %v1412 = vpack.c.b16 %v1124, %v1028
        %v1413 = vpack.c.b16 %v1125, %v1029
        %v1414 = vpack.c.b16 %v1126, %v1030
        %v1415 = vpack.c.b16 %v1127, %v1031
        %v1416 = vpack.c.b16 %v1128, %v1032
        %v1417 = vpack.c.b16 %v1129, %v1033
        %v1418 = vpack.c.b16 %v1130, %v1034
        %v1419 = vpack.c.b16 %v1131, %v1035
        %v1420 = vpack.c.b16 %v1132, %v1036
        %v1421 = vpack.c.b16 %v1133, %v1037
        %v1422 = vpack.c.b16 %v1134, %v1038
        %v1423 = vpack.c.b16 %v1135, %v1039
        %v1424 = vpack.c.b16 %v1136, %v1040
        %v1425 = vpack.c.b16 %v1137, %v1041
        %v1426 = vpack.c.b16 %v1138, %v1042
        %v1427 = vpack.c.b16 %v1139, %v1043
        %v1428 = vpack.c.b16 %v1140, %v1044
        %v1429 = vpack.c.b16 %v1141, %v1045
        %v1430 = vpack.c.b16 %v1142, %v1046
        %v1431 = vpack.c.b16 %v1143, %v1047
        %v1432 = vpack.c.b16 %v1144, %v1048
        %v1433 = vpack.c.b16 %v1145, %v1049
        %v1434 = vpack.c.b16 %v1146, %v1050
        %v1435 = vpack.c.b16 %v1147, %v1051
        %v1436 = vpack.c.b16 %v1148, %v1052
        %v1437 = vpack.c.b16 %v1149, %v1053
        %v1438 = vpack.c.b16 %v1150, %v1054
        %v1439 = vpack.c.b16 %v1151, %v1055
        %v1440 = vpack.c.b16 %v1152, %v1056
        %v1441 = vpack.c.b16 %v1153, %v1057
        %v1442 = vpack.c.b16 %v1154, %v1058
        %v1443 = vpack.c.b16 %v1155, %v1059
        %v1444 = vpack.c.b16 %v1156, %v1060
        %v1445 = vpack.c.b16 %v1157, %v1061
        %v1446 = vpack.c.b16 %v1158, %v1062
        %v1447 = vpack.c.b16 %v1159, %v1063
        %v1448 = vpack.c.b16 %v1160, %v1064
        %v1449 = vpack.c.b16 %v1161, %v1065
        %v1450 = vpack.c.b16 %v1162, %v1066
        %v1451 = vpack.c.b16 %v1163, %v1067
        %v1452 = vpack.c.b16 %v1164, %v1068
        %v1453 = vpack.c.b16 %v1165, %v1069
        %v1454 = vpack.c.b16 %v1166, %v1070
        %v1455 = vpack.c.b16 %v1167, %v1071
        %v1456 = vpack.c.b16 %v1168, %v1072
        %v1457 = vpack.c.b16 %v1169, %v1073
        %v1458 = vpack.c.b16 %v1170, %v1074
        %v1459 = vpack.c.b16 %v1171, %v1075
        %v1460 = vpack.c.b16 %v1172, %v1076
        %v1461 = vpack.c.b16 %v1173, %v1077
        %v1462 = vpack.c.b16 %v1174, %v1078
        %v1463 = vpack.c.b16 %v1175, %v1079
        %v1464 = vpack.c.b16 %v1176, %v1080
        %v1465 = vpack.c.b16 %v1177, %v1081
        %v1466 = vpack.c.b16 %v1178, %v1082
        %v1467 = vpack.c.b16 %v1179, %v1083
        %v1468 = vpack.c.b16 %v1180, %v1084
        %v1469 = vpack.c.b16 %v1181, %v1085
        %v1470 = vpack.c.b16 %v1182, %v1086
        %v1471 = vpack.c.b16 %v1183, %v1087
        %v1472 = vpack.c.b16 %v1184, %v1088
        %v1473 = vpack.c.b16 %v1185, %v1089
        %v1474 = vpack.c.b16 %v1186, %v1090
        %v1475 = vpack.c.b16 %v1187, %v1091
        %v1476 = vpack.c.b16 %v1188, %v1092
        %v1477 = vpack.c.b16 %v1189, %v1093
        %v1478 = vpack.c.b16 %v1190, %v1094
        %v1479 = vpack.c.b16 %v1191, %v1095
        %v1480 = vpack.c.b16 %v1192, %v1096
        %v1481 = vpack.c.b16 %v1193, %v1097
        %v1482 = vpack.c.b16 %v1290, %v1194
        %v1483 = vpack.c.b16 %v1291, %v1195
        %v1484 = vpack.c.b16 %v1292, %v1196
        %v1485 = vpack.c.b16 %v1293, %v1197
        %v1486 = vpack.c.b16 %v1294, %v1198
        %v1487 = vpack.c.b16 %v1295, %v1199
        %v1488 = vpack.c.b16 %v1296, %v1200
        %v1489 = vpack.c.b16 %v1297, %v1201
        %v1490 = vpack.c.b16 %v1298, %v1202
        %v1491 = vpack.c.b16 %v1299, %v1203
        %v1492 = vpack.c.b16 %v1300, %v1204
        %v1493 = vpack.c.b16 %v1301, %v1205
        %v1494 = vpack.c.b16 %v1302, %v1206
        %v1495 = vpack.c.b16 %v1303, %v1207
        %v1496 = vpack.c.b16 %v1304, %v1208
        %v1497 = vpack.c.b16 %v1305, %v1209
        %v1498 = vpack.c.b16 %v1306, %v1210
        %v1499 = vpack.c.b16 %v1307, %v1211
        %v1500 = vpack.c.b16 %v1308, %v1212
        %v1501 = vpack.c.b16 %v1309, %v1213
        %v1502 = vpack.c.b16 %v1310, %v1214
        %v1503 = vpack.c.b16 %v1311, %v1215
        %v1504 = vpack.c.b16 %v1312, %v1216
        %v1505 = vpack.c.b16 %v1313, %v1217
        %v1506 = vpack.c.b16 %v1314, %v1218
        %v1507 = vpack.c.b16 %v1315, %v1219
        %v1508 = vpack.c.b16 %v1316, %v1220
        %v1509 = vpack.c.b16 %v1317, %v1221
        %v1510 = vpack.c.b16 %v1318, %v1222
        %v1511 = vpack.c.b16 %v1319, %v1223
        %v1512 = vpack.c.b16 %v1320, %v1224
        %v1513 = vpack.c.b16 %v1321, %v1225
        %v1514 = vpack.c.b16 %v1322, %v1226
        %v1515 = vpack.c.b16 %v1323, %v1227
        %v1516 = vpack.c.b16 %v1324, %v1228
        %v1517 = vpack.c.b16 %v1325, %v1229
        %v1518 = vpack.c.b16 %v1326, %v1230
        %v1519 = vpack.c.b16 %v1327, %v1231
        %v1520 = vpack.c.b16 %v1328, %v1232
        %v1521 = vpack.c.b16 %v1329, %v1233
        %v1522 = vpack.c.b16 %v1330, %v1234
        %v1523 = vpack.c.b16 %v1331, %v1235
        %v1524 = vpack.c.b16 %v1332, %v1236
        %v1525 = vpack.c.b16 %v1333, %v1237
        %v1526 = vpack.c.b16 %v1334, %v1238
        %v1527 = vpack.c.b16 %v1335, %v1239
        %v1528 = vpack.c.b16 %v1336, %v1240
        %v1529 = vpack.c.b16 %v1337, %v1241
        %v1530 = vpack.c.b16 %v1338, %v1242
        %v1531 = vpack.c.b16 %v1339, %v1243
        %v1532 = vpack.c.b16 %v1340, %v1244
        %v1533 = vpack.c.b16 %v1341, %v1245
        %v1534 = vpack.c.b16 %v1342, %v1246
        %v1535 = vpack.c.b16 %v1343, %v1247
        %v1536 = vpack.c.b16 %v1344, %v1248
        %v1537 = vpack.c.b16 %v1345, %v1249
        %v1538 = vpack.c.b16 %v1346, %v1250
        %v1539 = vpack.c.b16 %v1347, %v1251
        %v1540 = vpack.c.b16 %v1348, %v1252
        %v1541 = vpack.c.b16 %v1349, %v1253
        %v1542 = vpack.c.b16 %v1350, %v1254
        %v1543 = vpack.c.b16 %v1351, %v1255
        %v1544 = vpack.c.b16 %v1352, %v1256
        %v1545 = vpack.c.b16 %v1353, %v1257
        %v1546 = vpack.c.b16 %v1354, %v1258
        %v1547 = vpack.c.b16 %v1355, %v1259
        %v1548 = vpack.c.b16 %v1356, %v1260
        %v1549 = vpack.c.b16 %v1357, %v1261
        %v1550 = vpack.c.b16 %v1358, %v1262
        %v1551 = vpack.c.b16 %v1359, %v1263
        %v1552 = vpack.c.b16 %v1360, %v1264
        %v1553 = vpack.c.b16 %v1361, %v1265
        %v1554 = vpack.c.b16 %v1362, %v1266
        %v1555 = vpack.c.b16 %v1363, %v1267
        %v1556 = vpack.c.b16 %v1364, %v1268
        %v1557 = vpack.c.b16 %v1365, %v1269
        %v1558 = vpack.c.b16 %v1366, %v1270
        %v1559 = vpack.c.b16 %v1367, %v1271
        %v1560 = vpack.c.b16 %v1368, %v1272
        %v1561 = vpack.c.b16 %v1369, %v1273
        %v1562 = vpack.c.b16 %v1370, %v1274
        %v1563 = vpack.c.b16 %v1371, %v1275
        %v1564 = vpack.c.b16 %v1372, %v1276
        %v1565 = vpack.c.b16 %v1373, %v1277
        %v1566 = vpack.c.b16 %v1374, %v1278
        %v1567 = vpack.c.b16 %v1375, %v1279
        %v1568 = vpack.c.b16 %v1376, %v1280
        %v1569 = vpack.c.b16 %v1377, %v1281
        %v1570 = vpack.c.b16 %v1378, %v1282
        %v1571 = vpack.c.b16 %v1379, %v1283
        %v1572 = vpack.c.b16 %v1380, %v1284
        %v1573 = vpack.c.b16 %v1381, %v1285
        %v1574 = vpack.c.b16 %v1382, %v1286
        %v1575 = vpack.c.b16 %v1383, %v1287
        %v1576 = vpack.c.b16 %v1384, %v1288
        %v1577 = vpack.c.b16 %v1385, %v1289
        %v1782 = vlaneseq
        %v1783 = vshrl.u32 %v1782, 7
        %v1784 = vsub.s32 0, %v1783
        %v1785 = vrot.slane %v798, %v1784
        %v1786 = vlaneseq
        %v1787 = vshrl.u32 %v1786, 7
        %v1788 = vsub.s32 1, %v1787
        %v1789 = vrot.slane %v798, %v1788
        %v1790 = vlaneseq
        %v1791 = vshrl.u32 %v1790, 7
        %v1792 = vsub.s32 2, %v1791
        %v1793 = vrot.slane %v798, %v1792
        %v1794 = vlaneseq
        %v1795 = vshrl.u32 %v1794, 7
        %v1796 = vsub.s32 3, %v1795
        %v1797 = vrot.slane %v798, %v1796
        %v1798 = vlaneseq
        %v1799 = vshrl.u32 %v1798, 7
        %v1800 = vsub.s32 4, %v1799
        %v1801 = vrot.slane %v798, %v1800
        %v1802 = vlaneseq
        %v1803 = vshrl.u32 %v1802, 7
        %v1804 = vsub.s32 5, %v1803
        %v1805 = vrot.slane %v798, %v1804
        %v1806 = vlaneseq
        %v1807 = vshrl.u32 %v1806, 7
        %v1808 = vsub.s32 6, %v1807
        %v1809 = vrot.slane %v798, %v1808
        %v1810 = vlaneseq
        %v1811 = vshrl.u32 %v1810, 7
        %v1812 = vsub.s32 7, %v1811
        %v1813 = vrot.slane %v798, %v1812
        %v1814 = vlaneseq
        %v1815 = vshrl.u32 %v1814, 7
        %v1816 = vsub.s32 0, %v1815
        %v1817 = vrot.slane %v799, %v1816
        %v1818 = vlaneseq
        %v1819 = vshrl.u32 %v1818, 7
        %v1820 = vsub.s32 1, %v1819
        %v1821 = vrot.slane %v799, %v1820
        %v1822 = vlaneseq
        %v1823 = vshrl.u32 %v1822, 7
        %v1824 = vsub.s32 2, %v1823
        %v1825 = vrot.slane %v799, %v1824
        %v1826 = vlaneseq
        %v1827 = vshrl.u32 %v1826, 7
        %v1828 = vsub.s32 3, %v1827
        %v1829 = vrot.slane %v799, %v1828
        %v1830 = vlaneseq
        %v1831 = vshrl.u32 %v1830, 7
        %v1832 = vsub.s32 4, %v1831
        %v1833 = vrot.slane %v799, %v1832
        %v1834 = vlaneseq
        %v1835 = vshrl.u32 %v1834, 7
        %v1836 = vsub.s32 5, %v1835
        %v1837 = vrot.slane %v799, %v1836
        %v1838 = vlaneseq
        %v1839 = vshrl.u32 %v1838, 7
        %v1840 = vsub.s32 6, %v1839
        %v1841 = vrot.slane %v799, %v1840
        %v1842 = vlaneseq
        %v1843 = vshrl.u32 %v1842, 7
        %v1844 = vsub.s32 7, %v1843
        %v1845 = vrot.slane %v799, %v1844
        %v1846 = vlaneseq
        %v1847 = vshrl.u32 %v1846, 7
        %v1848 = vsub.s32 0, %v1847
        %v1849 = vrot.slane %v800, %v1848
        %v1850 = vlaneseq
        %v1851 = vshrl.u32 %v1850, 7
        %v1852 = vsub.s32 1, %v1851
        %v1853 = vrot.slane %v800, %v1852
        %v1854 = vlaneseq
        %v1855 = vshrl.u32 %v1854, 7
        %v1856 = vsub.s32 2, %v1855
        %v1857 = vrot.slane %v800, %v1856
        %v1858 = vlaneseq
        %v1859 = vshrl.u32 %v1858, 7
        %v1860 = vsub.s32 3, %v1859
        %v1861 = vrot.slane %v800, %v1860
        %v1862 = vlaneseq
        %v1863 = vshrl.u32 %v1862, 7
        %v1864 = vsub.s32 4, %v1863
        %v1865 = vrot.slane %v800, %v1864
        %v1866 = vlaneseq
        %v1867 = vshrl.u32 %v1866, 7
        %v1868 = vsub.s32 5, %v1867
        %v1869 = vrot.slane %v800, %v1868
        %v1870 = vlaneseq
        %v1871 = vshrl.u32 %v1870, 7
        %v1872 = vsub.s32 6, %v1871
        %v1873 = vrot.slane %v800, %v1872
        %v1874 = vlaneseq
        %v1875 = vshrl.u32 %v1874, 7
        %v1876 = vsub.s32 7, %v1875
        %v1877 = vrot.slane %v800, %v1876
        %v1878 = vlaneseq
        %v1879 = vshrl.u32 %v1878, 7
        %v1880 = vsub.s32 0, %v1879
        %v1881 = vrot.slane %v801, %v1880
        %v1882 = vlaneseq
        %v1883 = vshrl.u32 %v1882, 7
        %v1884 = vsub.s32 1, %v1883
        %v1885 = vrot.slane %v801, %v1884
        %v1886 = vlaneseq
        %v1887 = vshrl.u32 %v1886, 7
        %v1888 = vsub.s32 2, %v1887
        %v1889 = vrot.slane %v801, %v1888
        %v1890 = vlaneseq
        %v1891 = vshrl.u32 %v1890, 7
        %v1892 = vsub.s32 3, %v1891
        %v1893 = vrot.slane %v801, %v1892
        %v1894 = vlaneseq
        %v1895 = vshrl.u32 %v1894, 7
        %v1896 = vsub.s32 4, %v1895
        %v1897 = vrot.slane %v801, %v1896
        %v1898 = vlaneseq
        %v1899 = vshrl.u32 %v1898, 7
        %v1900 = vsub.s32 5, %v1899
        %v1901 = vrot.slane %v801, %v1900
        %v1902 = vlaneseq
        %v1903 = vshrl.u32 %v1902, 7
        %v1904 = vsub.s32 6, %v1903
        %v1905 = vrot.slane %v801, %v1904
        %v1906 = vlaneseq
        %v1907 = vshrl.u32 %v1906, 7
        %v1908 = vsub.s32 7, %v1907
        %v1909 = vrot.slane %v801, %v1908
        %v1910 = vlaneseq
        %v1911 = vshrl.u32 %v1910, 7
        %v1912 = vsub.s32 0, %v1911
        %v1913 = vrot.slane %v802, %v1912
        %v1914 = vlaneseq
        %v1915 = vshrl.u32 %v1914, 7
        %v1916 = vsub.s32 1, %v1915
        %v1917 = vrot.slane %v802, %v1916
        %v1918 = vlaneseq
        %v1919 = vshrl.u32 %v1918, 7
        %v1920 = vsub.s32 2, %v1919
        %v1921 = vrot.slane %v802, %v1920
        %v1922 = vlaneseq
        %v1923 = vshrl.u32 %v1922, 7
        %v1924 = vsub.s32 3, %v1923
        %v1925 = vrot.slane %v802, %v1924
        %v1926 = vlaneseq
        %v1927 = vshrl.u32 %v1926, 7
        %v1928 = vsub.s32 4, %v1927
        %v1929 = vrot.slane %v802, %v1928
        %v1930 = vlaneseq
        %v1931 = vshrl.u32 %v1930, 7
        %v1932 = vsub.s32 5, %v1931
        %v1933 = vrot.slane %v802, %v1932
        %v1934 = vlaneseq
        %v1935 = vshrl.u32 %v1934, 7
        %v1936 = vsub.s32 6, %v1935
        %v1937 = vrot.slane %v802, %v1936
        %v1938 = vlaneseq
        %v1939 = vshrl.u32 %v1938, 7
        %v1940 = vsub.s32 7, %v1939
        %v1941 = vrot.slane %v802, %v1940
        %v1942 = vlaneseq
        %v1943 = vshrl.u32 %v1942, 7
        %v1944 = vsub.s32 0, %v1943
        %v1945 = vrot.slane %v803, %v1944
        %v1946 = vlaneseq
        %v1947 = vshrl.u32 %v1946, 7
        %v1948 = vsub.s32 1, %v1947
        %v1949 = vrot.slane %v803, %v1948
        %v1950 = vlaneseq
        %v1951 = vshrl.u32 %v1950, 7
        %v1952 = vsub.s32 2, %v1951
        %v1953 = vrot.slane %v803, %v1952
        %v1954 = vlaneseq
        %v1955 = vshrl.u32 %v1954, 7
        %v1956 = vsub.s32 3, %v1955
        %v1957 = vrot.slane %v803, %v1956
        %v1958 = vlaneseq
        %v1959 = vshrl.u32 %v1958, 7
        %v1960 = vsub.s32 4, %v1959
        %v1961 = vrot.slane %v803, %v1960
        %v1962 = vlaneseq
        %v1963 = vshrl.u32 %v1962, 7
        %v1964 = vsub.s32 5, %v1963
        %v1965 = vrot.slane %v803, %v1964
        %v1966 = vlaneseq
        %v1967 = vshrl.u32 %v1966, 7
        %v1968 = vsub.s32 6, %v1967
        %v1969 = vrot.slane %v803, %v1968
        %v1970 = vlaneseq
        %v1971 = vshrl.u32 %v1970, 7
        %v1972 = vsub.s32 7, %v1971
        %v1973 = vrot.slane %v803, %v1972
        %v1974 = vlaneseq
        %v1975 = vshrl.u32 %v1974, 7
        %v1976 = vsub.s32 0, %v1975
        %v1977 = vrot.slane %v804, %v1976
        %v1978 = vlaneseq
        %v1979 = vshrl.u32 %v1978, 7
        %v1980 = vsub.s32 1, %v1979
        %v1981 = vrot.slane %v804, %v1980
        %v1982 = vlaneseq
        %v1983 = vshrl.u32 %v1982, 7
        %v1984 = vsub.s32 2, %v1983
        %v1985 = vrot.slane %v804, %v1984
        %v1986 = vlaneseq
        %v1987 = vshrl.u32 %v1986, 7
        %v1988 = vsub.s32 3, %v1987
        %v1989 = vrot.slane %v804, %v1988
        %v1990 = vlaneseq
        %v1991 = vshrl.u32 %v1990, 7
        %v1992 = vsub.s32 4, %v1991
        %v1993 = vrot.slane %v804, %v1992
        %v1994 = vlaneseq
        %v1995 = vshrl.u32 %v1994, 7
        %v1996 = vsub.s32 5, %v1995
        %v1997 = vrot.slane %v804, %v1996
        %v1998 = vlaneseq
        %v1999 = vshrl.u32 %v1998, 7
        %v2000 = vsub.s32 6, %v1999
        %v2001 = vrot.slane %v804, %v2000
        %v2002 = vlaneseq
        %v2003 = vshrl.u32 %v2002, 7
        %v2004 = vsub.s32 7, %v2003
        %v2005 = vrot.slane %v804, %v2004
        %v2006 = vlaneseq
        %v2007 = vshrl.u32 %v2006, 7
        %v2008 = vsub.s32 0, %v2007
        %v2009 = vrot.slane %v805, %v2008
        %v2010 = vlaneseq
        %v2011 = vshrl.u32 %v2010, 7
        %v2012 = vsub.s32 1, %v2011
        %v2013 = vrot.slane %v805, %v2012
        %v2014 = vlaneseq
        %v2015 = vshrl.u32 %v2014, 7
        %v2016 = vsub.s32 2, %v2015
        %v2017 = vrot.slane %v805, %v2016
        %v2018 = vlaneseq
        %v2019 = vshrl.u32 %v2018, 7
        %v2020 = vsub.s32 3, %v2019
        %v2021 = vrot.slane %v805, %v2020
        %v2022 = vlaneseq
        %v2023 = vshrl.u32 %v2022, 7
        %v2024 = vsub.s32 4, %v2023
        %v2025 = vrot.slane %v805, %v2024
        %v2026 = vlaneseq
        %v2027 = vshrl.u32 %v2026, 7
        %v2028 = vsub.s32 5, %v2027
        %v2029 = vrot.slane %v805, %v2028
        %v2030 = vlaneseq
        %v2031 = vshrl.u32 %v2030, 7
        %v2032 = vsub.s32 6, %v2031
        %v2033 = vrot.slane %v805, %v2032
        %v2034 = vlaneseq
        %v2035 = vshrl.u32 %v2034, 7
        %v2036 = vsub.s32 7, %v2035
        %v2037 = vrot.slane %v805, %v2036
        %v2038 = vlaneseq
        %v2039 = vshrl.u32 %v2038, 7
        %v2040 = vsub.s32 0, %v2039
        %v2041 = vrot.slane %v806, %v2040
        %v2042 = vlaneseq
        %v2043 = vshrl.u32 %v2042, 7
        %v2044 = vsub.s32 1, %v2043
        %v2045 = vrot.slane %v806, %v2044
        %v2046 = vlaneseq
        %v2047 = vshrl.u32 %v2046, 7
        %v2048 = vsub.s32 2, %v2047
        %v2049 = vrot.slane %v806, %v2048
        %v2050 = vlaneseq
        %v2051 = vshrl.u32 %v2050, 7
        %v2052 = vsub.s32 3, %v2051
        %v2053 = vrot.slane %v806, %v2052
        %v2054 = vlaneseq
        %v2055 = vshrl.u32 %v2054, 7
        %v2056 = vsub.s32 4, %v2055
        %v2057 = vrot.slane %v806, %v2056
        %v2058 = vlaneseq
        %v2059 = vshrl.u32 %v2058, 7
        %v2060 = vsub.s32 5, %v2059
        %v2061 = vrot.slane %v806, %v2060
        %v2062 = vlaneseq
        %v2063 = vshrl.u32 %v2062, 7
        %v2064 = vsub.s32 6, %v2063
        %v2065 = vrot.slane %v806, %v2064
        %v2066 = vlaneseq
        %v2067 = vshrl.u32 %v2066, 7
        %v2068 = vsub.s32 7, %v2067
        %v2069 = vrot.slane %v806, %v2068
        %v2070 = vlaneseq
        %v2071 = vshrl.u32 %v2070, 7
        %v2072 = vsub.s32 0, %v2071
        %v2073 = vrot.slane %v807, %v2072
        %v2074 = vlaneseq
        %v2075 = vshrl.u32 %v2074, 7
        %v2076 = vsub.s32 1, %v2075
        %v2077 = vrot.slane %v807, %v2076
        %v2078 = vlaneseq
        %v2079 = vshrl.u32 %v2078, 7
        %v2080 = vsub.s32 2, %v2079
        %v2081 = vrot.slane %v807, %v2080
        %v2082 = vlaneseq
        %v2083 = vshrl.u32 %v2082, 7
        %v2084 = vsub.s32 3, %v2083
        %v2085 = vrot.slane %v807, %v2084
        %v2086 = vlaneseq
        %v2087 = vshrl.u32 %v2086, 7
        %v2088 = vsub.s32 4, %v2087
        %v2089 = vrot.slane %v807, %v2088
        %v2090 = vlaneseq
        %v2091 = vshrl.u32 %v2090, 7
        %v2092 = vsub.s32 5, %v2091
        %v2093 = vrot.slane %v807, %v2092
        %v2094 = vlaneseq
        %v2095 = vshrl.u32 %v2094, 7
        %v2096 = vsub.s32 6, %v2095
        %v2097 = vrot.slane %v807, %v2096
        %v2098 = vlaneseq
        %v2099 = vshrl.u32 %v2098, 7
        %v2100 = vsub.s32 7, %v2099
        %v2101 = vrot.slane %v807, %v2100
        %v2102 = vlaneseq
        %v2103 = vshrl.u32 %v2102, 7
        %v2104 = vsub.s32 0, %v2103
        %v2105 = vrot.slane %v808, %v2104
        %v2106 = vlaneseq
        %v2107 = vshrl.u32 %v2106, 7
        %v2108 = vsub.s32 1, %v2107
        %v2109 = vrot.slane %v808, %v2108
        %v2110 = vlaneseq
        %v2111 = vshrl.u32 %v2110, 7
        %v2112 = vsub.s32 2, %v2111
        %v2113 = vrot.slane %v808, %v2112
        %v2114 = vlaneseq
        %v2115 = vshrl.u32 %v2114, 7
        %v2116 = vsub.s32 3, %v2115
        %v2117 = vrot.slane %v808, %v2116
        %v2118 = vlaneseq
        %v2119 = vshrl.u32 %v2118, 7
        %v2120 = vsub.s32 4, %v2119
        %v2121 = vrot.slane %v808, %v2120
        %v2122 = vlaneseq
        %v2123 = vshrl.u32 %v2122, 7
        %v2124 = vsub.s32 5, %v2123
        %v2125 = vrot.slane %v808, %v2124
        %v2126 = vlaneseq
        %v2127 = vshrl.u32 %v2126, 7
        %v2128 = vsub.s32 6, %v2127
        %v2129 = vrot.slane %v808, %v2128
        %v2130 = vlaneseq
        %v2131 = vshrl.u32 %v2130, 7
        %v2132 = vsub.s32 7, %v2131
        %v2133 = vrot.slane %v808, %v2132
        %v2134 = vlaneseq
        %v2135 = vshrl.u32 %v2134, 7
        %v2136 = vsub.s32 0, %v2135
        %v2137 = vrot.slane %v809, %v2136
        %v2138 = vlaneseq
        %v2139 = vshrl.u32 %v2138, 7
        %v2140 = vsub.s32 1, %v2139
        %v2141 = vrot.slane %v809, %v2140
        %v2142 = vlaneseq
        %v2143 = vshrl.u32 %v2142, 7
        %v2144 = vsub.s32 2, %v2143
        %v2145 = vrot.slane %v809, %v2144
        %v2146 = vlaneseq
        %v2147 = vshrl.u32 %v2146, 7
        %v2148 = vsub.s32 3, %v2147
        %v2149 = vrot.slane %v809, %v2148
        %v2150 = vlaneseq
        %v2151 = vshrl.u32 %v2150, 7
        %v2152 = vsub.s32 4, %v2151
        %v2153 = vrot.slane %v809, %v2152
        %v2154 = vlaneseq
        %v2155 = vshrl.u32 %v2154, 7
        %v2156 = vsub.s32 5, %v2155
        %v2157 = vrot.slane %v809, %v2156
        %v2158 = vlaneseq
        %v2159 = vshrl.u32 %v2158, 7
        %v2160 = vsub.s32 6, %v2159
        %v2161 = vrot.slane %v809, %v2160
        %v2162 = vlaneseq
        %v2163 = vshrl.u32 %v2162, 7
        %v2164 = vsub.s32 7, %v2163
        %v2165 = vrot.slane %v809, %v2164
        %vm2262 = vcmask 261120
        %v2264 = vsel %vm2262, %v605, 0
        %2266 = vmatprep.subr.bf16.mxu0 %v1387
        %2267 = vmatpush1.bf16.msra.mxu0 %v1386
        %2268 = vmatprep.subr.bf16.mxu0 %v1483
        %2269 = vmatpush1.bf16.msra.mxu0 %v1482
        %2270 = vmatprep.subr.bf16.mxu0 0
        %2271 = vmatpush1.bf16.msra.mxu0 0
        %2272 = vmatprep.subr.bf16.mxu0 0
        %2273 = vmatpush1.bf16.msra.mxu0 0
        %2274 = vmatprep.subr.bf16.mxu0 0
        %2275 = vmatpush1.bf16.msra.mxu0 0
        %2276 = vmatprep.subr.bf16.mxu0 0
        %2277 = vmatpush1.bf16.msra.mxu0 0
        %2278 = vmatprep.subr.bf16.mxu0 0
        %2279 = vmatpush1.bf16.msra.mxu0 0
        %2280 = vmatprep.subr.bf16.mxu0 0
        %2281 = vmatpush1.bf16.msra.mxu0 0
        %2282 = vmatprep.subr.bf16.mxu0 0
        %2283 = vmatpush1.bf16.msra.mxu0 0
        %2284 = vmatprep.subr.bf16.mxu0 0
        %2285 = vmatpush1.bf16.msra.mxu0 0
        %2286 = vmatprep.subr.bf16.mxu0 0
        %2287 = vmatpush1.bf16.msra.mxu0 0
        %2288 = vmatprep.subr.bf16.mxu0 0
        %2289 = vmatpush1.bf16.msra.mxu0 0
        %2290 = vmatprep.subr.bf16.mxu0 0
        %2291 = vmatpush1.bf16.msra.mxu0 0
        %2292 = vmatprep.subr.bf16.mxu0 0
        %2293 = vmatpush1.bf16.msra.mxu0 0
        %2294 = vmatprep.subr.bf16.mxu0 0
        %2295 = vmatpush1.bf16.msra.mxu0 0
        %2296 = vmatprep.subr.bf16.mxu0 0
        %2297 = vmatpush1.bf16.msra.mxu0 0
        %2298 = vmatprep.mubr.bf16.mxu0 0
        %2299 = vmatmul.mubr.bf16.gmra.mrb[0].mxu0 %v2264
        %v2300 = vpop.f32.mrb[0].mxu0
        %v2301 = vadd.f32 %v1785, %v2300
        %v2302 = vpop.f32.mrb[0].mxu0
        %v2303 = vadd.f32 %v1789, %v2302
        %v2304 = vpop.f32.mrb[0].mxu0
        %v2305 = vpop.f32.mrb[0].mxu0
        %2306 = vdwg.mxu0
        %2307 = vmatprep.subr.bf16.mxu0 %v1389
        %2308 = vmatpush1.bf16.msra.mxu0 %v1388
        %2309 = vmatprep.subr.bf16.mxu0 %v1485
        %2310 = vmatpush1.bf16.msra.mxu0 %v1484
        %2311 = vmatprep.subr.bf16.mxu0 0
        %2312 = vmatpush1.bf16.msra.mxu0 0
        %2313 = vmatprep.subr.bf16.mxu0 0
        %2314 = vmatpush1.bf16.msra.mxu0 0
        %2315 = vmatprep.subr.bf16.mxu0 0
        %2316 = vmatpush1.bf16.msra.mxu0 0
        %2317 = vmatprep.subr.bf16.mxu0 0
        %2318 = vmatpush1.bf16.msra.mxu0 0
        %2319 = vmatprep.subr.bf16.mxu0 0
        %2320 = vmatpush1.bf16.msra.mxu0 0
        %2321 = vmatprep.subr.bf16.mxu0 0
        %2322 = vmatpush1.bf16.msra.mxu0 0
        %2323 = vmatprep.subr.bf16.mxu0 0
        %2324 = vmatpush1.bf16.msra.mxu0 0
        %2325 = vmatprep.subr.bf16.mxu0 0
        %2326 = vmatpush1.bf16.msra.mxu0 0
        %2327 = vmatprep.subr.bf16.mxu0 0
        %2328 = vmatpush1.bf16.msra.mxu0 0
        %2329 = vmatprep.subr.bf16.mxu0 0
        %2330 = vmatpush1.bf16.msra.mxu0 0
        %2331 = vmatprep.subr.bf16.mxu0 0
        %2332 = vmatpush1.bf16.msra.mxu0 0
        %2333 = vmatprep.subr.bf16.mxu0 0
        %2334 = vmatpush1.bf16.msra.mxu0 0
        %2335 = vmatprep.subr.bf16.mxu0 0
        %2336 = vmatpush1.bf16.msra.mxu0 0
        %2337 = vmatprep.subr.bf16.mxu0 0
        %2338 = vmatpush1.bf16.msra.mxu0 0
        %2339 = vmatprep.mubr.bf16.mxu0 0
        %2340 = vmatmul.mubr.bf16.gmra.mrb[0].mxu0 %v2264
        %v2341 = vpop.f32.mrb[0].mxu0
        %v2342 = vadd.f32 %v1793, %v2341
        %v2343 = vpop.f32.mrb[0].mxu0
        %v2344 = vadd.f32 %v1797, %v2343
        %v2345 = vpop.f32.mrb[0].mxu0
        %v2346 = vpop.f32.mrb[0].mxu0
        %2347 = vdwg.mxu0
        %2348 = vmatprep.subr.bf16.mxu0 %v1391
        %2349 = vmatpush1.bf16.msra.mxu0 %v1390
        %2350 = vmatprep.subr.bf16.mxu0 %v1487
        %2351 = vmatpush1.bf16.msra.mxu0 %v1486
        %2352 = vmatprep.subr.bf16.mxu0 0
        %2353 = vmatpush1.bf16.msra.mxu0 0
        %2354 = vmatprep.subr.bf16.mxu0 0
        %2355 = vmatpush1.bf16.msra.mxu0 0
        %2356 = vmatprep.subr.bf16.mxu0 0
        %2357 = vmatpush1.bf16.msra.mxu0 0
        %2358 = vmatprep.subr.bf16.mxu0 0
        %2359 = vmatpush1.bf16.msra.mxu0 0
        %2360 = vmatprep.subr.bf16.mxu0 0
        %2361 = vmatpush1.bf16.msra.mxu0 0
        %2362 = vmatprep.subr.bf16.mxu0 0
        %2363 = vmatpush1.bf16.msra.mxu0 0
        %2364 = vmatprep.subr.bf16.mxu0 0
        %2365 = vmatpush1.bf16.msra.mxu0 0
        %2366 = vmatprep.subr.bf16.mxu0 0
        %2367 = vmatpush1.bf16.msra.mxu0 0
        %2368 = vmatprep.subr.bf16.mxu0 0
        %2369 = vmatpush1.bf16.msra.mxu0 0
        %2370 = vmatprep.subr.bf16.mxu0 0
        %2371 = vmatpush1.bf16.msra.mxu0 0
        %2372 = vmatprep.subr.bf16.mxu0 0
        %2373 = vmatpush1.bf16.msra.mxu0 0
        %2374 = vmatprep.subr.bf16.mxu0 0
        %2375 = vmatpush1.bf16.msra.mxu0 0
        %2376 = vmatprep.subr.bf16.mxu0 0
        %2377 = vmatpush1.bf16.msra.mxu0 0
        %2378 = vmatprep.subr.bf16.mxu0 0
        %2379 = vmatpush1.bf16.msra.mxu0 0
        %2380 = vmatprep.mubr.bf16.mxu0 0
        %2381 = vmatmul.mubr.bf16.gmra.mrb[0].mxu0 %v2264
        %v2382 = vpop.f32.mrb[0].mxu0
        %v2383 = vadd.f32 %v1801, %v2382
        %v2384 = vpop.f32.mrb[0].mxu0
        %v2385 = vadd.f32 %v1805, %v2384
        %v2386 = vpop.f32.mrb[0].mxu0
        %v2387 = vpop.f32.mrb[0].mxu0
        %2388 = vdwg.mxu0
        %2389 = vmatprep.subr.bf16.mxu0 %v1393
        %2390 = vmatpush1.bf16.msra.mxu0 %v1392
        %2391 = vmatprep.subr.bf16.mxu0 %v1489
        %2392 = vmatpush1.bf16.msra.mxu0 %v1488
        %2393 = vmatprep.subr.bf16.mxu0 0
        %2394 = vmatpush1.bf16.msra.mxu0 0
        %2395 = vmatprep.subr.bf16.mxu0 0
        %2396 = vmatpush1.bf16.msra.mxu0 0
        %2397 = vmatprep.subr.bf16.mxu0 0
        %2398 = vmatpush1.bf16.msra.mxu0 0
        %2399 = vmatprep.subr.bf16.mxu0 0
        %2400 = vmatpush1.bf16.msra.mxu0 0
        %2401 = vmatprep.subr.bf16.mxu0 0
        %2402 = vmatpush1.bf16.msra.mxu0 0
        %2403 = vmatprep.subr.bf16.mxu0 0
        %2404 = vmatpush1.bf16.msra.mxu0 0
        %2405 = vmatprep.subr.bf16.mxu0 0
        %2406 = vmatpush1.bf16.msra.mxu0 0
        %2407 = vmatprep.subr.bf16.mxu0 0
        %2408 = vmatpush1.bf16.msra.mxu0 0
        %2409 = vmatprep.subr.bf16.mxu0 0
        %2410 = vmatpush1.bf16.msra.mxu0 0
        %2411 = vmatprep.subr.bf16.mxu0 0
        %2412 = vmatpush1.bf16.msra.mxu0 0
        %2413 = vmatprep.subr.bf16.mxu0 0
        %2414 = vmatpush1.bf16.msra.mxu0 0
        %2415 = vmatprep.subr.bf16.mxu0 0
        %2416 = vmatpush1.bf16.msra.mxu0 0
        %2417 = vmatprep.subr.bf16.mxu0 0
        %2418 = vmatpush1.bf16.msra.mxu0 0
        %2419 = vmatprep.subr.bf16.mxu0 0
        %2420 = vmatpush1.bf16.msra.mxu0 0
        %2421 = vmatprep.mubr.bf16.mxu0 0
        %2422 = vmatmul.mubr.bf16.gmra.mrb[0].mxu0 %v2264
        %v2423 = vpop.f32.mrb[0].mxu0
        %v2424 = vadd.f32 %v1809, %v2423
        %v2425 = vpop.f32.mrb[0].mxu0
        %v2426 = vadd.f32 %v1813, %v2425
        %v2427 = vpop.f32.mrb[0].mxu0
        %v2428 = vpop.f32.mrb[0].mxu0
        %2429 = vdwg.mxu0
        %2430 = vmatprep.subr.bf16.mxu0 %v1395
        %2431 = vmatpush1.bf16.msra.mxu0 %v1394
        %2432 = vmatprep.subr.bf16.mxu0 %v1491
        %2433 = vmatpush1.bf16.msra.mxu0 %v1490
        %2434 = vmatprep.subr.bf16.mxu0 0
        %2435 = vmatpush1.bf16.msra.mxu0 0
        %2436 = vmatprep.subr.bf16.mxu0 0
        %2437 = vmatpush1.bf16.msra.mxu0 0
        %2438 = vmatprep.subr.bf16.mxu0 0
        %2439 = vmatpush1.bf16.msra.mxu0 0
        %2440 = vmatprep.subr.bf16.mxu0 0
        %2441 = vmatpush1.bf16.msra.mxu0 0
        %2442 = vmatprep.subr.bf16.mxu0 0
        %2443 = vmatpush1.bf16.msra.mxu0 0
        %2444 = vmatprep.subr.bf16.mxu0 0
        %2445 = vmatpush1.bf16.msra.mxu0 0
        %2446 = vmatprep.subr.bf16.mxu0 0
        %2447 = vmatpush1.bf16.msra.mxu0 0
        %2448 = vmatprep.subr.bf16.mxu0 0
        %2449 = vmatpush1.bf16.msra.mxu0 0
        %2450 = vmatprep.subr.bf16.mxu0 0
        %2451 = vmatpush1.bf16.msra.mxu0 0
        %2452 = vmatprep.subr.bf16.mxu0 0
        %2453 = vmatpush1.bf16.msra.mxu0 0
        %2454 = vmatprep.subr.bf16.mxu0 0
        %2455 = vmatpush1.bf16.msra.mxu0 0
        %2456 = vmatprep.subr.bf16.mxu0 0
        %2457 = vmatpush1.bf16.msra.mxu0 0
        %2458 = vmatprep.subr.bf16.mxu0 0
        %2459 = vmatpush1.bf16.msra.mxu0 0
        %2460 = vmatprep.subr.bf16.mxu0 0
        %2461 = vmatpush1.bf16.msra.mxu0 0
        %2462 = vmatprep.mubr.bf16.mxu0 0
        %2463 = vmatmul.mubr.bf16.gmra.mrb[0].mxu0 %v2264
        %v2464 = vpop.f32.mrb[0].mxu0
        %v2465 = vadd.f32 %v1817, %v2464
        %v2466 = vpop.f32.mrb[0].mxu0
        %v2467 = vadd.f32 %v1821, %v2466
        %v2468 = vpop.f32.mrb[0].mxu0
        %v2469 = vpop.f32.mrb[0].mxu0
        %2470 = vdwg.mxu0
        %2471 = vmatprep.subr.bf16.mxu0 %v1397
        %2472 = vmatpush1.bf16.msra.mxu0 %v1396
        %2473 = vmatprep.subr.bf16.mxu0 %v1493
        %2474 = vmatpush1.bf16.msra.mxu0 %v1492
        %2475 = vmatprep.subr.bf16.mxu0 0
        %2476 = vmatpush1.bf16.msra.mxu0 0
        %2477 = vmatprep.subr.bf16.mxu0 0
        %2478 = vmatpush1.bf16.msra.mxu0 0
        %2479 = vmatprep.subr.bf16.mxu0 0
        %2480 = vmatpush1.bf16.msra.mxu0 0
        %2481 = vmatprep.subr.bf16.mxu0 0
        %2482 = vmatpush1.bf16.msra.mxu0 0
        %2483 = vmatprep.subr.bf16.mxu0 0
        %2484 = vmatpush1.bf16.msra.mxu0 0
        %2485 = vmatprep.subr.bf16.mxu0 0
        %2486 = vmatpush1.bf16.msra.mxu0 0
        %2487 = vmatprep.subr.bf16.mxu0 0
        %2488 = vmatpush1.bf16.msra.mxu0 0
        %2489 = vmatprep.subr.bf16.mxu0 0
        %2490 = vmatpush1.bf16.msra.mxu0 0
        %2491 = vmatprep.subr.bf16.mxu0 0
        %2492 = vmatpush1.bf16.msra.mxu0 0
        %2493 = vmatprep.subr.bf16.mxu0 0
        %2494 = vmatpush1.bf16.msra.mxu0 0
        %2495 = vmatprep.subr.bf16.mxu0 0
        %2496 = vmatpush1.bf16.msra.mxu0 0
        %2497 = vmatprep.subr.bf16.mxu0 0
        %2498 = vmatpush1.bf16.msra.mxu0 0
        %2499 = vmatprep.subr.bf16.mxu0 0
        %2500 = vmatpush1.bf16.msra.mxu0 0
        %2501 = vmatprep.subr.bf16.mxu0 0
        %2502 = vmatpush1.bf16.msra.mxu0 0
        %2503 = vmatprep.mubr.bf16.mxu0 0
        %2504 = vmatmul.mubr.bf16.gmra.mrb[0].mxu0 %v2264
        %v2505 = vpop.f32.mrb[0].mxu0
        %v2506 = vadd.f32 %v1825, %v2505
        %v2507 = vpop.f32.mrb[0].mxu0
        %v2508 = vadd.f32 %v1829, %v2507
        %v2509 = vpop.f32.mrb[0].mxu0
        %v2510 = vpop.f32.mrb[0].mxu0
        %2511 = vdwg.mxu0
        %2512 = vmatprep.subr.bf16.mxu0 %v1399
        %2513 = vmatpush1.bf16.msra.mxu0 %v1398
        %2514 = vmatprep.subr.bf16.mxu0 %v1495
        %2515 = vmatpush1.bf16.msra.mxu0 %v1494
        %2516 = vmatprep.subr.bf16.mxu0 0
        %2517 = vmatpush1.bf16.msra.mxu0 0
        %2518 = vmatprep.subr.bf16.mxu0 0
        %2519 = vmatpush1.bf16.msra.mxu0 0
        %2520 = vmatprep.subr.bf16.mxu0 0
        %2521 = vmatpush1.bf16.msra.mxu0 0
        %2522 = vmatprep.subr.bf16.mxu0 0
        %2523 = vmatpush1.bf16.msra.mxu0 0
        %2524 = vmatprep.subr.bf16.mxu0 0
        %2525 = vmatpush1.bf16.msra.mxu0 0
        %2526 = vmatprep.subr.bf16.mxu0 0
        %2527 = vmatpush1.bf16.msra.mxu0 0
        %2528 = vmatprep.subr.bf16.mxu0 0
        %2529 = vmatpush1.bf16.msra.mxu0 0
        %2530 = vmatprep.subr.bf16.mxu0 0
        %2531 = vmatpush1.bf16.msra.mxu0 0
        %2532 = vmatprep.subr.bf16.mxu0 0
        %2533 = vmatpush1.bf16.msra.mxu0 0
        %2534 = vmatprep.subr.bf16.mxu0 0
        %2535 = vmatpush1.bf16.msra.mxu0 0
        %2536 = vmatprep.subr.bf16.mxu0 0
        %2537 = vmatpush1.bf16.msra.mxu0 0
        %2538 = vmatprep.subr.bf16.mxu0 0
        %2539 = vmatpush1.bf16.msra.mxu0 0
        %2540 = vmatprep.subr.bf16.mxu0 0
        %2541 = vmatpush1.bf16.msra.mxu0 0
        %2542 = vmatprep.subr.bf16.mxu0 0
        %2543 = vmatpush1.bf16.msra.mxu0 0
        %2544 = vmatprep.mubr.bf16.mxu0 0
        %2545 = vmatmul.mubr.bf16.gmra.mrb[0].mxu0 %v2264
        %v2546 = vpop.f32.mrb[0].mxu0
        %v2547 = vadd.f32 %v1833, %v2546
        %v2548 = vpop.f32.mrb[0].mxu0
        %v2549 = vadd.f32 %v1837, %v2548
        %v2550 = vpop.f32.mrb[0].mxu0
        %v2551 = vpop.f32.mrb[0].mxu0
        %2552 = vdwg.mxu0
        %2553 = vmatprep.subr.bf16.mxu0 %v1401
        %2554 = vmatpush1.bf16.msra.mxu0 %v1400
        %2555 = vmatprep.subr.bf16.mxu0 %v1497
        %2556 = vmatpush1.bf16.msra.mxu0 %v1496
        %2557 = vmatprep.subr.bf16.mxu0 0
        %2558 = vmatpush1.bf16.msra.mxu0 0
        %2559 = vmatprep.subr.bf16.mxu0 0
        %2560 = vmatpush1.bf16.msra.mxu0 0
        %2561 = vmatprep.subr.bf16.mxu0 0
        %2562 = vmatpush1.bf16.msra.mxu0 0
        %2563 = vmatprep.subr.bf16.mxu0 0
        %2564 = vmatpush1.bf16.msra.mxu0 0
        %2565 = vmatprep.subr.bf16.mxu0 0
        %2566 = vmatpush1.bf16.msra.mxu0 0
        %2567 = vmatprep.subr.bf16.mxu0 0
        %2568 = vmatpush1.bf16.msra.mxu0 0
        %2569 = vmatprep.subr.bf16.mxu0 0
        %2570 = vmatpush1.bf16.msra.mxu0 0
        %2571 = vmatprep.subr.bf16.mxu0 0
        %2572 = vmatpush1.bf16.msra.mxu0 0
        %2573 = vmatprep.subr.bf16.mxu0 0
        %2574 = vmatpush1.bf16.msra.mxu0 0
        %2575 = vmatprep.subr.bf16.mxu0 0
        %2576 = vmatpush1.bf16.msra.mxu0 0
        %2577 = vmatprep.subr.bf16.mxu0 0
        %2578 = vmatpush1.bf16.msra.mxu0 0
        %2579 = vmatprep.subr.bf16.mxu0 0
        %2580 = vmatpush1.bf16.msra.mxu0 0
        %2581 = vmatprep.subr.bf16.mxu0 0
        %2582 = vmatpush1.bf16.msra.mxu0 0
        %2583 = vmatprep.subr.bf16.mxu0 0
        %2584 = vmatpush1.bf16.msra.mxu0 0
        %2585 = vmatprep.mubr.bf16.mxu0 0
        %2586 = vmatmul.mubr.bf16.gmra.mrb[0].mxu0 %v2264
        %v2587 = vpop.f32.mrb[0].mxu0
        %v2588 = vadd.f32 %v1841, %v2587
        %v2589 = vpop.f32.mrb[0].mxu0
        %v2590 = vadd.f32 %v1845, %v2589
        %v2591 = vpop.f32.mrb[0].mxu0
        %v2592 = vpop.f32.mrb[0].mxu0
        %2593 = vdwg.mxu0
        %2594 = vmatprep.subr.bf16.mxu0 %v1403
        %2595 = vmatpush1.bf16.msra.mxu0 %v1402
        %2596 = vmatprep.subr.bf16.mxu0 %v1499
        %2597 = vmatpush1.bf16.msra.mxu0 %v1498
        %2598 = vmatprep.subr.bf16.mxu0 0
        %2599 = vmatpush1.bf16.msra.mxu0 0
        %2600 = vmatprep.subr.bf16.mxu0 0
        %2601 = vmatpush1.bf16.msra.mxu0 0
        %2602 = vmatprep.subr.bf16.mxu0 0
        %2603 = vmatpush1.bf16.msra.mxu0 0
        %2604 = vmatprep.subr.bf16.mxu0 0
        %2605 = vmatpush1.bf16.msra.mxu0 0
        %2606 = vmatprep.subr.bf16.mxu0 0
        %2607 = vmatpush1.bf16.msra.mxu0 0
        %2608 = vmatprep.subr.bf16.mxu0 0
        %2609 = vmatpush1.bf16.msra.mxu0 0
        %2610 = vmatprep.subr.bf16.mxu0 0
        %2611 = vmatpush1.bf16.msra.mxu0 0
        %2612 = vmatprep.subr.bf16.mxu0 0
        %2613 = vmatpush1.bf16.msra.mxu0 0
        %2614 = vmatprep.subr.bf16.mxu0 0
        %2615 = vmatpush1.bf16.msra.mxu0 0
        %2616 = vmatprep.subr.bf16.mxu0 0
        %2617 = vmatpush1.bf16.msra.mxu0 0
        %2618 = vmatprep.subr.bf16.mxu0 0
        %2619 = vmatpush1.bf16.msra.mxu0 0
        %2620 = vmatprep.subr.bf16.mxu0 0
        %2621 = vmatpush1.bf16.msra.mxu0 0
        %2622 = vmatprep.subr.bf16.mxu0 0
        %2623 = vmatpush1.bf16.msra.mxu0 0
        %2624 = vmatprep.subr.bf16.mxu0 0
        %2625 = vmatpush1.bf16.msra.mxu0 0
        %2626 = vmatprep.mubr.bf16.mxu0 0
        %2627 = vmatmul.mubr.bf16.gmra.mrb[0].mxu0 %v2264
        %v2628 = vpop.f32.mrb[0].mxu0
        %v2629 = vadd.f32 %v1849, %v2628
        %v2630 = vpop.f32.mrb[0].mxu0
        %v2631 = vadd.f32 %v1853, %v2630
        %v2632 = vpop.f32.mrb[0].mxu0
        %v2633 = vpop.f32.mrb[0].mxu0
        %2634 = vdwg.mxu0
        %2635 = vmatprep.subr.bf16.mxu0 %v1405
        %2636 = vmatpush1.bf16.msra.mxu0 %v1404
        %2637 = vmatprep.subr.bf16.mxu0 %v1501
        %2638 = vmatpush1.bf16.msra.mxu0 %v1500
        %2639 = vmatprep.subr.bf16.mxu0 0
        %2640 = vmatpush1.bf16.msra.mxu0 0
        %2641 = vmatprep.subr.bf16.mxu0 0
        %2642 = vmatpush1.bf16.msra.mxu0 0
        %2643 = vmatprep.subr.bf16.mxu0 0
        %2644 = vmatpush1.bf16.msra.mxu0 0
        %2645 = vmatprep.subr.bf16.mxu0 0
        %2646 = vmatpush1.bf16.msra.mxu0 0
        %2647 = vmatprep.subr.bf16.mxu0 0
        %2648 = vmatpush1.bf16.msra.mxu0 0
        %2649 = vmatprep.subr.bf16.mxu0 0
        %2650 = vmatpush1.bf16.msra.mxu0 0
        %2651 = vmatprep.subr.bf16.mxu0 0
        %2652 = vmatpush1.bf16.msra.mxu0 0
        %2653 = vmatprep.subr.bf16.mxu0 0
        %2654 = vmatpush1.bf16.msra.mxu0 0
        %2655 = vmatprep.subr.bf16.mxu0 0
        %2656 = vmatpush1.bf16.msra.mxu0 0
        %2657 = vmatprep.subr.bf16.mxu0 0
        %2658 = vmatpush1.bf16.msra.mxu0 0
        %2659 = vmatprep.subr.bf16.mxu0 0
        %2660 = vmatpush1.bf16.msra.mxu0 0
        %2661 = vmatprep.subr.bf16.mxu0 0
        %2662 = vmatpush1.bf16.msra.mxu0 0
        %2663 = vmatprep.subr.bf16.mxu0 0
        %2664 = vmatpush1.bf16.msra.mxu0 0
        %2665 = vmatprep.subr.bf16.mxu0 0
        %2666 = vmatpush1.bf16.msra.mxu0 0
        %2667 = vmatprep.mubr.bf16.mxu0 0
        %2668 = vmatmul.mubr.bf16.gmra.mrb[0].mxu0 %v2264
        %v2669 = vpop.f32.mrb[0].mxu0
        %v2670 = vadd.f32 %v1857, %v2669
        %v2671 = vpop.f32.mrb[0].mxu0
        %v2672 = vadd.f32 %v1861, %v2671
        %v2673 = vpop.f32.mrb[0].mxu0
        %v2674 = vpop.f32.mrb[0].mxu0
        %2675 = vdwg.mxu0
        %2676 = vmatprep.subr.bf16.mxu0 %v1407
        %2677 = vmatpush1.bf16.msra.mxu0 %v1406
        %2678 = vmatprep.subr.bf16.mxu0 %v1503
        %2679 = vmatpush1.bf16.msra.mxu0 %v1502
        %2680 = vmatprep.subr.bf16.mxu0 0
        %2681 = vmatpush1.bf16.msra.mxu0 0
        %2682 = vmatprep.subr.bf16.mxu0 0
        %2683 = vmatpush1.bf16.msra.mxu0 0
        %2684 = vmatprep.subr.bf16.mxu0 0
        %2685 = vmatpush1.bf16.msra.mxu0 0
        %2686 = vmatprep.subr.bf16.mxu0 0
        %2687 = vmatpush1.bf16.msra.mxu0 0
        %2688 = vmatprep.subr.bf16.mxu0 0
        %2689 = vmatpush1.bf16.msra.mxu0 0
        %2690 = vmatprep.subr.bf16.mxu0 0
        %2691 = vmatpush1.bf16.msra.mxu0 0
        %2692 = vmatprep.subr.bf16.mxu0 0
        %2693 = vmatpush1.bf16.msra.mxu0 0
        %2694 = vmatprep.subr.bf16.mxu0 0
        %2695 = vmatpush1.bf16.msra.mxu0 0
        %2696 = vmatprep.subr.bf16.mxu0 0
        %2697 = vmatpush1.bf16.msra.mxu0 0
        %2698 = vmatprep.subr.bf16.mxu0 0
        %2699 = vmatpush1.bf16.msra.mxu0 0
        %2700 = vmatprep.subr.bf16.mxu0 0
        %2701 = vmatpush1.bf16.msra.mxu0 0
        %2702 = vmatprep.subr.bf16.mxu0 0
        %2703 = vmatpush1.bf16.msra.mxu0 0
        %2704 = vmatprep.subr.bf16.mxu0 0
        %2705 = vmatpush1.bf16.msra.mxu0 0
        %2706 = vmatprep.subr.bf16.mxu0 0
        %2707 = vmatpush1.bf16.msra.mxu0 0
        %2708 = vmatprep.mubr.bf16.mxu0 0
        %2709 = vmatmul.mubr.bf16.gmra.mrb[0].mxu0 %v2264
        %v2710 = vpop.f32.mrb[0].mxu0
        %v2711 = vadd.f32 %v1865, %v2710
        %v2712 = vpop.f32.mrb[0].mxu0
        %v2713 = vadd.f32 %v1869, %v2712
        %v2714 = vpop.f32.mrb[0].mxu0
        %v2715 = vpop.f32.mrb[0].mxu0
        %2716 = vdwg.mxu0
        %2717 = vmatprep.subr.bf16.mxu0 %v1409
        %2718 = vmatpush1.bf16.msra.mxu0 %v1408
        %2719 = vmatprep.subr.bf16.mxu0 %v1505
        %2720 = vmatpush1.bf16.msra.mxu0 %v1504
        %2721 = vmatprep.subr.bf16.mxu0 0
        %2722 = vmatpush1.bf16.msra.mxu0 0
        %2723 = vmatprep.subr.bf16.mxu0 0
        %2724 = vmatpush1.bf16.msra.mxu0 0
        %2725 = vmatprep.subr.bf16.mxu0 0
        %2726 = vmatpush1.bf16.msra.mxu0 0
        %2727 = vmatprep.subr.bf16.mxu0 0
        %2728 = vmatpush1.bf16.msra.mxu0 0
        %2729 = vmatprep.subr.bf16.mxu0 0
        %2730 = vmatpush1.bf16.msra.mxu0 0
        %2731 = vmatprep.subr.bf16.mxu0 0
        %2732 = vmatpush1.bf16.msra.mxu0 0
        %2733 = vmatprep.subr.bf16.mxu0 0
        %2734 = vmatpush1.bf16.msra.mxu0 0
        %2735 = vmatprep.subr.bf16.mxu0 0
        %2736 = vmatpush1.bf16.msra.mxu0 0
        %2737 = vmatprep.subr.bf16.mxu0 0
        %2738 = vmatpush1.bf16.msra.mxu0 0
        %2739 = vmatprep.subr.bf16.mxu0 0
        %2740 = vmatpush1.bf16.msra.mxu0 0
        %2741 = vmatprep.subr.bf16.mxu0 0
        %2742 = vmatpush1.bf16.msra.mxu0 0
        %2743 = vmatprep.subr.bf16.mxu0 0
        %2744 = vmatpush1.bf16.msra.mxu0 0
        %2745 = vmatprep.subr.bf16.mxu0 0
        %2746 = vmatpush1.bf16.msra.mxu0 0
        %2747 = vmatprep.subr.bf16.mxu0 0
        %2748 = vmatpush1.bf16.msra.mxu0 0
        %2749 = vmatprep.mubr.bf16.mxu0 0
        %2750 = vmatmul.mubr.bf16.gmra.mrb[0].mxu0 %v2264
        %v2751 = vpop.f32.mrb[0].mxu0
        %v2752 = vadd.f32 %v1873, %v2751
        %v2753 = vpop.f32.mrb[0].mxu0
        %v2754 = vadd.f32 %v1877, %v2753
        %v2755 = vpop.f32.mrb[0].mxu0
        %v2756 = vpop.f32.mrb[0].mxu0
        %2757 = vdwg.mxu0
        %2758 = vmatprep.subr.bf16.mxu0 %v1411
        %2759 = vmatpush1.bf16.msra.mxu0 %v1410
        %2760 = vmatprep.subr.bf16.mxu0 %v1507
        %2761 = vmatpush1.bf16.msra.mxu0 %v1506
        %2762 = vmatprep.subr.bf16.mxu0 0
        %2763 = vmatpush1.bf16.msra.mxu0 0
        %2764 = vmatprep.subr.bf16.mxu0 0
        %2765 = vmatpush1.bf16.msra.mxu0 0
        %2766 = vmatprep.subr.bf16.mxu0 0
        %2767 = vmatpush1.bf16.msra.mxu0 0
        %2768 = vmatprep.subr.bf16.mxu0 0
        %2769 = vmatpush1.bf16.msra.mxu0 0
        %2770 = vmatprep.subr.bf16.mxu0 0
        %2771 = vmatpush1.bf16.msra.mxu0 0
        %2772 = vmatprep.subr.bf16.mxu0 0
        %2773 = vmatpush1.bf16.msra.mxu0 0
        %2774 = vmatprep.subr.bf16.mxu0 0
        %2775 = vmatpush1.bf16.msra.mxu0 0
        %2776 = vmatprep.subr.bf16.mxu0 0
        %2777 = vmatpush1.bf16.msra.mxu0 0
        %2778 = vmatprep.subr.bf16.mxu0 0
        %2779 = vmatpush1.bf16.msra.mxu0 0
        %2780 = vmatprep.subr.bf16.mxu0 0
        %2781 = vmatpush1.bf16.msra.mxu0 0
        %2782 = vmatprep.subr.bf16.mxu0 0
        %2783 = vmatpush1.bf16.msra.mxu0 0
        %2784 = vmatprep.subr.bf16.mxu0 0
        %2785 = vmatpush1.bf16.msra.mxu0 0
        %2786 = vmatprep.subr.bf16.mxu0 0
        %2787 = vmatpush1.bf16.msra.mxu0 0
        %2788 = vmatprep.subr.bf16.mxu0 0
        %2789 = vmatpush1.bf16.msra.mxu0 0
        %2790 = vmatprep.mubr.bf16.mxu0 0
        %2791 = vmatmul.mubr.bf16.gmra.mrb[0].mxu0 %v2264
        %v2792 = vpop.f32.mrb[0].mxu0
        %v2793 = vadd.f32 %v1881, %v2792
        %v2794 = vpop.f32.mrb[0].mxu0
        %v2795 = vadd.f32 %v1885, %v2794
        %v2796 = vpop.f32.mrb[0].mxu0
        %v2797 = vpop.f32.mrb[0].mxu0
        %2798 = vdwg.mxu0
        %2799 = vmatprep.subr.bf16.mxu0 %v1413
        %2800 = vmatpush1.bf16.msra.mxu0 %v1412
        %2801 = vmatprep.subr.bf16.mxu0 %v1509
        %2802 = vmatpush1.bf16.msra.mxu0 %v1508
        %2803 = vmatprep.subr.bf16.mxu0 0
        %2804 = vmatpush1.bf16.msra.mxu0 0
        %2805 = vmatprep.subr.bf16.mxu0 0
        %2806 = vmatpush1.bf16.msra.mxu0 0
        %2807 = vmatprep.subr.bf16.mxu0 0
        %2808 = vmatpush1.bf16.msra.mxu0 0
        %2809 = vmatprep.subr.bf16.mxu0 0
        %2810 = vmatpush1.bf16.msra.mxu0 0
        %2811 = vmatprep.subr.bf16.mxu0 0
        %2812 = vmatpush1.bf16.msra.mxu0 0
        %2813 = vmatprep.subr.bf16.mxu0 0
        %2814 = vmatpush1.bf16.msra.mxu0 0
        %2815 = vmatprep.subr.bf16.mxu0 0
        %2816 = vmatpush1.bf16.msra.mxu0 0
        %2817 = vmatprep.subr.bf16.mxu0 0
        %2818 = vmatpush1.bf16.msra.mxu0 0
        %2819 = vmatprep.subr.bf16.mxu0 0
        %2820 = vmatpush1.bf16.msra.mxu0 0
        %2821 = vmatprep.subr.bf16.mxu0 0
        %2822 = vmatpush1.bf16.msra.mxu0 0
        %2823 = vmatprep.subr.bf16.mxu0 0
        %2824 = vmatpush1.bf16.msra.mxu0 0
        %2825 = vmatprep.subr.bf16.mxu0 0
        %2826 = vmatpush1.bf16.msra.mxu0 0
        %2827 = vmatprep.subr.bf16.mxu0 0
        %2828 = vmatpush1.bf16.msra.mxu0 0
        %2829 = vmatprep.subr.bf16.mxu0 0
        %2830 = vmatpush1.bf16.msra.mxu0 0
        %2831 = vmatprep.mubr.bf16.mxu0 0
        %2832 = vmatmul.mubr.bf16.gmra.mrb[0].mxu0 %v2264
        %v2833 = vpop.f32.mrb[0].mxu0
        %v2834 = vadd.f32 %v1889, %v2833
        %v2835 = vpop.f32.mrb[0].mxu0
        %v2836 = vadd.f32 %v1893, %v2835
        %v2837 = vpop.f32.mrb[0].mxu0
        %v2838 = vpop.f32.mrb[0].mxu0
        %2839 = vdwg.mxu0
        %2840 = vmatprep.subr.bf16.mxu0 %v1415
        %2841 = vmatpush1.bf16.msra.mxu0 %v1414
        %2842 = vmatprep.subr.bf16.mxu0 %v1511
        %2843 = vmatpush1.bf16.msra.mxu0 %v1510
        %2844 = vmatprep.subr.bf16.mxu0 0
        %2845 = vmatpush1.bf16.msra.mxu0 0
        %2846 = vmatprep.subr.bf16.mxu0 0
        %2847 = vmatpush1.bf16.msra.mxu0 0
        %2848 = vmatprep.subr.bf16.mxu0 0
        %2849 = vmatpush1.bf16.msra.mxu0 0
        %2850 = vmatprep.subr.bf16.mxu0 0
        %2851 = vmatpush1.bf16.msra.mxu0 0
        %2852 = vmatprep.subr.bf16.mxu0 0
        %2853 = vmatpush1.bf16.msra.mxu0 0
        %2854 = vmatprep.subr.bf16.mxu0 0
        %2855 = vmatpush1.bf16.msra.mxu0 0
        %2856 = vmatprep.subr.bf16.mxu0 0
        %2857 = vmatpush1.bf16.msra.mxu0 0
        %2858 = vmatprep.subr.bf16.mxu0 0
        %2859 = vmatpush1.bf16.msra.mxu0 0
        %2860 = vmatprep.subr.bf16.mxu0 0
        %2861 = vmatpush1.bf16.msra.mxu0 0
        %2862 = vmatprep.subr.bf16.mxu0 0
        %2863 = vmatpush1.bf16.msra.mxu0 0
        %2864 = vmatprep.subr.bf16.mxu0 0
        %2865 = vmatpush1.bf16.msra.mxu0 0
        %2866 = vmatprep.subr.bf16.mxu0 0
        %2867 = vmatpush1.bf16.msra.mxu0 0
        %2868 = vmatprep.subr.bf16.mxu0 0
        %2869 = vmatpush1.bf16.msra.mxu0 0
        %2870 = vmatprep.subr.bf16.mxu0 0
        %2871 = vmatpush1.bf16.msra.mxu0 0
        %2872 = vmatprep.mubr.bf16.mxu0 0
        %2873 = vmatmul.mubr.bf16.gmra.mrb[0].mxu0 %v2264
        %v2874 = vpop.f32.mrb[0].mxu0
        %v2875 = vadd.f32 %v1897, %v2874
        %v2876 = vpop.f32.mrb[0].mxu0
        %v2877 = vadd.f32 %v1901, %v2876
        %v2878 = vpop.f32.mrb[0].mxu0
        %v2879 = vpop.f32.mrb[0].mxu0
        %2880 = vdwg.mxu0
        %2881 = vmatprep.subr.bf16.mxu0 %v1417
        %2882 = vmatpush1.bf16.msra.mxu0 %v1416
        %2883 = vmatprep.subr.bf16.mxu0 %v1513
        %2884 = vmatpush1.bf16.msra.mxu0 %v1512
        %2885 = vmatprep.subr.bf16.mxu0 0
        %2886 = vmatpush1.bf16.msra.mxu0 0
        %2887 = vmatprep.subr.bf16.mxu0 0
        %2888 = vmatpush1.bf16.msra.mxu0 0
        %2889 = vmatprep.subr.bf16.mxu0 0
        %2890 = vmatpush1.bf16.msra.mxu0 0
        %2891 = vmatprep.subr.bf16.mxu0 0
        %2892 = vmatpush1.bf16.msra.mxu0 0
        %2893 = vmatprep.subr.bf16.mxu0 0
        %2894 = vmatpush1.bf16.msra.mxu0 0
        %2895 = vmatprep.subr.bf16.mxu0 0
        %2896 = vmatpush1.bf16.msra.mxu0 0
        %2897 = vmatprep.subr.bf16.mxu0 0
        %2898 = vmatpush1.bf16.msra.mxu0 0
        %2899 = vmatprep.subr.bf16.mxu0 0
        %2900 = vmatpush1.bf16.msra.mxu0 0
        %2901 = vmatprep.subr.bf16.mxu0 0
        %2902 = vmatpush1.bf16.msra.mxu0 0
        %2903 = vmatprep.subr.bf16.mxu0 0
        %2904 = vmatpush1.bf16.msra.mxu0 0
        %2905 = vmatprep.subr.bf16.mxu0 0
        %2906 = vmatpush1.bf16.msra.mxu0 0
        %2907 = vmatprep.subr.bf16.mxu0 0
        %2908 = vmatpush1.bf16.msra.mxu0 0
        %2909 = vmatprep.subr.bf16.mxu0 0
        %2910 = vmatpush1.bf16.msra.mxu0 0
        %2911 = vmatprep.subr.bf16.mxu0 0
        %2912 = vmatpush1.bf16.msra.mxu0 0
        %2913 = vmatprep.mubr.bf16.mxu0 0
        %2914 = vmatmul.mubr.bf16.gmra.mrb[0].mxu0 %v2264
        %v2915 = vpop.f32.mrb[0].mxu0
        %v2916 = vadd.f32 %v1905, %v2915
        %v2917 = vpop.f32.mrb[0].mxu0
        %v2918 = vadd.f32 %v1909, %v2917
        %v2919 = vpop.f32.mrb[0].mxu0
        %v2920 = vpop.f32.mrb[0].mxu0
        %2921 = vdwg.mxu0
        %2922 = vmatprep.subr.bf16.mxu0 %v1419
        %2923 = vmatpush1.bf16.msra.mxu0 %v1418
        %2924 = vmatprep.subr.bf16.mxu0 %v1515
        %2925 = vmatpush1.bf16.msra.mxu0 %v1514
        %2926 = vmatprep.subr.bf16.mxu0 0
        %2927 = vmatpush1.bf16.msra.mxu0 0
        %2928 = vmatprep.subr.bf16.mxu0 0
        %2929 = vmatpush1.bf16.msra.mxu0 0
        %2930 = vmatprep.subr.bf16.mxu0 0
        %2931 = vmatpush1.bf16.msra.mxu0 0
        %2932 = vmatprep.subr.bf16.mxu0 0
        %2933 = vmatpush1.bf16.msra.mxu0 0
        %2934 = vmatprep.subr.bf16.mxu0 0
        %2935 = vmatpush1.bf16.msra.mxu0 0
        %2936 = vmatprep.subr.bf16.mxu0 0
        %2937 = vmatpush1.bf16.msra.mxu0 0
        %2938 = vmatprep.subr.bf16.mxu0 0
        %2939 = vmatpush1.bf16.msra.mxu0 0
        %2940 = vmatprep.subr.bf16.mxu0 0
        %2941 = vmatpush1.bf16.msra.mxu0 0
        %2942 = vmatprep.subr.bf16.mxu0 0
        %2943 = vmatpush1.bf16.msra.mxu0 0
        %2944 = vmatprep.subr.bf16.mxu0 0
        %2945 = vmatpush1.bf16.msra.mxu0 0
        %2946 = vmatprep.subr.bf16.mxu0 0
        %2947 = vmatpush1.bf16.msra.mxu0 0
        %2948 = vmatprep.subr.bf16.mxu0 0
        %2949 = vmatpush1.bf16.msra.mxu0 0
        %2950 = vmatprep.subr.bf16.mxu0 0
        %2951 = vmatpush1.bf16.msra.mxu0 0
        %2952 = vmatprep.subr.bf16.mxu0 0
        %2953 = vmatpush1.bf16.msra.mxu0 0
        %2954 = vmatprep.mubr.bf16.mxu0 0
        %2955 = vmatmul.mubr.bf16.gmra.mrb[0].mxu0 %v2264
        %v2956 = vpop.f32.mrb[0].mxu0
        %v2957 = vadd.f32 %v1913, %v2956
        %v2958 = vpop.f32.mrb[0].mxu0
        %v2959 = vadd.f32 %v1917, %v2958
        %v2960 = vpop.f32.mrb[0].mxu0
        %v2961 = vpop.f32.mrb[0].mxu0
        %2962 = vdwg.mxu0
        %2963 = vmatprep.subr.bf16.mxu0 %v1421
        %2964 = vmatpush1.bf16.msra.mxu0 %v1420
        %2965 = vmatprep.subr.bf16.mxu0 %v1517
        %2966 = vmatpush1.bf16.msra.mxu0 %v1516
        %2967 = vmatprep.subr.bf16.mxu0 0
        %2968 = vmatpush1.bf16.msra.mxu0 0
        %2969 = vmatprep.subr.bf16.mxu0 0
        %2970 = vmatpush1.bf16.msra.mxu0 0
        %2971 = vmatprep.subr.bf16.mxu0 0
        %2972 = vmatpush1.bf16.msra.mxu0 0
        %2973 = vmatprep.subr.bf16.mxu0 0
        %2974 = vmatpush1.bf16.msra.mxu0 0
        %2975 = vmatprep.subr.bf16.mxu0 0
        %2976 = vmatpush1.bf16.msra.mxu0 0
        %2977 = vmatprep.subr.bf16.mxu0 0
        %2978 = vmatpush1.bf16.msra.mxu0 0
        %2979 = vmatprep.subr.bf16.mxu0 0
        %2980 = vmatpush1.bf16.msra.mxu0 0
        %2981 = vmatprep.subr.bf16.mxu0 0
        %2982 = vmatpush1.bf16.msra.mxu0 0
        %2983 = vmatprep.subr.bf16.mxu0 0
        %2984 = vmatpush1.bf16.msra.mxu0 0
        %2985 = vmatprep.subr.bf16.mxu0 0
        %2986 = vmatpush1.bf16.msra.mxu0 0
        %2987 = vmatprep.subr.bf16.mxu0 0
        %2988 = vmatpush1.bf16.msra.mxu0 0
        %2989 = vmatprep.subr.bf16.mxu0 0
        %2990 = vmatpush1.bf16.msra.mxu0 0
        %2991 = vmatprep.subr.bf16.mxu0 0
        %2992 = vmatpush1.bf16.msra.mxu0 0
        %2993 = vmatprep.subr.bf16.mxu0 0
        %2994 = vmatpush1.bf16.msra.mxu0 0
        %2995 = vmatprep.mubr.bf16.mxu0 0
        %2996 = vmatmul.mubr.bf16.gmra.mrb[0].mxu0 %v2264
        %v2997 = vpop.f32.mrb[0].mxu0
        %v2998 = vadd.f32 %v1921, %v2997
        %v2999 = vpop.f32.mrb[0].mxu0
        %v3000 = vadd.f32 %v1925, %v2999
        %v3001 = vpop.f32.mrb[0].mxu0
        %v3002 = vpop.f32.mrb[0].mxu0
        %3003 = vdwg.mxu0
        %3004 = vmatprep.subr.bf16.mxu0 %v1423
        %3005 = vmatpush1.bf16.msra.mxu0 %v1422
        %3006 = vmatprep.subr.bf16.mxu0 %v1519
        %3007 = vmatpush1.bf16.msra.mxu0 %v1518
        %3008 = vmatprep.subr.bf16.mxu0 0
        %3009 = vmatpush1.bf16.msra.mxu0 0
        %3010 = vmatprep.subr.bf16.mxu0 0
        %3011 = vmatpush1.bf16.msra.mxu0 0
        %3012 = vmatprep.subr.bf16.mxu0 0
        %3013 = vmatpush1.bf16.msra.mxu0 0
        %3014 = vmatprep.subr.bf16.mxu0 0
        %3015 = vmatpush1.bf16.msra.mxu0 0
        %3016 = vmatprep.subr.bf16.mxu0 0
        %3017 = vmatpush1.bf16.msra.mxu0 0
        %3018 = vmatprep.subr.bf16.mxu0 0
        %3019 = vmatpush1.bf16.msra.mxu0 0
        %3020 = vmatprep.subr.bf16.mxu0 0
        %3021 = vmatpush1.bf16.msra.mxu0 0
        %3022 = vmatprep.subr.bf16.mxu0 0
        %3023 = vmatpush1.bf16.msra.mxu0 0
        %3024 = vmatprep.subr.bf16.mxu0 0
        %3025 = vmatpush1.bf16.msra.mxu0 0
        %3026 = vmatprep.subr.bf16.mxu0 0
        %3027 = vmatpush1.bf16.msra.mxu0 0
        %3028 = vmatprep.subr.bf16.mxu0 0
        %3029 = vmatpush1.bf16.msra.mxu0 0
        %3030 = vmatprep.subr.bf16.mxu0 0
        %3031 = vmatpush1.bf16.msra.mxu0 0
        %3032 = vmatprep.subr.bf16.mxu0 0
        %3033 = vmatpush1.bf16.msra.mxu0 0
        %3034 = vmatprep.subr.bf16.mxu0 0
        %3035 = vmatpush1.bf16.msra.mxu0 0
        %3036 = vmatprep.mubr.bf16.mxu0 0
        %3037 = vmatmul.mubr.bf16.gmra.mrb[0].mxu0 %v2264
        %v3038 = vpop.f32.mrb[0].mxu0
        %v3039 = vadd.f32 %v1929, %v3038
        %v3040 = vpop.f32.mrb[0].mxu0
        %v3041 = vadd.f32 %v1933, %v3040
        %v3042 = vpop.f32.mrb[0].mxu0
        %v3043 = vpop.f32.mrb[0].mxu0
        %3044 = vdwg.mxu0
        %3045 = vmatprep.subr.bf16.mxu0 %v1425
        %3046 = vmatpush1.bf16.msra.mxu0 %v1424
        %3047 = vmatprep.subr.bf16.mxu0 %v1521
        %3048 = vmatpush1.bf16.msra.mxu0 %v1520
        %3049 = vmatprep.subr.bf16.mxu0 0
        %3050 = vmatpush1.bf16.msra.mxu0 0
        %3051 = vmatprep.subr.bf16.mxu0 0
        %3052 = vmatpush1.bf16.msra.mxu0 0
        %3053 = vmatprep.subr.bf16.mxu0 0
        %3054 = vmatpush1.bf16.msra.mxu0 0
        %3055 = vmatprep.subr.bf16.mxu0 0
        %3056 = vmatpush1.bf16.msra.mxu0 0
        %3057 = vmatprep.subr.bf16.mxu0 0
        %3058 = vmatpush1.bf16.msra.mxu0 0
        %3059 = vmatprep.subr.bf16.mxu0 0
        %3060 = vmatpush1.bf16.msra.mxu0 0
        %3061 = vmatprep.subr.bf16.mxu0 0
        %3062 = vmatpush1.bf16.msra.mxu0 0
        %3063 = vmatprep.subr.bf16.mxu0 0
        %3064 = vmatpush1.bf16.msra.mxu0 0
        %3065 = vmatprep.subr.bf16.mxu0 0
        %3066 = vmatpush1.bf16.msra.mxu0 0
        %3067 = vmatprep.subr.bf16.mxu0 0
        %3068 = vmatpush1.bf16.msra.mxu0 0
        %3069 = vmatprep.subr.bf16.mxu0 0
        %3070 = vmatpush1.bf16.msra.mxu0 0
        %3071 = vmatprep.subr.bf16.mxu0 0
        %3072 = vmatpush1.bf16.msra.mxu0 0
        %3073 = vmatprep.subr.bf16.mxu0 0
        %3074 = vmatpush1.bf16.msra.mxu0 0
        %3075 = vmatprep.subr.bf16.mxu0 0
        %3076 = vmatpush1.bf16.msra.mxu0 0
        %3077 = vmatprep.mubr.bf16.mxu0 0
        %3078 = vmatmul.mubr.bf16.gmra.mrb[0].mxu0 %v2264
        %v3079 = vpop.f32.mrb[0].mxu0
        %v3080 = vadd.f32 %v1937, %v3079
        %v3081 = vpop.f32.mrb[0].mxu0
        %v3082 = vadd.f32 %v1941, %v3081
        %v3083 = vpop.f32.mrb[0].mxu0
        %v3084 = vpop.f32.mrb[0].mxu0
        %3085 = vdwg.mxu0
        %3086 = vmatprep.subr.bf16.mxu0 %v1427
        %3087 = vmatpush1.bf16.msra.mxu0 %v1426
        %3088 = vmatprep.subr.bf16.mxu0 %v1523
        %3089 = vmatpush1.bf16.msra.mxu0 %v1522
        %3090 = vmatprep.subr.bf16.mxu0 0
        %3091 = vmatpush1.bf16.msra.mxu0 0
        %3092 = vmatprep.subr.bf16.mxu0 0
        %3093 = vmatpush1.bf16.msra.mxu0 0
        %3094 = vmatprep.subr.bf16.mxu0 0
        %3095 = vmatpush1.bf16.msra.mxu0 0
        %3096 = vmatprep.subr.bf16.mxu0 0
        %3097 = vmatpush1.bf16.msra.mxu0 0
        %3098 = vmatprep.subr.bf16.mxu0 0
        %3099 = vmatpush1.bf16.msra.mxu0 0
        %3100 = vmatprep.subr.bf16.mxu0 0
        %3101 = vmatpush1.bf16.msra.mxu0 0
        %3102 = vmatprep.subr.bf16.mxu0 0
        %3103 = vmatpush1.bf16.msra.mxu0 0
        %3104 = vmatprep.subr.bf16.mxu0 0
        %3105 = vmatpush1.bf16.msra.mxu0 0
        %3106 = vmatprep.subr.bf16.mxu0 0
        %3107 = vmatpush1.bf16.msra.mxu0 0
        %3108 = vmatprep.subr.bf16.mxu0 0
        %3109 = vmatpush1.bf16.msra.mxu0 0
        %3110 = vmatprep.subr.bf16.mxu0 0
        %3111 = vmatpush1.bf16.msra.mxu0 0
        %3112 = vmatprep.subr.bf16.mxu0 0
        %3113 = vmatpush1.bf16.msra.mxu0 0
        %3114 = vmatprep.subr.bf16.mxu0 0
        %3115 = vmatpush1.bf16.msra.mxu0 0
        %3116 = vmatprep.subr.bf16.mxu0 0
        %3117 = vmatpush1.bf16.msra.mxu0 0
        %3118 = vmatprep.mubr.bf16.mxu0 0
        %3119 = vmatmul.mubr.bf16.gmra.mrb[0].mxu0 %v2264
        %v3120 = vpop.f32.mrb[0].mxu0
        %v3121 = vadd.f32 %v1945, %v3120
        %v3122 = vpop.f32.mrb[0].mxu0
        %v3123 = vadd.f32 %v1949, %v3122
        %v3124 = vpop.f32.mrb[0].mxu0
        %v3125 = vpop.f32.mrb[0].mxu0
        %3126 = vdwg.mxu0
        %3127 = vmatprep.subr.bf16.mxu0 %v1429
        %3128 = vmatpush1.bf16.msra.mxu0 %v1428
        %3129 = vmatprep.subr.bf16.mxu0 %v1525
        %3130 = vmatpush1.bf16.msra.mxu0 %v1524
        %3131 = vmatprep.subr.bf16.mxu0 0
        %3132 = vmatpush1.bf16.msra.mxu0 0
        %3133 = vmatprep.subr.bf16.mxu0 0
        %3134 = vmatpush1.bf16.msra.mxu0 0
        %3135 = vmatprep.subr.bf16.mxu0 0
        %3136 = vmatpush1.bf16.msra.mxu0 0
        %3137 = vmatprep.subr.bf16.mxu0 0
        %3138 = vmatpush1.bf16.msra.mxu0 0
        %3139 = vmatprep.subr.bf16.mxu0 0
        %3140 = vmatpush1.bf16.msra.mxu0 0
        %3141 = vmatprep.subr.bf16.mxu0 0
        %3142 = vmatpush1.bf16.msra.mxu0 0
        %3143 = vmatprep.subr.bf16.mxu0 0
        %3144 = vmatpush1.bf16.msra.mxu0 0
        %3145 = vmatprep.subr.bf16.mxu0 0
        %3146 = vmatpush1.bf16.msra.mxu0 0
        %3147 = vmatprep.subr.bf16.mxu0 0
        %3148 = vmatpush1.bf16.msra.mxu0 0
        %3149 = vmatprep.subr.bf16.mxu0 0
        %3150 = vmatpush1.bf16.msra.mxu0 0
        %3151 = vmatprep.subr.bf16.mxu0 0
        %3152 = vmatpush1.bf16.msra.mxu0 0
        %3153 = vmatprep.subr.bf16.mxu0 0
        %3154 = vmatpush1.bf16.msra.mxu0 0
        %3155 = vmatprep.subr.bf16.mxu0 0
        %3156 = vmatpush1.bf16.msra.mxu0 0
        %3157 = vmatprep.subr.bf16.mxu0 0
        %3158 = vmatpush1.bf16.msra.mxu0 0
        %3159 = vmatprep.mubr.bf16.mxu0 0
        %3160 = vmatmul.mubr.bf16.gmra.mrb[0].mxu0 %v2264
        %v3161 = vpop.f32.mrb[0].mxu0
        %v3162 = vadd.f32 %v1953, %v3161
        %v3163 = vpop.f32.mrb[0].mxu0
        %v3164 = vadd.f32 %v1957, %v3163
        %v3165 = vpop.f32.mrb[0].mxu0
        %v3166 = vpop.f32.mrb[0].mxu0
        %3167 = vdwg.mxu0
        %3168 = vmatprep.subr.bf16.mxu0 %v1431
        %3169 = vmatpush1.bf16.msra.mxu0 %v1430
        %3170 = vmatprep.subr.bf16.mxu0 %v1527
        %3171 = vmatpush1.bf16.msra.mxu0 %v1526
        %3172 = vmatprep.subr.bf16.mxu0 0
        %3173 = vmatpush1.bf16.msra.mxu0 0
        %3174 = vmatprep.subr.bf16.mxu0 0
        %3175 = vmatpush1.bf16.msra.mxu0 0
        %3176 = vmatprep.subr.bf16.mxu0 0
        %3177 = vmatpush1.bf16.msra.mxu0 0
        %3178 = vmatprep.subr.bf16.mxu0 0
        %3179 = vmatpush1.bf16.msra.mxu0 0
        %3180 = vmatprep.subr.bf16.mxu0 0
        %3181 = vmatpush1.bf16.msra.mxu0 0
        %3182 = vmatprep.subr.bf16.mxu0 0
        %3183 = vmatpush1.bf16.msra.mxu0 0
        %3184 = vmatprep.subr.bf16.mxu0 0
        %3185 = vmatpush1.bf16.msra.mxu0 0
        %3186 = vmatprep.subr.bf16.mxu0 0
        %3187 = vmatpush1.bf16.msra.mxu0 0
        %3188 = vmatprep.subr.bf16.mxu0 0
        %3189 = vmatpush1.bf16.msra.mxu0 0
        %3190 = vmatprep.subr.bf16.mxu0 0
        %3191 = vmatpush1.bf16.msra.mxu0 0
        %3192 = vmatprep.subr.bf16.mxu0 0
        %3193 = vmatpush1.bf16.msra.mxu0 0
        %3194 = vmatprep.subr.bf16.mxu0 0
        %3195 = vmatpush1.bf16.msra.mxu0 0
        %3196 = vmatprep.subr.bf16.mxu0 0
        %3197 = vmatpush1.bf16.msra.mxu0 0
        %3198 = vmatprep.subr.bf16.mxu0 0
        %3199 = vmatpush1.bf16.msra.mxu0 0
        %3200 = vmatprep.mubr.bf16.mxu0 0
        %3201 = vmatmul.mubr.bf16.gmra.mrb[0].mxu0 %v2264
        %v3202 = vpop.f32.mrb[0].mxu0
        %v3203 = vadd.f32 %v1961, %v3202
        %v3204 = vpop.f32.mrb[0].mxu0
        %v3205 = vadd.f32 %v1965, %v3204
        %v3206 = vpop.f32.mrb[0].mxu0
        %v3207 = vpop.f32.mrb[0].mxu0
        %3208 = vdwg.mxu0
        %3209 = vmatprep.subr.bf16.mxu0 %v1433
        %3210 = vmatpush1.bf16.msra.mxu0 %v1432
        %3211 = vmatprep.subr.bf16.mxu0 %v1529
        %3212 = vmatpush1.bf16.msra.mxu0 %v1528
        %3213 = vmatprep.subr.bf16.mxu0 0
        %3214 = vmatpush1.bf16.msra.mxu0 0
        %3215 = vmatprep.subr.bf16.mxu0 0
        %3216 = vmatpush1.bf16.msra.mxu0 0
        %3217 = vmatprep.subr.bf16.mxu0 0
        %3218 = vmatpush1.bf16.msra.mxu0 0
        %3219 = vmatprep.subr.bf16.mxu0 0
        %3220 = vmatpush1.bf16.msra.mxu0 0
        %3221 = vmatprep.subr.bf16.mxu0 0
        %3222 = vmatpush1.bf16.msra.mxu0 0
        %3223 = vmatprep.subr.bf16.mxu0 0
        %3224 = vmatpush1.bf16.msra.mxu0 0
        %3225 = vmatprep.subr.bf16.mxu0 0
        %3226 = vmatpush1.bf16.msra.mxu0 0
        %3227 = vmatprep.subr.bf16.mxu0 0
        %3228 = vmatpush1.bf16.msra.mxu0 0
        %3229 = vmatprep.subr.bf16.mxu0 0
        %3230 = vmatpush1.bf16.msra.mxu0 0
        %3231 = vmatprep.subr.bf16.mxu0 0
        %3232 = vmatpush1.bf16.msra.mxu0 0
        %3233 = vmatprep.subr.bf16.mxu0 0
        %3234 = vmatpush1.bf16.msra.mxu0 0
        %3235 = vmatprep.subr.bf16.mxu0 0
        %3236 = vmatpush1.bf16.msra.mxu0 0
        %3237 = vmatprep.subr.bf16.mxu0 0
        %3238 = vmatpush1.bf16.msra.mxu0 0
        %3239 = vmatprep.subr.bf16.mxu0 0
        %3240 = vmatpush1.bf16.msra.mxu0 0
        %3241 = vmatprep.mubr.bf16.mxu0 0
        %3242 = vmatmul.mubr.bf16.gmra.mrb[0].mxu0 %v2264
        %v3243 = vpop.f32.mrb[0].mxu0
        %v3244 = vadd.f32 %v1969, %v3243
        %v3245 = vpop.f32.mrb[0].mxu0
        %v3246 = vadd.f32 %v1973, %v3245
        %v3247 = vpop.f32.mrb[0].mxu0
        %v3248 = vpop.f32.mrb[0].mxu0
        %3249 = vdwg.mxu0
        %3250 = vmatprep.subr.bf16.mxu0 %v1435
        %3251 = vmatpush1.bf16.msra.mxu0 %v1434
        %3252 = vmatprep.subr.bf16.mxu0 %v1531
        %3253 = vmatpush1.bf16.msra.mxu0 %v1530
        %3254 = vmatprep.subr.bf16.mxu0 0
        %3255 = vmatpush1.bf16.msra.mxu0 0
        %3256 = vmatprep.subr.bf16.mxu0 0
        %3257 = vmatpush1.bf16.msra.mxu0 0
        %3258 = vmatprep.subr.bf16.mxu0 0
        %3259 = vmatpush1.bf16.msra.mxu0 0
        %3260 = vmatprep.subr.bf16.mxu0 0
        %3261 = vmatpush1.bf16.msra.mxu0 0
        %3262 = vmatprep.subr.bf16.mxu0 0
        %3263 = vmatpush1.bf16.msra.mxu0 0
        %3264 = vmatprep.subr.bf16.mxu0 0
        %3265 = vmatpush1.bf16.msra.mxu0 0
        %3266 = vmatprep.subr.bf16.mxu0 0
        %3267 = vmatpush1.bf16.msra.mxu0 0
        %3268 = vmatprep.subr.bf16.mxu0 0
        %3269 = vmatpush1.bf16.msra.mxu0 0
        %3270 = vmatprep.subr.bf16.mxu0 0
        %3271 = vmatpush1.bf16.msra.mxu0 0
        %3272 = vmatprep.subr.bf16.mxu0 0
        %3273 = vmatpush1.bf16.msra.mxu0 0
        %3274 = vmatprep.subr.bf16.mxu0 0
        %3275 = vmatpush1.bf16.msra.mxu0 0
        %3276 = vmatprep.subr.bf16.mxu0 0
        %3277 = vmatpush1.bf16.msra.mxu0 0
        %3278 = vmatprep.subr.bf16.mxu0 0
        %3279 = vmatpush1.bf16.msra.mxu0 0
        %3280 = vmatprep.subr.bf16.mxu0 0
        %3281 = vmatpush1.bf16.msra.mxu0 0
        %3282 = vmatprep.mubr.bf16.mxu0 0
        %3283 = vmatmul.mubr.bf16.gmra.mrb[0].mxu0 %v2264
        %v3284 = vpop.f32.mrb[0].mxu0
        %v3285 = vadd.f32 %v1977, %v3284
        %v3286 = vpop.f32.mrb[0].mxu0
        %v3287 = vadd.f32 %v1981, %v3286
        %v3288 = vpop.f32.mrb[0].mxu0
        %v3289 = vpop.f32.mrb[0].mxu0
        %3290 = vdwg.mxu0
        %3291 = vmatprep.subr.bf16.mxu0 %v1437
        %3292 = vmatpush1.bf16.msra.mxu0 %v1436
        %3293 = vmatprep.subr.bf16.mxu0 %v1533
        %3294 = vmatpush1.bf16.msra.mxu0 %v1532
        %3295 = vmatprep.subr.bf16.mxu0 0
        %3296 = vmatpush1.bf16.msra.mxu0 0
        %3297 = vmatprep.subr.bf16.mxu0 0
        %3298 = vmatpush1.bf16.msra.mxu0 0
        %3299 = vmatprep.subr.bf16.mxu0 0
        %3300 = vmatpush1.bf16.msra.mxu0 0
        %3301 = vmatprep.subr.bf16.mxu0 0
        %3302 = vmatpush1.bf16.msra.mxu0 0
        %3303 = vmatprep.subr.bf16.mxu0 0
        %3304 = vmatpush1.bf16.msra.mxu0 0
        %3305 = vmatprep.subr.bf16.mxu0 0
        %3306 = vmatpush1.bf16.msra.mxu0 0
        %3307 = vmatprep.subr.bf16.mxu0 0
        %3308 = vmatpush1.bf16.msra.mxu0 0
        %3309 = vmatprep.subr.bf16.mxu0 0
        %3310 = vmatpush1.bf16.msra.mxu0 0
        %3311 = vmatprep.subr.bf16.mxu0 0
        %3312 = vmatpush1.bf16.msra.mxu0 0
        %3313 = vmatprep.subr.bf16.mxu0 0
        %3314 = vmatpush1.bf16.msra.mxu0 0
        %3315 = vmatprep.subr.bf16.mxu0 0
        %3316 = vmatpush1.bf16.msra.mxu0 0
        %3317 = vmatprep.subr.bf16.mxu0 0
        %3318 = vmatpush1.bf16.msra.mxu0 0
        %3319 = vmatprep.subr.bf16.mxu0 0
        %3320 = vmatpush1.bf16.msra.mxu0 0
        %3321 = vmatprep.subr.bf16.mxu0 0
        %3322 = vmatpush1.bf16.msra.mxu0 0
        %3323 = vmatprep.mubr.bf16.mxu0 0
        %3324 = vmatmul.mubr.bf16.gmra.mrb[0].mxu0 %v2264
        %v3325 = vpop.f32.mrb[0].mxu0
        %v3326 = vadd.f32 %v1985, %v3325
        %v3327 = vpop.f32.mrb[0].mxu0
        %v3328 = vadd.f32 %v1989, %v3327
        %v3329 = vpop.f32.mrb[0].mxu0
        %v3330 = vpop.f32.mrb[0].mxu0
        %3331 = vdwg.mxu0
        %3332 = vmatprep.subr.bf16.mxu0 %v1439
        %3333 = vmatpush1.bf16.msra.mxu0 %v1438
        %3334 = vmatprep.subr.bf16.mxu0 %v1535
        %3335 = vmatpush1.bf16.msra.mxu0 %v1534
        %3336 = vmatprep.subr.bf16.mxu0 0
        %3337 = vmatpush1.bf16.msra.mxu0 0
        %3338 = vmatprep.subr.bf16.mxu0 0
        %3339 = vmatpush1.bf16.msra.mxu0 0
        %3340 = vmatprep.subr.bf16.mxu0 0
        %3341 = vmatpush1.bf16.msra.mxu0 0
        %3342 = vmatprep.subr.bf16.mxu0 0
        %3343 = vmatpush1.bf16.msra.mxu0 0
        %3344 = vmatprep.subr.bf16.mxu0 0
        %3345 = vmatpush1.bf16.msra.mxu0 0
        %3346 = vmatprep.subr.bf16.mxu0 0
        %3347 = vmatpush1.bf16.msra.mxu0 0
        %3348 = vmatprep.subr.bf16.mxu0 0
        %3349 = vmatpush1.bf16.msra.mxu0 0
        %3350 = vmatprep.subr.bf16.mxu0 0
        %3351 = vmatpush1.bf16.msra.mxu0 0
        %3352 = vmatprep.subr.bf16.mxu0 0
        %3353 = vmatpush1.bf16.msra.mxu0 0
        %3354 = vmatprep.subr.bf16.mxu0 0
        %3355 = vmatpush1.bf16.msra.mxu0 0
        %3356 = vmatprep.subr.bf16.mxu0 0
        %3357 = vmatpush1.bf16.msra.mxu0 0
        %3358 = vmatprep.subr.bf16.mxu0 0
        %3359 = vmatpush1.bf16.msra.mxu0 0
        %3360 = vmatprep.subr.bf16.mxu0 0
        %3361 = vmatpush1.bf16.msra.mxu0 0
        %3362 = vmatprep.subr.bf16.mxu0 0
        %3363 = vmatpush1.bf16.msra.mxu0 0
        %3364 = vmatprep.mubr.bf16.mxu0 0
        %3365 = vmatmul.mubr.bf16.gmra.mrb[0].mxu0 %v2264
        %v3366 = vpop.f32.mrb[0].mxu0
        %v3367 = vadd.f32 %v1993, %v3366
        %v3368 = vpop.f32.mrb[0].mxu0
        %v3369 = vadd.f32 %v1997, %v3368
        %v3370 = vpop.f32.mrb[0].mxu0
        %v3371 = vpop.f32.mrb[0].mxu0
        %3372 = vdwg.mxu0
        %3373 = vmatprep.subr.bf16.mxu0 %v1441
        %3374 = vmatpush1.bf16.msra.mxu0 %v1440
        %3375 = vmatprep.subr.bf16.mxu0 %v1537
        %3376 = vmatpush1.bf16.msra.mxu0 %v1536
        %3377 = vmatprep.subr.bf16.mxu0 0
        %3378 = vmatpush1.bf16.msra.mxu0 0
        %3379 = vmatprep.subr.bf16.mxu0 0
        %3380 = vmatpush1.bf16.msra.mxu0 0
        %3381 = vmatprep.subr.bf16.mxu0 0
        %3382 = vmatpush1.bf16.msra.mxu0 0
        %3383 = vmatprep.subr.bf16.mxu0 0
        %3384 = vmatpush1.bf16.msra.mxu0 0
        %3385 = vmatprep.subr.bf16.mxu0 0
        %3386 = vmatpush1.bf16.msra.mxu0 0
        %3387 = vmatprep.subr.bf16.mxu0 0
        %3388 = vmatpush1.bf16.msra.mxu0 0
        %3389 = vmatprep.subr.bf16.mxu0 0
        %3390 = vmatpush1.bf16.msra.mxu0 0
        %3391 = vmatprep.subr.bf16.mxu0 0
        %3392 = vmatpush1.bf16.msra.mxu0 0
        %3393 = vmatprep.subr.bf16.mxu0 0
        %3394 = vmatpush1.bf16.msra.mxu0 0
        %3395 = vmatprep.subr.bf16.mxu0 0
        %3396 = vmatpush1.bf16.msra.mxu0 0
        %3397 = vmatprep.subr.bf16.mxu0 0
        %3398 = vmatpush1.bf16.msra.mxu0 0
        %3399 = vmatprep.subr.bf16.mxu0 0
        %3400 = vmatpush1.bf16.msra.mxu0 0
        %3401 = vmatprep.subr.bf16.mxu0 0
        %3402 = vmatpush1.bf16.msra.mxu0 0
        %3403 = vmatprep.subr.bf16.mxu0 0
        %3404 = vmatpush1.bf16.msra.mxu0 0
        %3405 = vmatprep.mubr.bf16.mxu0 0
        %3406 = vmatmul.mubr.bf16.gmra.mrb[0].mxu0 %v2264
        %v3407 = vpop.f32.mrb[0].mxu0
        %v3408 = vadd.f32 %v2001, %v3407
        %v3409 = vpop.f32.mrb[0].mxu0
        %v3410 = vadd.f32 %v2005, %v3409
        %v3411 = vpop.f32.mrb[0].mxu0
        %v3412 = vpop.f32.mrb[0].mxu0
        %3413 = vdwg.mxu0
        %3414 = vmatprep.subr.bf16.mxu0 %v1443
        %3415 = vmatpush1.bf16.msra.mxu0 %v1442
        %3416 = vmatprep.subr.bf16.mxu0 %v1539
        %3417 = vmatpush1.bf16.msra.mxu0 %v1538
        %3418 = vmatprep.subr.bf16.mxu0 0
        %3419 = vmatpush1.bf16.msra.mxu0 0
        %3420 = vmatprep.subr.bf16.mxu0 0
        %3421 = vmatpush1.bf16.msra.mxu0 0
        %3422 = vmatprep.subr.bf16.mxu0 0
        %3423 = vmatpush1.bf16.msra.mxu0 0
        %3424 = vmatprep.subr.bf16.mxu0 0
        %3425 = vmatpush1.bf16.msra.mxu0 0
        %3426 = vmatprep.subr.bf16.mxu0 0
        %3427 = vmatpush1.bf16.msra.mxu0 0
        %3428 = vmatprep.subr.bf16.mxu0 0
        %3429 = vmatpush1.bf16.msra.mxu0 0
        %3430 = vmatprep.subr.bf16.mxu0 0
        %3431 = vmatpush1.bf16.msra.mxu0 0
        %3432 = vmatprep.subr.bf16.mxu0 0
        %3433 = vmatpush1.bf16.msra.mxu0 0
        %3434 = vmatprep.subr.bf16.mxu0 0
        %3435 = vmatpush1.bf16.msra.mxu0 0
        %3436 = vmatprep.subr.bf16.mxu0 0
        %3437 = vmatpush1.bf16.msra.mxu0 0
        %3438 = vmatprep.subr.bf16.mxu0 0
        %3439 = vmatpush1.bf16.msra.mxu0 0
        %3440 = vmatprep.subr.bf16.mxu0 0
        %3441 = vmatpush1.bf16.msra.mxu0 0
        %3442 = vmatprep.subr.bf16.mxu0 0
        %3443 = vmatpush1.bf16.msra.mxu0 0
        %3444 = vmatprep.subr.bf16.mxu0 0
        %3445 = vmatpush1.bf16.msra.mxu0 0
        %3446 = vmatprep.mubr.bf16.mxu0 0
        %3447 = vmatmul.mubr.bf16.gmra.mrb[0].mxu0 %v2264
        %v3448 = vpop.f32.mrb[0].mxu0
        %v3449 = vadd.f32 %v2009, %v3448
        %v3450 = vpop.f32.mrb[0].mxu0
        %v3451 = vadd.f32 %v2013, %v3450
        %v3452 = vpop.f32.mrb[0].mxu0
        %v3453 = vpop.f32.mrb[0].mxu0
        %3454 = vdwg.mxu0
        %3455 = vmatprep.subr.bf16.mxu0 %v1445
        %3456 = vmatpush1.bf16.msra.mxu0 %v1444
        %3457 = vmatprep.subr.bf16.mxu0 %v1541
        %3458 = vmatpush1.bf16.msra.mxu0 %v1540
        %3459 = vmatprep.subr.bf16.mxu0 0
        %3460 = vmatpush1.bf16.msra.mxu0 0
        %3461 = vmatprep.subr.bf16.mxu0 0
        %3462 = vmatpush1.bf16.msra.mxu0 0
        %3463 = vmatprep.subr.bf16.mxu0 0
        %3464 = vmatpush1.bf16.msra.mxu0 0
        %3465 = vmatprep.subr.bf16.mxu0 0
        %3466 = vmatpush1.bf16.msra.mxu0 0
        %3467 = vmatprep.subr.bf16.mxu0 0
        %3468 = vmatpush1.bf16.msra.mxu0 0
        %3469 = vmatprep.subr.bf16.mxu0 0
        %3470 = vmatpush1.bf16.msra.mxu0 0
        %3471 = vmatprep.subr.bf16.mxu0 0
        %3472 = vmatpush1.bf16.msra.mxu0 0
        %3473 = vmatprep.subr.bf16.mxu0 0
        %3474 = vmatpush1.bf16.msra.mxu0 0
        %3475 = vmatprep.subr.bf16.mxu0 0
        %3476 = vmatpush1.bf16.msra.mxu0 0
        %3477 = vmatprep.subr.bf16.mxu0 0
        %3478 = vmatpush1.bf16.msra.mxu0 0
        %3479 = vmatprep.subr.bf16.mxu0 0
        %3480 = vmatpush1.bf16.msra.mxu0 0
        %3481 = vmatprep.subr.bf16.mxu0 0
        %3482 = vmatpush1.bf16.msra.mxu0 0
        %3483 = vmatprep.subr.bf16.mxu0 0
        %3484 = vmatpush1.bf16.msra.mxu0 0
        %3485 = vmatprep.subr.bf16.mxu0 0
        %3486 = vmatpush1.bf16.msra.mxu0 0
        %3487 = vmatprep.mubr.bf16.mxu0 0
        %3488 = vmatmul.mubr.bf16.gmra.mrb[0].mxu0 %v2264
        %v3489 = vpop.f32.mrb[0].mxu0
        %v3490 = vadd.f32 %v2017, %v3489
        %v3491 = vpop.f32.mrb[0].mxu0
        %v3492 = vadd.f32 %v2021, %v3491
        %v3493 = vpop.f32.mrb[0].mxu0
        %v3494 = vpop.f32.mrb[0].mxu0
        %3495 = vdwg.mxu0
        %3496 = vmatprep.subr.bf16.mxu0 %v1447
        %3497 = vmatpush1.bf16.msra.mxu0 %v1446
        %3498 = vmatprep.subr.bf16.mxu0 %v1543
        %3499 = vmatpush1.bf16.msra.mxu0 %v1542
        %3500 = vmatprep.subr.bf16.mxu0 0
        %3501 = vmatpush1.bf16.msra.mxu0 0
        %3502 = vmatprep.subr.bf16.mxu0 0
        %3503 = vmatpush1.bf16.msra.mxu0 0
        %3504 = vmatprep.subr.bf16.mxu0 0
        %3505 = vmatpush1.bf16.msra.mxu0 0
        %3506 = vmatprep.subr.bf16.mxu0 0
        %3507 = vmatpush1.bf16.msra.mxu0 0
        %3508 = vmatprep.subr.bf16.mxu0 0
        %3509 = vmatpush1.bf16.msra.mxu0 0
        %3510 = vmatprep.subr.bf16.mxu0 0
        %3511 = vmatpush1.bf16.msra.mxu0 0
        %3512 = vmatprep.subr.bf16.mxu0 0
        %3513 = vmatpush1.bf16.msra.mxu0 0
        %3514 = vmatprep.subr.bf16.mxu0 0
        %3515 = vmatpush1.bf16.msra.mxu0 0
        %3516 = vmatprep.subr.bf16.mxu0 0
        %3517 = vmatpush1.bf16.msra.mxu0 0
        %3518 = vmatprep.subr.bf16.mxu0 0
        %3519 = vmatpush1.bf16.msra.mxu0 0
        %3520 = vmatprep.subr.bf16.mxu0 0
        %3521 = vmatpush1.bf16.msra.mxu0 0
        %3522 = vmatprep.subr.bf16.mxu0 0
        %3523 = vmatpush1.bf16.msra.mxu0 0
        %3524 = vmatprep.subr.bf16.mxu0 0
        %3525 = vmatpush1.bf16.msra.mxu0 0
        %3526 = vmatprep.subr.bf16.mxu0 0
        %3527 = vmatpush1.bf16.msra.mxu0 0
        %3528 = vmatprep.mubr.bf16.mxu0 0
        %3529 = vmatmul.mubr.bf16.gmra.mrb[0].mxu0 %v2264
        %v3530 = vpop.f32.mrb[0].mxu0
        %v3531 = vadd.f32 %v2025, %v3530
        %v3532 = vpop.f32.mrb[0].mxu0
        %v3533 = vadd.f32 %v2029, %v3532
        %v3534 = vpop.f32.mrb[0].mxu0
        %v3535 = vpop.f32.mrb[0].mxu0
        %3536 = vdwg.mxu0
        %3537 = vmatprep.subr.bf16.mxu0 %v1449
        %3538 = vmatpush1.bf16.msra.mxu0 %v1448
        %3539 = vmatprep.subr.bf16.mxu0 %v1545
        %3540 = vmatpush1.bf16.msra.mxu0 %v1544
        %3541 = vmatprep.subr.bf16.mxu0 0
        %3542 = vmatpush1.bf16.msra.mxu0 0
        %3543 = vmatprep.subr.bf16.mxu0 0
        %3544 = vmatpush1.bf16.msra.mxu0 0
        %3545 = vmatprep.subr.bf16.mxu0 0
        %3546 = vmatpush1.bf16.msra.mxu0 0
        %3547 = vmatprep.subr.bf16.mxu0 0
        %3548 = vmatpush1.bf16.msra.mxu0 0
        %3549 = vmatprep.subr.bf16.mxu0 0
        %3550 = vmatpush1.bf16.msra.mxu0 0
        %3551 = vmatprep.subr.bf16.mxu0 0
        %3552 = vmatpush1.bf16.msra.mxu0 0
        %3553 = vmatprep.subr.bf16.mxu0 0
        %3554 = vmatpush1.bf16.msra.mxu0 0
        %3555 = vmatprep.subr.bf16.mxu0 0
        %3556 = vmatpush1.bf16.msra.mxu0 0
        %3557 = vmatprep.subr.bf16.mxu0 0
        %3558 = vmatpush1.bf16.msra.mxu0 0
        %3559 = vmatprep.subr.bf16.mxu0 0
        %3560 = vmatpush1.bf16.msra.mxu0 0
        %3561 = vmatprep.subr.bf16.mxu0 0
        %3562 = vmatpush1.bf16.msra.mxu0 0
        %3563 = vmatprep.subr.bf16.mxu0 0
        %3564 = vmatpush1.bf16.msra.mxu0 0
        %3565 = vmatprep.subr.bf16.mxu0 0
        %3566 = vmatpush1.bf16.msra.mxu0 0
        %3567 = vmatprep.subr.bf16.mxu0 0
        %3568 = vmatpush1.bf16.msra.mxu0 0
        %3569 = vmatprep.mubr.bf16.mxu0 0
        %3570 = vmatmul.mubr.bf16.gmra.mrb[0].mxu0 %v2264
        %v3571 = vpop.f32.mrb[0].mxu0
        %v3572 = vadd.f32 %v2033, %v3571
        %v3573 = vpop.f32.mrb[0].mxu0
        %v3574 = vadd.f32 %v2037, %v3573
        %v3575 = vpop.f32.mrb[0].mxu0
        %v3576 = vpop.f32.mrb[0].mxu0
        %3577 = vdwg.mxu0
        %3578 = vmatprep.subr.bf16.mxu0 %v1451
        %3579 = vmatpush1.bf16.msra.mxu0 %v1450
        %3580 = vmatprep.subr.bf16.mxu0 %v1547
        %3581 = vmatpush1.bf16.msra.mxu0 %v1546
        %3582 = vmatprep.subr.bf16.mxu0 0
        %3583 = vmatpush1.bf16.msra.mxu0 0
        %3584 = vmatprep.subr.bf16.mxu0 0
        %3585 = vmatpush1.bf16.msra.mxu0 0
        %3586 = vmatprep.subr.bf16.mxu0 0
        %3587 = vmatpush1.bf16.msra.mxu0 0
        %3588 = vmatprep.subr.bf16.mxu0 0
        %3589 = vmatpush1.bf16.msra.mxu0 0
        %3590 = vmatprep.subr.bf16.mxu0 0
        %3591 = vmatpush1.bf16.msra.mxu0 0
        %3592 = vmatprep.subr.bf16.mxu0 0
        %3593 = vmatpush1.bf16.msra.mxu0 0
        %3594 = vmatprep.subr.bf16.mxu0 0
        %3595 = vmatpush1.bf16.msra.mxu0 0
        %3596 = vmatprep.subr.bf16.mxu0 0
        %3597 = vmatpush1.bf16.msra.mxu0 0
        %3598 = vmatprep.subr.bf16.mxu0 0
        %3599 = vmatpush1.bf16.msra.mxu0 0
        %3600 = vmatprep.subr.bf16.mxu0 0
        %3601 = vmatpush1.bf16.msra.mxu0 0
        %3602 = vmatprep.subr.bf16.mxu0 0
        %3603 = vmatpush1.bf16.msra.mxu0 0
        %3604 = vmatprep.subr.bf16.mxu0 0
        %3605 = vmatpush1.bf16.msra.mxu0 0
        %3606 = vmatprep.subr.bf16.mxu0 0
        %3607 = vmatpush1.bf16.msra.mxu0 0
        %3608 = vmatprep.subr.bf16.mxu0 0
        %3609 = vmatpush1.bf16.msra.mxu0 0
        %3610 = vmatprep.mubr.bf16.mxu0 0
        %3611 = vmatmul.mubr.bf16.gmra.mrb[0].mxu0 %v2264
        %v3612 = vpop.f32.mrb[0].mxu0
        %v3613 = vadd.f32 %v2041, %v3612
        %v3614 = vpop.f32.mrb[0].mxu0
        %v3615 = vadd.f32 %v2045, %v3614
        %v3616 = vpop.f32.mrb[0].mxu0
        %v3617 = vpop.f32.mrb[0].mxu0
        %3618 = vdwg.mxu0
        %3619 = vmatprep.subr.bf16.mxu0 %v1453
        %3620 = vmatpush1.bf16.msra.mxu0 %v1452
        %3621 = vmatprep.subr.bf16.mxu0 %v1549
        %3622 = vmatpush1.bf16.msra.mxu0 %v1548
        %3623 = vmatprep.subr.bf16.mxu0 0
        %3624 = vmatpush1.bf16.msra.mxu0 0
        %3625 = vmatprep.subr.bf16.mxu0 0
        %3626 = vmatpush1.bf16.msra.mxu0 0
        %3627 = vmatprep.subr.bf16.mxu0 0
        %3628 = vmatpush1.bf16.msra.mxu0 0
        %3629 = vmatprep.subr.bf16.mxu0 0
        %3630 = vmatpush1.bf16.msra.mxu0 0
        %3631 = vmatprep.subr.bf16.mxu0 0
        %3632 = vmatpush1.bf16.msra.mxu0 0
        %3633 = vmatprep.subr.bf16.mxu0 0
        %3634 = vmatpush1.bf16.msra.mxu0 0
        %3635 = vmatprep.subr.bf16.mxu0 0
        %3636 = vmatpush1.bf16.msra.mxu0 0
        %3637 = vmatprep.subr.bf16.mxu0 0
        %3638 = vmatpush1.bf16.msra.mxu0 0
        %3639 = vmatprep.subr.bf16.mxu0 0
        %3640 = vmatpush1.bf16.msra.mxu0 0
        %3641 = vmatprep.subr.bf16.mxu0 0
        %3642 = vmatpush1.bf16.msra.mxu0 0
        %3643 = vmatprep.subr.bf16.mxu0 0
        %3644 = vmatpush1.bf16.msra.mxu0 0
        %3645 = vmatprep.subr.bf16.mxu0 0
        %3646 = vmatpush1.bf16.msra.mxu0 0
        %3647 = vmatprep.subr.bf16.mxu0 0
        %3648 = vmatpush1.bf16.msra.mxu0 0
        %3649 = vmatprep.subr.bf16.mxu0 0
        %3650 = vmatpush1.bf16.msra.mxu0 0
        %3651 = vmatprep.mubr.bf16.mxu0 0
        %3652 = vmatmul.mubr.bf16.gmra.mrb[0].mxu0 %v2264
        %v3653 = vpop.f32.mrb[0].mxu0
        %v3654 = vadd.f32 %v2049, %v3653
        %v3655 = vpop.f32.mrb[0].mxu0
        %v3656 = vadd.f32 %v2053, %v3655
        %v3657 = vpop.f32.mrb[0].mxu0
        %v3658 = vpop.f32.mrb[0].mxu0
        %3659 = vdwg.mxu0
        %3660 = vmatprep.subr.bf16.mxu0 %v1455
        %3661 = vmatpush1.bf16.msra.mxu0 %v1454
        %3662 = vmatprep.subr.bf16.mxu0 %v1551
        %3663 = vmatpush1.bf16.msra.mxu0 %v1550
        %3664 = vmatprep.subr.bf16.mxu0 0
        %3665 = vmatpush1.bf16.msra.mxu0 0
        %3666 = vmatprep.subr.bf16.mxu0 0
        %3667 = vmatpush1.bf16.msra.mxu0 0
        %3668 = vmatprep.subr.bf16.mxu0 0
        %3669 = vmatpush1.bf16.msra.mxu0 0
        %3670 = vmatprep.subr.bf16.mxu0 0
        %3671 = vmatpush1.bf16.msra.mxu0 0
        %3672 = vmatprep.subr.bf16.mxu0 0
        %3673 = vmatpush1.bf16.msra.mxu0 0
        %3674 = vmatprep.subr.bf16.mxu0 0
        %3675 = vmatpush1.bf16.msra.mxu0 0
        %3676 = vmatprep.subr.bf16.mxu0 0
        %3677 = vmatpush1.bf16.msra.mxu0 0
        %3678 = vmatprep.subr.bf16.mxu0 0
        %3679 = vmatpush1.bf16.msra.mxu0 0
        %3680 = vmatprep.subr.bf16.mxu0 0
        %3681 = vmatpush1.bf16.msra.mxu0 0
        %3682 = vmatprep.subr.bf16.mxu0 0
        %3683 = vmatpush1.bf16.msra.mxu0 0
        %3684 = vmatprep.subr.bf16.mxu0 0
        %3685 = vmatpush1.bf16.msra.mxu0 0
        %3686 = vmatprep.subr.bf16.mxu0 0
        %3687 = vmatpush1.bf16.msra.mxu0 0
        %3688 = vmatprep.subr.bf16.mxu0 0
        %3689 = vmatpush1.bf16.msra.mxu0 0
        %3690 = vmatprep.subr.bf16.mxu0 0
        %3691 = vmatpush1.bf16.msra.mxu0 0
        %3692 = vmatprep.mubr.bf16.mxu0 0
        %3693 = vmatmul.mubr.bf16.gmra.mrb[0].mxu0 %v2264
        %v3694 = vpop.f32.mrb[0].mxu0
        %v3695 = vadd.f32 %v2057, %v3694
        %v3696 = vpop.f32.mrb[0].mxu0
        %v3697 = vadd.f32 %v2061, %v3696
        %v3698 = vpop.f32.mrb[0].mxu0
        %v3699 = vpop.f32.mrb[0].mxu0
        %3700 = vdwg.mxu0
        %3701 = vmatprep.subr.bf16.mxu0 %v1457
        %3702 = vmatpush1.bf16.msra.mxu0 %v1456
        %3703 = vmatprep.subr.bf16.mxu0 %v1553
        %3704 = vmatpush1.bf16.msra.mxu0 %v1552
        %3705 = vmatprep.subr.bf16.mxu0 0
        %3706 = vmatpush1.bf16.msra.mxu0 0
        %3707 = vmatprep.subr.bf16.mxu0 0
        %3708 = vmatpush1.bf16.msra.mxu0 0
        %3709 = vmatprep.subr.bf16.mxu0 0
        %3710 = vmatpush1.bf16.msra.mxu0 0
        %3711 = vmatprep.subr.bf16.mxu0 0
        %3712 = vmatpush1.bf16.msra.mxu0 0
        %3713 = vmatprep.subr.bf16.mxu0 0
        %3714 = vmatpush1.bf16.msra.mxu0 0
        %3715 = vmatprep.subr.bf16.mxu0 0
        %3716 = vmatpush1.bf16.msra.mxu0 0
        %3717 = vmatprep.subr.bf16.mxu0 0
        %3718 = vmatpush1.bf16.msra.mxu0 0
        %3719 = vmatprep.subr.bf16.mxu0 0
        %3720 = vmatpush1.bf16.msra.mxu0 0
        %3721 = vmatprep.subr.bf16.mxu0 0
        %3722 = vmatpush1.bf16.msra.mxu0 0
        %3723 = vmatprep.subr.bf16.mxu0 0
        %3724 = vmatpush1.bf16.msra.mxu0 0
        %3725 = vmatprep.subr.bf16.mxu0 0
        %3726 = vmatpush1.bf16.msra.mxu0 0
        %3727 = vmatprep.subr.bf16.mxu0 0
        %3728 = vmatpush1.bf16.msra.mxu0 0
        %3729 = vmatprep.subr.bf16.mxu0 0
        %3730 = vmatpush1.bf16.msra.mxu0 0
        %3731 = vmatprep.subr.bf16.mxu0 0
        %3732 = vmatpush1.bf16.msra.mxu0 0
        %3733 = vmatprep.mubr.bf16.mxu0 0
        %3734 = vmatmul.mubr.bf16.gmra.mrb[0].mxu0 %v2264
        %v3735 = vpop.f32.mrb[0].mxu0
        %v3736 = vadd.f32 %v2065, %v3735
        %v3737 = vpop.f32.mrb[0].mxu0
        %v3738 = vadd.f32 %v2069, %v3737
        %v3739 = vpop.f32.mrb[0].mxu0
        %v3740 = vpop.f32.mrb[0].mxu0
        %3741 = vdwg.mxu0
        %3742 = vmatprep.subr.bf16.mxu0 %v1459
        %3743 = vmatpush1.bf16.msra.mxu0 %v1458
        %3744 = vmatprep.subr.bf16.mxu0 %v1555
        %3745 = vmatpush1.bf16.msra.mxu0 %v1554
        %3746 = vmatprep.subr.bf16.mxu0 0
        %3747 = vmatpush1.bf16.msra.mxu0 0
        %3748 = vmatprep.subr.bf16.mxu0 0
        %3749 = vmatpush1.bf16.msra.mxu0 0
        %3750 = vmatprep.subr.bf16.mxu0 0
        %3751 = vmatpush1.bf16.msra.mxu0 0
        %3752 = vmatprep.subr.bf16.mxu0 0
        %3753 = vmatpush1.bf16.msra.mxu0 0
        %3754 = vmatprep.subr.bf16.mxu0 0
        %3755 = vmatpush1.bf16.msra.mxu0 0
        %3756 = vmatprep.subr.bf16.mxu0 0
        %3757 = vmatpush1.bf16.msra.mxu0 0
        %3758 = vmatprep.subr.bf16.mxu0 0
        %3759 = vmatpush1.bf16.msra.mxu0 0
        %3760 = vmatprep.subr.bf16.mxu0 0
        %3761 = vmatpush1.bf16.msra.mxu0 0
        %3762 = vmatprep.subr.bf16.mxu0 0
        %3763 = vmatpush1.bf16.msra.mxu0 0
        %3764 = vmatprep.subr.bf16.mxu0 0
        %3765 = vmatpush1.bf16.msra.mxu0 0
        %3766 = vmatprep.subr.bf16.mxu0 0
        %3767 = vmatpush1.bf16.msra.mxu0 0
        %3768 = vmatprep.subr.bf16.mxu0 0
        %3769 = vmatpush1.bf16.msra.mxu0 0
        %3770 = vmatprep.subr.bf16.mxu0 0
        %3771 = vmatpush1.bf16.msra.mxu0 0
        %3772 = vmatprep.subr.bf16.mxu0 0
        %3773 = vmatpush1.bf16.msra.mxu0 0
        %3774 = vmatprep.mubr.bf16.mxu0 0
        %3775 = vmatmul.mubr.bf16.gmra.mrb[0].mxu0 %v2264
        %v3776 = vpop.f32.mrb[0].mxu0
        %v3777 = vadd.f32 %v2073, %v3776
        %v3778 = vpop.f32.mrb[0].mxu0
        %v3779 = vadd.f32 %v2077, %v3778
        %v3780 = vpop.f32.mrb[0].mxu0
        %v3781 = vpop.f32.mrb[0].mxu0
        %3782 = vdwg.mxu0
        %3783 = vmatprep.subr.bf16.mxu0 %v1461
        %3784 = vmatpush1.bf16.msra.mxu0 %v1460
        %3785 = vmatprep.subr.bf16.mxu0 %v1557
        %3786 = vmatpush1.bf16.msra.mxu0 %v1556
        %3787 = vmatprep.subr.bf16.mxu0 0
        %3788 = vmatpush1.bf16.msra.mxu0 0
        %3789 = vmatprep.subr.bf16.mxu0 0
        %3790 = vmatpush1.bf16.msra.mxu0 0
        %3791 = vmatprep.subr.bf16.mxu0 0
        %3792 = vmatpush1.bf16.msra.mxu0 0
        %3793 = vmatprep.subr.bf16.mxu0 0
        %3794 = vmatpush1.bf16.msra.mxu0 0
        %3795 = vmatprep.subr.bf16.mxu0 0
        %3796 = vmatpush1.bf16.msra.mxu0 0
        %3797 = vmatprep.subr.bf16.mxu0 0
        %3798 = vmatpush1.bf16.msra.mxu0 0
        %3799 = vmatprep.subr.bf16.mxu0 0
        %3800 = vmatpush1.bf16.msra.mxu0 0
        %3801 = vmatprep.subr.bf16.mxu0 0
        %3802 = vmatpush1.bf16.msra.mxu0 0
        %3803 = vmatprep.subr.bf16.mxu0 0
        %3804 = vmatpush1.bf16.msra.mxu0 0
        %3805 = vmatprep.subr.bf16.mxu0 0
        %3806 = vmatpush1.bf16.msra.mxu0 0
        %3807 = vmatprep.subr.bf16.mxu0 0
        %3808 = vmatpush1.bf16.msra.mxu0 0
        %3809 = vmatprep.subr.bf16.mxu0 0
        %3810 = vmatpush1.bf16.msra.mxu0 0
        %3811 = vmatprep.subr.bf16.mxu0 0
        %3812 = vmatpush1.bf16.msra.mxu0 0
        %3813 = vmatprep.subr.bf16.mxu0 0
        %3814 = vmatpush1.bf16.msra.mxu0 0
        %3815 = vmatprep.mubr.bf16.mxu0 0
        %3816 = vmatmul.mubr.bf16.gmra.mrb[0].mxu0 %v2264
        %v3817 = vpop.f32.mrb[0].mxu0
        %v3818 = vadd.f32 %v2081, %v3817
        %v3819 = vpop.f32.mrb[0].mxu0
        %v3820 = vadd.f32 %v2085, %v3819
        %v3821 = vpop.f32.mrb[0].mxu0
        %v3822 = vpop.f32.mrb[0].mxu0
        %3823 = vdwg.mxu0
        %3824 = vmatprep.subr.bf16.mxu0 %v1463
        %3825 = vmatpush1.bf16.msra.mxu0 %v1462
        %3826 = vmatprep.subr.bf16.mxu0 %v1559
        %3827 = vmatpush1.bf16.msra.mxu0 %v1558
        %3828 = vmatprep.subr.bf16.mxu0 0
        %3829 = vmatpush1.bf16.msra.mxu0 0
        %3830 = vmatprep.subr.bf16.mxu0 0
        %3831 = vmatpush1.bf16.msra.mxu0 0
        %3832 = vmatprep.subr.bf16.mxu0 0
        %3833 = vmatpush1.bf16.msra.mxu0 0
        %3834 = vmatprep.subr.bf16.mxu0 0
        %3835 = vmatpush1.bf16.msra.mxu0 0
        %3836 = vmatprep.subr.bf16.mxu0 0
        %3837 = vmatpush1.bf16.msra.mxu0 0
        %3838 = vmatprep.subr.bf16.mxu0 0
        %3839 = vmatpush1.bf16.msra.mxu0 0
        %3840 = vmatprep.subr.bf16.mxu0 0
        %3841 = vmatpush1.bf16.msra.mxu0 0
        %3842 = vmatprep.subr.bf16.mxu0 0
        %3843 = vmatpush1.bf16.msra.mxu0 0
        %3844 = vmatprep.subr.bf16.mxu0 0
        %3845 = vmatpush1.bf16.msra.mxu0 0
        %3846 = vmatprep.subr.bf16.mxu0 0
        %3847 = vmatpush1.bf16.msra.mxu0 0
        %3848 = vmatprep.subr.bf16.mxu0 0
        %3849 = vmatpush1.bf16.msra.mxu0 0
        %3850 = vmatprep.subr.bf16.mxu0 0
        %3851 = vmatpush1.bf16.msra.mxu0 0
        %3852 = vmatprep.subr.bf16.mxu0 0
        %3853 = vmatpush1.bf16.msra.mxu0 0
        %3854 = vmatprep.subr.bf16.mxu0 0
        %3855 = vmatpush1.bf16.msra.mxu0 0
        %3856 = vmatprep.mubr.bf16.mxu0 0
        %3857 = vmatmul.mubr.bf16.gmra.mrb[0].mxu0 %v2264
        %v3858 = vpop.f32.mrb[0].mxu0
        %v3859 = vadd.f32 %v2089, %v3858
        %v3860 = vpop.f32.mrb[0].mxu0
        %v3861 = vadd.f32 %v2093, %v3860
        %v3862 = vpop.f32.mrb[0].mxu0
        %v3863 = vpop.f32.mrb[0].mxu0
        %3864 = vdwg.mxu0
        %3865 = vmatprep.subr.bf16.mxu0 %v1465
        %3866 = vmatpush1.bf16.msra.mxu0 %v1464
        %3867 = vmatprep.subr.bf16.mxu0 %v1561
        %3868 = vmatpush1.bf16.msra.mxu0 %v1560
        %3869 = vmatprep.subr.bf16.mxu0 0
        %3870 = vmatpush1.bf16.msra.mxu0 0
        %3871 = vmatprep.subr.bf16.mxu0 0
        %3872 = vmatpush1.bf16.msra.mxu0 0
        %3873 = vmatprep.subr.bf16.mxu0 0
        %3874 = vmatpush1.bf16.msra.mxu0 0
        %3875 = vmatprep.subr.bf16.mxu0 0
        %3876 = vmatpush1.bf16.msra.mxu0 0
        %3877 = vmatprep.subr.bf16.mxu0 0
        %3878 = vmatpush1.bf16.msra.mxu0 0
        %3879 = vmatprep.subr.bf16.mxu0 0
        %3880 = vmatpush1.bf16.msra.mxu0 0
        %3881 = vmatprep.subr.bf16.mxu0 0
        %3882 = vmatpush1.bf16.msra.mxu0 0
        %3883 = vmatprep.subr.bf16.mxu0 0
        %3884 = vmatpush1.bf16.msra.mxu0 0
        %3885 = vmatprep.subr.bf16.mxu0 0
        %3886 = vmatpush1.bf16.msra.mxu0 0
        %3887 = vmatprep.subr.bf16.mxu0 0
        %3888 = vmatpush1.bf16.msra.mxu0 0
        %3889 = vmatprep.subr.bf16.mxu0 0
        %3890 = vmatpush1.bf16.msra.mxu0 0
        %3891 = vmatprep.subr.bf16.mxu0 0
        %3892 = vmatpush1.bf16.msra.mxu0 0
        %3893 = vmatprep.subr.bf16.mxu0 0
        %3894 = vmatpush1.bf16.msra.mxu0 0
        %3895 = vmatprep.subr.bf16.mxu0 0
        %3896 = vmatpush1.bf16.msra.mxu0 0
        %3897 = vmatprep.mubr.bf16.mxu0 0
        %3898 = vmatmul.mubr.bf16.gmra.mrb[0].mxu0 %v2264
        %v3899 = vpop.f32.mrb[0].mxu0
        %v3900 = vadd.f32 %v2097, %v3899
        %v3901 = vpop.f32.mrb[0].mxu0
        %v3902 = vadd.f32 %v2101, %v3901
        %v3903 = vpop.f32.mrb[0].mxu0
        %v3904 = vpop.f32.mrb[0].mxu0
        %3905 = vdwg.mxu0
        %3906 = vmatprep.subr.bf16.mxu0 %v1467
        %3907 = vmatpush1.bf16.msra.mxu0 %v1466
        %3908 = vmatprep.subr.bf16.mxu0 %v1563
        %3909 = vmatpush1.bf16.msra.mxu0 %v1562
        %3910 = vmatprep.subr.bf16.mxu0 0
        %3911 = vmatpush1.bf16.msra.mxu0 0
        %3912 = vmatprep.subr.bf16.mxu0 0
        %3913 = vmatpush1.bf16.msra.mxu0 0
        %3914 = vmatprep.subr.bf16.mxu0 0
        %3915 = vmatpush1.bf16.msra.mxu0 0
        %3916 = vmatprep.subr.bf16.mxu0 0
        %3917 = vmatpush1.bf16.msra.mxu0 0
        %3918 = vmatprep.subr.bf16.mxu0 0
        %3919 = vmatpush1.bf16.msra.mxu0 0
        %3920 = vmatprep.subr.bf16.mxu0 0
        %3921 = vmatpush1.bf16.msra.mxu0 0
        %3922 = vmatprep.subr.bf16.mxu0 0
        %3923 = vmatpush1.bf16.msra.mxu0 0
        %3924 = vmatprep.subr.bf16.mxu0 0
        %3925 = vmatpush1.bf16.msra.mxu0 0
        %3926 = vmatprep.subr.bf16.mxu0 0
        %3927 = vmatpush1.bf16.msra.mxu0 0
        %3928 = vmatprep.subr.bf16.mxu0 0
        %3929 = vmatpush1.bf16.msra.mxu0 0
        %3930 = vmatprep.subr.bf16.mxu0 0
        %3931 = vmatpush1.bf16.msra.mxu0 0
        %3932 = vmatprep.subr.bf16.mxu0 0
        %3933 = vmatpush1.bf16.msra.mxu0 0
        %3934 = vmatprep.subr.bf16.mxu0 0
        %3935 = vmatpush1.bf16.msra.mxu0 0
        %3936 = vmatprep.subr.bf16.mxu0 0
        %3937 = vmatpush1.bf16.msra.mxu0 0
        %3938 = vmatprep.mubr.bf16.mxu0 0
        %3939 = vmatmul.mubr.bf16.gmra.mrb[0].mxu0 %v2264
        %v3940 = vpop.f32.mrb[0].mxu0
        %v3941 = vadd.f32 %v2105, %v3940
        %v3942 = vpop.f32.mrb[0].mxu0
        %v3943 = vadd.f32 %v2109, %v3942
        %v3944 = vpop.f32.mrb[0].mxu0
        %v3945 = vpop.f32.mrb[0].mxu0
        %3946 = vdwg.mxu0
        %3947 = vmatprep.subr.bf16.mxu0 %v1469
        %3948 = vmatpush1.bf16.msra.mxu0 %v1468
        %3949 = vmatprep.subr.bf16.mxu0 %v1565
        %3950 = vmatpush1.bf16.msra.mxu0 %v1564
        %3951 = vmatprep.subr.bf16.mxu0 0
        %3952 = vmatpush1.bf16.msra.mxu0 0
        %3953 = vmatprep.subr.bf16.mxu0 0
        %3954 = vmatpush1.bf16.msra.mxu0 0
        %3955 = vmatprep.subr.bf16.mxu0 0
        %3956 = vmatpush1.bf16.msra.mxu0 0
        %3957 = vmatprep.subr.bf16.mxu0 0
        %3958 = vmatpush1.bf16.msra.mxu0 0
        %3959 = vmatprep.subr.bf16.mxu0 0
        %3960 = vmatpush1.bf16.msra.mxu0 0
        %3961 = vmatprep.subr.bf16.mxu0 0
        %3962 = vmatpush1.bf16.msra.mxu0 0
        %3963 = vmatprep.subr.bf16.mxu0 0
        %3964 = vmatpush1.bf16.msra.mxu0 0
        %3965 = vmatprep.subr.bf16.mxu0 0
        %3966 = vmatpush1.bf16.msra.mxu0 0
        %3967 = vmatprep.subr.bf16.mxu0 0
        %3968 = vmatpush1.bf16.msra.mxu0 0
        %3969 = vmatprep.subr.bf16.mxu0 0
        %3970 = vmatpush1.bf16.msra.mxu0 0
        %3971 = vmatprep.subr.bf16.mxu0 0
        %3972 = vmatpush1.bf16.msra.mxu0 0
        %3973 = vmatprep.subr.bf16.mxu0 0
        %3974 = vmatpush1.bf16.msra.mxu0 0
        %3975 = vmatprep.subr.bf16.mxu0 0
        %3976 = vmatpush1.bf16.msra.mxu0 0
        %3977 = vmatprep.subr.bf16.mxu0 0
        %3978 = vmatpush1.bf16.msra.mxu0 0
        %3979 = vmatprep.mubr.bf16.mxu0 0
        %3980 = vmatmul.mubr.bf16.gmra.mrb[0].mxu0 %v2264
        %v3981 = vpop.f32.mrb[0].mxu0
        %v3982 = vadd.f32 %v2113, %v3981
        %v3983 = vpop.f32.mrb[0].mxu0
        %v3984 = vadd.f32 %v2117, %v3983
        %v3985 = vpop.f32.mrb[0].mxu0
        %v3986 = vpop.f32.mrb[0].mxu0
        %3987 = vdwg.mxu0
        %3988 = vmatprep.subr.bf16.mxu0 %v1471
        %3989 = vmatpush1.bf16.msra.mxu0 %v1470
        %3990 = vmatprep.subr.bf16.mxu0 %v1567
        %3991 = vmatpush1.bf16.msra.mxu0 %v1566
        %3992 = vmatprep.subr.bf16.mxu0 0
        %3993 = vmatpush1.bf16.msra.mxu0 0
        %3994 = vmatprep.subr.bf16.mxu0 0
        %3995 = vmatpush1.bf16.msra.mxu0 0
        %3996 = vmatprep.subr.bf16.mxu0 0
        %3997 = vmatpush1.bf16.msra.mxu0 0
        %3998 = vmatprep.subr.bf16.mxu0 0
        %3999 = vmatpush1.bf16.msra.mxu0 0
        %4000 = vmatprep.subr.bf16.mxu0 0
        %4001 = vmatpush1.bf16.msra.mxu0 0
        %4002 = vmatprep.subr.bf16.mxu0 0
        %4003 = vmatpush1.bf16.msra.mxu0 0
        %4004 = vmatprep.subr.bf16.mxu0 0
        %4005 = vmatpush1.bf16.msra.mxu0 0
        %4006 = vmatprep.subr.bf16.mxu0 0
        %4007 = vmatpush1.bf16.msra.mxu0 0
        %4008 = vmatprep.subr.bf16.mxu0 0
        %4009 = vmatpush1.bf16.msra.mxu0 0
        %4010 = vmatprep.subr.bf16.mxu0 0
        %4011 = vmatpush1.bf16.msra.mxu0 0
        %4012 = vmatprep.subr.bf16.mxu0 0
        %4013 = vmatpush1.bf16.msra.mxu0 0
        %4014 = vmatprep.subr.bf16.mxu0 0
        %4015 = vmatpush1.bf16.msra.mxu0 0
        %4016 = vmatprep.subr.bf16.mxu0 0
        %4017 = vmatpush1.bf16.msra.mxu0 0
        %4018 = vmatprep.subr.bf16.mxu0 0
        %4019 = vmatpush1.bf16.msra.mxu0 0
        %4020 = vmatprep.mubr.bf16.mxu0 0
        %4021 = vmatmul.mubr.bf16.gmra.mrb[0].mxu0 %v2264
        %v4022 = vpop.f32.mrb[0].mxu0
        %v4023 = vadd.f32 %v2121, %v4022
        %v4024 = vpop.f32.mrb[0].mxu0
        %v4025 = vadd.f32 %v2125, %v4024
        %v4026 = vpop.f32.mrb[0].mxu0
        %v4027 = vpop.f32.mrb[0].mxu0
        %4028 = vdwg.mxu0
        %4029 = vmatprep.subr.bf16.mxu0 %v1473
        %4030 = vmatpush1.bf16.msra.mxu0 %v1472
        %4031 = vmatprep.subr.bf16.mxu0 %v1569
        %4032 = vmatpush1.bf16.msra.mxu0 %v1568
        %4033 = vmatprep.subr.bf16.mxu0 0
        %4034 = vmatpush1.bf16.msra.mxu0 0
        %4035 = vmatprep.subr.bf16.mxu0 0
        %4036 = vmatpush1.bf16.msra.mxu0 0
        %4037 = vmatprep.subr.bf16.mxu0 0
        %4038 = vmatpush1.bf16.msra.mxu0 0
        %4039 = vmatprep.subr.bf16.mxu0 0
        %4040 = vmatpush1.bf16.msra.mxu0 0
        %4041 = vmatprep.subr.bf16.mxu0 0
        %4042 = vmatpush1.bf16.msra.mxu0 0
        %4043 = vmatprep.subr.bf16.mxu0 0
        %4044 = vmatpush1.bf16.msra.mxu0 0
        %4045 = vmatprep.subr.bf16.mxu0 0
        %4046 = vmatpush1.bf16.msra.mxu0 0
        %4047 = vmatprep.subr.bf16.mxu0 0
        %4048 = vmatpush1.bf16.msra.mxu0 0
        %4049 = vmatprep.subr.bf16.mxu0 0
        %4050 = vmatpush1.bf16.msra.mxu0 0
        %4051 = vmatprep.subr.bf16.mxu0 0
        %4052 = vmatpush1.bf16.msra.mxu0 0
        %4053 = vmatprep.subr.bf16.mxu0 0
        %4054 = vmatpush1.bf16.msra.mxu0 0
        %4055 = vmatprep.subr.bf16.mxu0 0
        %4056 = vmatpush1.bf16.msra.mxu0 0
        %4057 = vmatprep.subr.bf16.mxu0 0
        %4058 = vmatpush1.bf16.msra.mxu0 0
        %4059 = vmatprep.subr.bf16.mxu0 0
        %4060 = vmatpush1.bf16.msra.mxu0 0
        %4061 = vmatprep.mubr.bf16.mxu0 0
        %4062 = vmatmul.mubr.bf16.gmra.mrb[0].mxu0 %v2264
        %v4063 = vpop.f32.mrb[0].mxu0
        %v4064 = vadd.f32 %v2129, %v4063
        %v4065 = vpop.f32.mrb[0].mxu0
        %v4066 = vadd.f32 %v2133, %v4065
        %v4067 = vpop.f32.mrb[0].mxu0
        %v4068 = vpop.f32.mrb[0].mxu0
        %4069 = vdwg.mxu0
        %4070 = vmatprep.subr.bf16.mxu0 %v1475
        %4071 = vmatpush1.bf16.msra.mxu0 %v1474
        %4072 = vmatprep.subr.bf16.mxu0 %v1571
        %4073 = vmatpush1.bf16.msra.mxu0 %v1570
        %4074 = vmatprep.subr.bf16.mxu0 0
        %4075 = vmatpush1.bf16.msra.mxu0 0
        %4076 = vmatprep.subr.bf16.mxu0 0
        %4077 = vmatpush1.bf16.msra.mxu0 0
        %4078 = vmatprep.subr.bf16.mxu0 0
        %4079 = vmatpush1.bf16.msra.mxu0 0
        %4080 = vmatprep.subr.bf16.mxu0 0
        %4081 = vmatpush1.bf16.msra.mxu0 0
        %4082 = vmatprep.subr.bf16.mxu0 0
        %4083 = vmatpush1.bf16.msra.mxu0 0
        %4084 = vmatprep.subr.bf16.mxu0 0
        %4085 = vmatpush1.bf16.msra.mxu0 0
        %4086 = vmatprep.subr.bf16.mxu0 0
        %4087 = vmatpush1.bf16.msra.mxu0 0
        %4088 = vmatprep.subr.bf16.mxu0 0
        %4089 = vmatpush1.bf16.msra.mxu0 0
        %4090 = vmatprep.subr.bf16.mxu0 0
        %4091 = vmatpush1.bf16.msra.mxu0 0
        %4092 = vmatprep.subr.bf16.mxu0 0
        %4093 = vmatpush1.bf16.msra.mxu0 0
        %4094 = vmatprep.subr.bf16.mxu0 0
        %4095 = vmatpush1.bf16.msra.mxu0 0
        %4096 = vmatprep.subr.bf16.mxu0 0
        %4097 = vmatpush1.bf16.msra.mxu0 0
        %4098 = vmatprep.subr.bf16.mxu0 0
        %4099 = vmatpush1.bf16.msra.mxu0 0
        %4100 = vmatprep.subr.bf16.mxu0 0
        %4101 = vmatpush1.bf16.msra.mxu0 0
        %4102 = vmatprep.mubr.bf16.mxu0 0
        %4103 = vmatmul.mubr.bf16.gmra.mrb[0].mxu0 %v2264
        %v4104 = vpop.f32.mrb[0].mxu0
        %v4105 = vadd.f32 %v2137, %v4104
        %v4106 = vpop.f32.mrb[0].mxu0
        %v4107 = vadd.f32 %v2141, %v4106
        %v4108 = vpop.f32.mrb[0].mxu0
        %v4109 = vpop.f32.mrb[0].mxu0
        %4110 = vdwg.mxu0
        %4111 = vmatprep.subr.bf16.mxu0 %v1477
        %4112 = vmatpush1.bf16.msra.mxu0 %v1476
        %4113 = vmatprep.subr.bf16.mxu0 %v1573
        %4114 = vmatpush1.bf16.msra.mxu0 %v1572
        %4115 = vmatprep.subr.bf16.mxu0 0
        %4116 = vmatpush1.bf16.msra.mxu0 0
        %4117 = vmatprep.subr.bf16.mxu0 0
        %4118 = vmatpush1.bf16.msra.mxu0 0
        %4119 = vmatprep.subr.bf16.mxu0 0
        %4120 = vmatpush1.bf16.msra.mxu0 0
        %4121 = vmatprep.subr.bf16.mxu0 0
        %4122 = vmatpush1.bf16.msra.mxu0 0
        %4123 = vmatprep.subr.bf16.mxu0 0
        %4124 = vmatpush1.bf16.msra.mxu0 0
        %4125 = vmatprep.subr.bf16.mxu0 0
        %4126 = vmatpush1.bf16.msra.mxu0 0
        %4127 = vmatprep.subr.bf16.mxu0 0
        %4128 = vmatpush1.bf16.msra.mxu0 0
        %4129 = vmatprep.subr.bf16.mxu0 0
        %4130 = vmatpush1.bf16.msra.mxu0 0
        %4131 = vmatprep.subr.bf16.mxu0 0
        %4132 = vmatpush1.bf16.msra.mxu0 0
        %4133 = vmatprep.subr.bf16.mxu0 0
        %4134 = vmatpush1.bf16.msra.mxu0 0
        %4135 = vmatprep.subr.bf16.mxu0 0
        %4136 = vmatpush1.bf16.msra.mxu0 0
        %4137 = vmatprep.subr.bf16.mxu0 0
        %4138 = vmatpush1.bf16.msra.mxu0 0
        %4139 = vmatprep.subr.bf16.mxu0 0
        %4140 = vmatpush1.bf16.msra.mxu0 0
        %4141 = vmatprep.subr.bf16.mxu0 0
        %4142 = vmatpush1.bf16.msra.mxu0 0
        %4143 = vmatprep.mubr.bf16.mxu0 0
        %4144 = vmatmul.mubr.bf16.gmra.mrb[0].mxu0 %v2264
        %v4145 = vpop.f32.mrb[0].mxu0
        %v4146 = vadd.f32 %v2145, %v4145
        %v4147 = vpop.f32.mrb[0].mxu0
        %v4148 = vadd.f32 %v2149, %v4147
        %v4149 = vpop.f32.mrb[0].mxu0
        %v4150 = vpop.f32.mrb[0].mxu0
        %4151 = vdwg.mxu0
        %4152 = vmatprep.subr.bf16.mxu0 %v1479
        %4153 = vmatpush1.bf16.msra.mxu0 %v1478
        %4154 = vmatprep.subr.bf16.mxu0 %v1575
        %4155 = vmatpush1.bf16.msra.mxu0 %v1574
        %4156 = vmatprep.subr.bf16.mxu0 0
        %4157 = vmatpush1.bf16.msra.mxu0 0
        %4158 = vmatprep.subr.bf16.mxu0 0
        %4159 = vmatpush1.bf16.msra.mxu0 0
        %4160 = vmatprep.subr.bf16.mxu0 0
        %4161 = vmatpush1.bf16.msra.mxu0 0
        %4162 = vmatprep.subr.bf16.mxu0 0
        %4163 = vmatpush1.bf16.msra.mxu0 0
        %4164 = vmatprep.subr.bf16.mxu0 0
        %4165 = vmatpush1.bf16.msra.mxu0 0
        %4166 = vmatprep.subr.bf16.mxu0 0
        %4167 = vmatpush1.bf16.msra.mxu0 0
        %4168 = vmatprep.subr.bf16.mxu0 0
        %4169 = vmatpush1.bf16.msra.mxu0 0
        %4170 = vmatprep.subr.bf16.mxu0 0
        %4171 = vmatpush1.bf16.msra.mxu0 0
        %4172 = vmatprep.subr.bf16.mxu0 0
        %4173 = vmatpush1.bf16.msra.mxu0 0
        %4174 = vmatprep.subr.bf16.mxu0 0
        %4175 = vmatpush1.bf16.msra.mxu0 0
        %4176 = vmatprep.subr.bf16.mxu0 0
        %4177 = vmatpush1.bf16.msra.mxu0 0
        %4178 = vmatprep.subr.bf16.mxu0 0
        %4179 = vmatpush1.bf16.msra.mxu0 0
        %4180 = vmatprep.subr.bf16.mxu0 0
        %4181 = vmatpush1.bf16.msra.mxu0 0
        %4182 = vmatprep.subr.bf16.mxu0 0
        %4183 = vmatpush1.bf16.msra.mxu0 0
        %4184 = vmatprep.mubr.bf16.mxu0 0
        %4185 = vmatmul.mubr.bf16.gmra.mrb[0].mxu0 %v2264
        %v4186 = vpop.f32.mrb[0].mxu0
        %v4187 = vadd.f32 %v2153, %v4186
        %v4188 = vpop.f32.mrb[0].mxu0
        %v4189 = vadd.f32 %v2157, %v4188
        %v4190 = vpop.f32.mrb[0].mxu0
        %v4191 = vpop.f32.mrb[0].mxu0
        %4192 = vdwg.mxu0
        %4193 = vmatprep.subr.bf16.mxu0 %v1481
        %4194 = vmatpush1.bf16.msra.mxu0 %v1480
        %4195 = vmatprep.subr.bf16.mxu0 %v1577
        %4196 = vmatpush1.bf16.msra.mxu0 %v1576
        %4197 = vmatprep.subr.bf16.mxu0 0
        %4198 = vmatpush1.bf16.msra.mxu0 0
        %4199 = vmatprep.subr.bf16.mxu0 0
        %4200 = vmatpush1.bf16.msra.mxu0 0
        %4201 = vmatprep.subr.bf16.mxu0 0
        %4202 = vmatpush1.bf16.msra.mxu0 0
        %4203 = vmatprep.subr.bf16.mxu0 0
        %4204 = vmatpush1.bf16.msra.mxu0 0
        %4205 = vmatprep.subr.bf16.mxu0 0
        %4206 = vmatpush1.bf16.msra.mxu0 0
        %4207 = vmatprep.subr.bf16.mxu0 0
        %4208 = vmatpush1.bf16.msra.mxu0 0
        %4209 = vmatprep.subr.bf16.mxu0 0
        %4210 = vmatpush1.bf16.msra.mxu0 0
        %4211 = vmatprep.subr.bf16.mxu0 0
        %4212 = vmatpush1.bf16.msra.mxu0 0
        %4213 = vmatprep.subr.bf16.mxu0 0
        %4214 = vmatpush1.bf16.msra.mxu0 0
        %4215 = vmatprep.subr.bf16.mxu0 0
        %4216 = vmatpush1.bf16.msra.mxu0 0
        %4217 = vmatprep.subr.bf16.mxu0 0
        %4218 = vmatpush1.bf16.msra.mxu0 0
        %4219 = vmatprep.subr.bf16.mxu0 0
        %4220 = vmatpush1.bf16.msra.mxu0 0
        %4221 = vmatprep.subr.bf16.mxu0 0
        %4222 = vmatpush1.bf16.msra.mxu0 0
        %4223 = vmatprep.subr.bf16.mxu0 0
        %4224 = vmatpush1.bf16.msra.mxu0 0
        %4225 = vmatprep.mubr.bf16.mxu0 0
        %4226 = vmatmul.mubr.bf16.gmra.mrb[0].mxu0 %v2264
        %v4227 = vpop.f32.mrb[0].mxu0
        %v4228 = vadd.f32 %v2161, %v4227
        %v4229 = vpop.f32.mrb[0].mxu0
        %v4230 = vadd.f32 %v2165, %v4229
        %v4231 = vpop.f32.mrb[0].mxu0
        %v4232 = vpop.f32.mrb[0].mxu0
        %4233 = vdwg.mxu0
        %v4234 = vxor.u32 %v2301, 2147483648
        %v4235 = vxor.u32 %v2303, 2147483648
        %v4236 = vxor.u32 %v2342, 2147483648
        %v4237 = vxor.u32 %v2344, 2147483648
        %v4238 = vxor.u32 %v2383, 2147483648
        %v4239 = vxor.u32 %v2385, 2147483648
        %v4240 = vxor.u32 %v2424, 2147483648
        %v4241 = vxor.u32 %v2426, 2147483648
        %v4242 = vxor.u32 %v2465, 2147483648
        %v4243 = vxor.u32 %v2467, 2147483648
        %v4244 = vxor.u32 %v2506, 2147483648
        %v4245 = vxor.u32 %v2508, 2147483648
        %v4246 = vxor.u32 %v2547, 2147483648
        %v4247 = vxor.u32 %v2549, 2147483648
        %v4248 = vxor.u32 %v2588, 2147483648
        %v4249 = vxor.u32 %v2590, 2147483648
        %v4250 = vxor.u32 %v2629, 2147483648
        %v4251 = vxor.u32 %v2631, 2147483648
        %v4252 = vxor.u32 %v2670, 2147483648
        %v4253 = vxor.u32 %v2672, 2147483648
        %v4254 = vxor.u32 %v2711, 2147483648
        %v4255 = vxor.u32 %v2713, 2147483648
        %v4256 = vxor.u32 %v2752, 2147483648
        %v4257 = vxor.u32 %v2754, 2147483648
        %v4258 = vxor.u32 %v2793, 2147483648
        %v4259 = vxor.u32 %v2795, 2147483648
        %v4260 = vxor.u32 %v2834, 2147483648
        %v4261 = vxor.u32 %v2836, 2147483648
        %v4262 = vxor.u32 %v2875, 2147483648
        %v4263 = vxor.u32 %v2877, 2147483648
        %v4264 = vxor.u32 %v2916, 2147483648
        %v4265 = vxor.u32 %v2918, 2147483648
        %v4266 = vxor.u32 %v2957, 2147483648
        %v4267 = vxor.u32 %v2959, 2147483648
        %v4268 = vxor.u32 %v2998, 2147483648
        %v4269 = vxor.u32 %v3000, 2147483648
        %v4270 = vxor.u32 %v3039, 2147483648
        %v4271 = vxor.u32 %v3041, 2147483648
        %v4272 = vxor.u32 %v3080, 2147483648
        %v4273 = vxor.u32 %v3082, 2147483648
        %v4274 = vxor.u32 %v3121, 2147483648
        %v4275 = vxor.u32 %v3123, 2147483648
        %v4276 = vxor.u32 %v3162, 2147483648
        %v4277 = vxor.u32 %v3164, 2147483648
        %v4278 = vxor.u32 %v3203, 2147483648
        %v4279 = vxor.u32 %v3205, 2147483648
        %v4280 = vxor.u32 %v3244, 2147483648
        %v4281 = vxor.u32 %v3246, 2147483648
        %v4282 = vxor.u32 %v3285, 2147483648
        %v4283 = vxor.u32 %v3287, 2147483648
        %v4284 = vxor.u32 %v3326, 2147483648
        %v4285 = vxor.u32 %v3328, 2147483648
        %v4286 = vxor.u32 %v3367, 2147483648
        %v4287 = vxor.u32 %v3369, 2147483648
        %v4288 = vxor.u32 %v3408, 2147483648
        %v4289 = vxor.u32 %v3410, 2147483648
        %v4290 = vxor.u32 %v3449, 2147483648
        %v4291 = vxor.u32 %v3451, 2147483648
        %v4292 = vxor.u32 %v3490, 2147483648
        %v4293 = vxor.u32 %v3492, 2147483648
        %v4294 = vxor.u32 %v3531, 2147483648
        %v4295 = vxor.u32 %v3533, 2147483648
        %v4296 = vxor.u32 %v3572, 2147483648
        %v4297 = vxor.u32 %v3574, 2147483648
        %v4298 = vxor.u32 %v3613, 2147483648
        %v4299 = vxor.u32 %v3615, 2147483648
        %v4300 = vxor.u32 %v3654, 2147483648
        %v4301 = vxor.u32 %v3656, 2147483648
        %v4302 = vxor.u32 %v3695, 2147483648
        %v4303 = vxor.u32 %v3697, 2147483648
        %v4304 = vxor.u32 %v3736, 2147483648
        %v4305 = vxor.u32 %v3738, 2147483648
        %v4306 = vxor.u32 %v3777, 2147483648
        %v4307 = vxor.u32 %v3779, 2147483648
        %v4308 = vxor.u32 %v3818, 2147483648
        %v4309 = vxor.u32 %v3820, 2147483648
        %v4310 = vxor.u32 %v3859, 2147483648
        %v4311 = vxor.u32 %v3861, 2147483648
        %v4312 = vxor.u32 %v3900, 2147483648
        %v4313 = vxor.u32 %v3902, 2147483648
        %v4314 = vxor.u32 %v3941, 2147483648
        %v4315 = vxor.u32 %v3943, 2147483648
        %v4316 = vxor.u32 %v3982, 2147483648
        %v4317 = vxor.u32 %v3984, 2147483648
        %v4318 = vxor.u32 %v4023, 2147483648
        %v4319 = vxor.u32 %v4025, 2147483648
        %v4320 = vxor.u32 %v4064, 2147483648
        %v4321 = vxor.u32 %v4066, 2147483648
        %v4322 = vxor.u32 %v4105, 2147483648
        %v4323 = vxor.u32 %v4107, 2147483648
        %v4324 = vxor.u32 %v4146, 2147483648
        %v4325 = vxor.u32 %v4148, 2147483648
        %v4326 = vxor.u32 %v4187, 2147483648
        %v4327 = vxor.u32 %v4189, 2147483648
        %v4328 = vxor.u32 %v4228, 2147483648
        %v4329 = vxor.u32 %v4230, 2147483648
        %v4330 = vmul.f32 %v4234, 1.442695
        %v4331 = vpow.pop %v4330
        %v4332 = vmul.f32 %v4235, 1.442695
        %v4333 = vpow.pop %v4332
        %v4334 = vmul.f32 %v4236, 1.442695
        %v4335 = vpow.pop %v4334
        %v4336 = vmul.f32 %v4237, 1.442695
        %v4337 = vpow.pop %v4336
        %v4338 = vmul.f32 %v4238, 1.442695
        %v4339 = vpow.pop %v4338
        %v4340 = vmul.f32 %v4239, 1.442695
        %v4341 = vpow.pop %v4340
        %v4342 = vmul.f32 %v4240, 1.442695
        %v4343 = vpow.pop %v4342
        %v4344 = vmul.f32 %v4241, 1.442695
        %v4345 = vpow.pop %v4344
        %v4346 = vmul.f32 %v4242, 1.442695
        %v4347 = vpow.pop %v4346
        %v4348 = vmul.f32 %v4243, 1.442695
        %v4349 = vpow.pop %v4348
        %v4350 = vmul.f32 %v4244, 1.442695
        %v4351 = vpow.pop %v4350
        %v4352 = vmul.f32 %v4245, 1.442695
        %v4353 = vpow.pop %v4352
        %v4354 = vmul.f32 %v4246, 1.442695
        %v4355 = vpow.pop %v4354
        %v4356 = vmul.f32 %v4247, 1.442695
        %v4357 = vpow.pop %v4356
        %v4358 = vmul.f32 %v4248, 1.442695
        %v4359 = vpow.pop %v4358
        %v4360 = vmul.f32 %v4249, 1.442695
        %v4361 = vpow.pop %v4360
        %v4362 = vmul.f32 %v4250, 1.442695
        %v4363 = vpow.pop %v4362
        %v4364 = vmul.f32 %v4251, 1.442695
        %v4365 = vpow.pop %v4364
        %v4366 = vmul.f32 %v4252, 1.442695
        %v4367 = vpow.pop %v4366
        %v4368 = vmul.f32 %v4253, 1.442695
        %v4369 = vpow.pop %v4368
        %v4370 = vmul.f32 %v4254, 1.442695
        %v4371 = vpow.pop %v4370
        %v4372 = vmul.f32 %v4255, 1.442695
        %v4373 = vpow.pop %v4372
        %v4374 = vmul.f32 %v4256, 1.442695
        %v4375 = vpow.pop %v4374
        %v4376 = vmul.f32 %v4257, 1.442695
        %v4377 = vpow.pop %v4376
        %v4378 = vmul.f32 %v4258, 1.442695
        %v4379 = vpow.pop %v4378
        %v4380 = vmul.f32 %v4259, 1.442695
        %v4381 = vpow.pop %v4380
        %v4382 = vmul.f32 %v4260, 1.442695
        %v4383 = vpow.pop %v4382
        %v4384 = vmul.f32 %v4261, 1.442695
        %v4385 = vpow.pop %v4384
        %v4386 = vmul.f32 %v4262, 1.442695
        %v4387 = vpow.pop %v4386
        %v4388 = vmul.f32 %v4263, 1.442695
        %v4389 = vpow.pop %v4388
        %v4390 = vmul.f32 %v4264, 1.442695
        %v4391 = vpow.pop %v4390
        %v4392 = vmul.f32 %v4265, 1.442695
        %v4393 = vpow.pop %v4392
        %v4394 = vmul.f32 %v4266, 1.442695
        %v4395 = vpow.pop %v4394
        %v4396 = vmul.f32 %v4267, 1.442695
        %v4397 = vpow.pop %v4396
        %v4398 = vmul.f32 %v4268, 1.442695
        %v4399 = vpow.pop %v4398
        %v4400 = vmul.f32 %v4269, 1.442695
        %v4401 = vpow.pop %v4400
        %v4402 = vmul.f32 %v4270, 1.442695
        %v4403 = vpow.pop %v4402
        %v4404 = vmul.f32 %v4271, 1.442695
        %v4405 = vpow.pop %v4404
        %v4406 = vmul.f32 %v4272, 1.442695
        %v4407 = vpow.pop %v4406
        %v4408 = vmul.f32 %v4273, 1.442695
        %v4409 = vpow.pop %v4408
        %v4410 = vmul.f32 %v4274, 1.442695
        %v4411 = vpow.pop %v4410
        %v4412 = vmul.f32 %v4275, 1.442695
        %v4413 = vpow.pop %v4412
        %v4414 = vmul.f32 %v4276, 1.442695
        %v4415 = vpow.pop %v4414
        %v4416 = vmul.f32 %v4277, 1.442695
        %v4417 = vpow.pop %v4416
        %v4418 = vmul.f32 %v4278, 1.442695
        %v4419 = vpow.pop %v4418
        %v4420 = vmul.f32 %v4279, 1.442695
        %v4421 = vpow.pop %v4420
        %v4422 = vmul.f32 %v4280, 1.442695
        %v4423 = vpow.pop %v4422
        %v4424 = vmul.f32 %v4281, 1.442695
        %v4425 = vpow.pop %v4424
        %v4426 = vmul.f32 %v4282, 1.442695
        %v4427 = vpow.pop %v4426
        %v4428 = vmul.f32 %v4283, 1.442695
        %v4429 = vpow.pop %v4428
        %v4430 = vmul.f32 %v4284, 1.442695
        %v4431 = vpow.pop %v4430
        %v4432 = vmul.f32 %v4285, 1.442695
        %v4433 = vpow.pop %v4432
        %v4434 = vmul.f32 %v4286, 1.442695
        %v4435 = vpow.pop %v4434
        %v4436 = vmul.f32 %v4287, 1.442695
        %v4437 = vpow.pop %v4436
        %v4438 = vmul.f32 %v4288, 1.442695
        %v4439 = vpow.pop %v4438
        %v4440 = vmul.f32 %v4289, 1.442695
        %v4441 = vpow.pop %v4440
        %v4442 = vmul.f32 %v4290, 1.442695
        %v4443 = vpow.pop %v4442
        %v4444 = vmul.f32 %v4291, 1.442695
        %v4445 = vpow.pop %v4444
        %v4446 = vmul.f32 %v4292, 1.442695
        %v4447 = vpow.pop %v4446
        %v4448 = vmul.f32 %v4293, 1.442695
        %v4449 = vpow.pop %v4448
        %v4450 = vmul.f32 %v4294, 1.442695
        %v4451 = vpow.pop %v4450
        %v4452 = vmul.f32 %v4295, 1.442695
        %v4453 = vpow.pop %v4452
        %v4454 = vmul.f32 %v4296, 1.442695
        %v4455 = vpow.pop %v4454
        %v4456 = vmul.f32 %v4297, 1.442695
        %v4457 = vpow.pop %v4456
        %v4458 = vmul.f32 %v4298, 1.442695
        %v4459 = vpow.pop %v4458
        %v4460 = vmul.f32 %v4299, 1.442695
        %v4461 = vpow.pop %v4460
        %v4462 = vmul.f32 %v4300, 1.442695
        %v4463 = vpow.pop %v4462
        %v4464 = vmul.f32 %v4301, 1.442695
        %v4465 = vpow.pop %v4464
        %v4466 = vmul.f32 %v4302, 1.442695
        %v4467 = vpow.pop %v4466
        %v4468 = vmul.f32 %v4303, 1.442695
        %v4469 = vpow.pop %v4468
        %v4470 = vmul.f32 %v4304, 1.442695
        %v4471 = vpow.pop %v4470
        %v4472 = vmul.f32 %v4305, 1.442695
        %v4473 = vpow.pop %v4472
        %v4474 = vmul.f32 %v4306, 1.442695
        %v4475 = vpow.pop %v4474
        %v4476 = vmul.f32 %v4307, 1.442695
        %v4477 = vpow.pop %v4476
        %v4478 = vmul.f32 %v4308, 1.442695
        %v4479 = vpow.pop %v4478
        %v4480 = vmul.f32 %v4309, 1.442695
        %v4481 = vpow.pop %v4480
        %v4482 = vmul.f32 %v4310, 1.442695
        %v4483 = vpow.pop %v4482
        %v4484 = vmul.f32 %v4311, 1.442695
        %v4485 = vpow.pop %v4484
        %v4486 = vmul.f32 %v4312, 1.442695
        %v4487 = vpow.pop %v4486
        %v4488 = vmul.f32 %v4313, 1.442695
        %v4489 = vpow.pop %v4488
        %v4490 = vmul.f32 %v4314, 1.442695
        %v4491 = vpow.pop %v4490
        %v4492 = vmul.f32 %v4315, 1.442695
        %v4493 = vpow.pop %v4492
        %v4494 = vmul.f32 %v4316, 1.442695
        %v4495 = vpow.pop %v4494
        %v4496 = vmul.f32 %v4317, 1.442695
        %v4497 = vpow.pop %v4496
        %v4498 = vmul.f32 %v4318, 1.442695
        %v4499 = vpow.pop %v4498
        %v4500 = vmul.f32 %v4319, 1.442695
        %v4501 = vpow.pop %v4500
        %v4502 = vmul.f32 %v4320, 1.442695
        %v4503 = vpow.pop %v4502
        %v4504 = vmul.f32 %v4321, 1.442695
        %v4505 = vpow.pop %v4504
        %v4506 = vmul.f32 %v4322, 1.442695
        %v4507 = vpow.pop %v4506
        %v4508 = vmul.f32 %v4323, 1.442695
        %v4509 = vpow.pop %v4508
        %v4510 = vmul.f32 %v4324, 1.442695
        %v4511 = vpow.pop %v4510
        %v4512 = vmul.f32 %v4325, 1.442695
        %v4513 = vpow.pop %v4512
        %v4514 = vmul.f32 %v4326, 1.442695
        %v4515 = vpow.pop %v4514
        %v4516 = vmul.f32 %v4327, 1.442695
        %v4517 = vpow.pop %v4516
        %v4518 = vmul.f32 %v4328, 1.442695
        %v4519 = vpow.pop %v4518
        %v4520 = vmul.f32 %v4329, 1.442695
        %v4521 = vpow.pop %v4520
        %v4522 = vadd.f32 %v4331, 1.0
        %v4523 = vadd.f32 %v4333, 1.0
        %v4524 = vadd.f32 %v4335, 1.0
        %v4525 = vadd.f32 %v4337, 1.0
        %v4526 = vadd.f32 %v4339, 1.0
        %v4527 = vadd.f32 %v4341, 1.0
        %v4528 = vadd.f32 %v4343, 1.0
        %v4529 = vadd.f32 %v4345, 1.0
        %v4530 = vadd.f32 %v4347, 1.0
        %v4531 = vadd.f32 %v4349, 1.0
        %v4532 = vadd.f32 %v4351, 1.0
        %v4533 = vadd.f32 %v4353, 1.0
        %v4534 = vadd.f32 %v4355, 1.0
        %v4535 = vadd.f32 %v4357, 1.0
        %v4536 = vadd.f32 %v4359, 1.0
        %v4537 = vadd.f32 %v4361, 1.0
        %v4538 = vadd.f32 %v4363, 1.0
        %v4539 = vadd.f32 %v4365, 1.0
        %v4540 = vadd.f32 %v4367, 1.0
        %v4541 = vadd.f32 %v4369, 1.0
        %v4542 = vadd.f32 %v4371, 1.0
        %v4543 = vadd.f32 %v4373, 1.0
        %v4544 = vadd.f32 %v4375, 1.0
        %v4545 = vadd.f32 %v4377, 1.0
        %v4546 = vadd.f32 %v4379, 1.0
        %v4547 = vadd.f32 %v4381, 1.0
        %v4548 = vadd.f32 %v4383, 1.0
        %v4549 = vadd.f32 %v4385, 1.0
        %v4550 = vadd.f32 %v4387, 1.0
        %v4551 = vadd.f32 %v4389, 1.0
        %v4552 = vadd.f32 %v4391, 1.0
        %v4553 = vadd.f32 %v4393, 1.0
        %v4554 = vadd.f32 %v4395, 1.0
        %v4555 = vadd.f32 %v4397, 1.0
        %v4556 = vadd.f32 %v4399, 1.0
        %v4557 = vadd.f32 %v4401, 1.0
        %v4558 = vadd.f32 %v4403, 1.0
        %v4559 = vadd.f32 %v4405, 1.0
        %v4560 = vadd.f32 %v4407, 1.0
        %v4561 = vadd.f32 %v4409, 1.0
        %v4562 = vadd.f32 %v4411, 1.0
        %v4563 = vadd.f32 %v4413, 1.0
        %v4564 = vadd.f32 %v4415, 1.0
        %v4565 = vadd.f32 %v4417, 1.0
        %v4566 = vadd.f32 %v4419, 1.0
        %v4567 = vadd.f32 %v4421, 1.0
        %v4568 = vadd.f32 %v4423, 1.0
        %v4569 = vadd.f32 %v4425, 1.0
        %v4570 = vadd.f32 %v4427, 1.0
        %v4571 = vadd.f32 %v4429, 1.0
        %v4572 = vadd.f32 %v4431, 1.0
        %v4573 = vadd.f32 %v4433, 1.0
        %v4574 = vadd.f32 %v4435, 1.0
        %v4575 = vadd.f32 %v4437, 1.0
        %v4576 = vadd.f32 %v4439, 1.0
        %v4577 = vadd.f32 %v4441, 1.0
        %v4578 = vadd.f32 %v4443, 1.0
        %v4579 = vadd.f32 %v4445, 1.0
        %v4580 = vadd.f32 %v4447, 1.0
        %v4581 = vadd.f32 %v4449, 1.0
        %v4582 = vadd.f32 %v4451, 1.0
        %v4583 = vadd.f32 %v4453, 1.0
        %v4584 = vadd.f32 %v4455, 1.0
        %v4585 = vadd.f32 %v4457, 1.0
        %v4586 = vadd.f32 %v4459, 1.0
        %v4587 = vadd.f32 %v4461, 1.0
        %v4588 = vadd.f32 %v4463, 1.0
        %v4589 = vadd.f32 %v4465, 1.0
        %v4590 = vadd.f32 %v4467, 1.0
        %v4591 = vadd.f32 %v4469, 1.0
        %v4592 = vadd.f32 %v4471, 1.0
        %v4593 = vadd.f32 %v4473, 1.0
        %v4594 = vadd.f32 %v4475, 1.0
        %v4595 = vadd.f32 %v4477, 1.0
        %v4596 = vadd.f32 %v4479, 1.0
        %v4597 = vadd.f32 %v4481, 1.0
        %v4598 = vadd.f32 %v4483, 1.0
        %v4599 = vadd.f32 %v4485, 1.0
        %v4600 = vadd.f32 %v4487, 1.0
        %v4601 = vadd.f32 %v4489, 1.0
        %v4602 = vadd.f32 %v4491, 1.0
        %v4603 = vadd.f32 %v4493, 1.0
        %v4604 = vadd.f32 %v4495, 1.0
        %v4605 = vadd.f32 %v4497, 1.0
        %v4606 = vadd.f32 %v4499, 1.0
        %v4607 = vadd.f32 %v4501, 1.0
        %v4608 = vadd.f32 %v4503, 1.0
        %v4609 = vadd.f32 %v4505, 1.0
        %v4610 = vadd.f32 %v4507, 1.0
        %v4611 = vadd.f32 %v4509, 1.0
        %v4612 = vadd.f32 %v4511, 1.0
        %v4613 = vadd.f32 %v4513, 1.0
        %v4614 = vadd.f32 %v4515, 1.0
        %v4615 = vadd.f32 %v4517, 1.0
        %v4616 = vadd.f32 %v4519, 1.0
        %v4617 = vadd.f32 %v4521, 1.0
        %v4618 = vrcp.pop %v4522
        %v4619 = vmul.f32 1.0, %v4618
        %v4620 = vrcp.pop %v4523
        %v4621 = vmul.f32 1.0, %v4620
        %v4622 = vrcp.pop %v4524
        %v4623 = vmul.f32 1.0, %v4622
        %v4624 = vrcp.pop %v4525
        %v4625 = vmul.f32 1.0, %v4624
        %v4626 = vrcp.pop %v4526
        %v4627 = vmul.f32 1.0, %v4626
        %v4628 = vrcp.pop %v4527
        %v4629 = vmul.f32 1.0, %v4628
        %v4630 = vrcp.pop %v4528
        %v4631 = vmul.f32 1.0, %v4630
        %v4632 = vrcp.pop %v4529
        %v4633 = vmul.f32 1.0, %v4632
        %v4634 = vrcp.pop %v4530
        %v4635 = vmul.f32 1.0, %v4634
        %v4636 = vrcp.pop %v4531
        %v4637 = vmul.f32 1.0, %v4636
        %v4638 = vrcp.pop %v4532
        %v4639 = vmul.f32 1.0, %v4638
        %v4640 = vrcp.pop %v4533
        %v4641 = vmul.f32 1.0, %v4640
        %v4642 = vrcp.pop %v4534
        %v4643 = vmul.f32 1.0, %v4642
        %v4644 = vrcp.pop %v4535
        %v4645 = vmul.f32 1.0, %v4644
        %v4646 = vrcp.pop %v4536
        %v4647 = vmul.f32 1.0, %v4646
        %v4648 = vrcp.pop %v4537
        %v4649 = vmul.f32 1.0, %v4648
        %v4650 = vrcp.pop %v4538
        %v4651 = vmul.f32 1.0, %v4650
        %v4652 = vrcp.pop %v4539
        %v4653 = vmul.f32 1.0, %v4652
        %v4654 = vrcp.pop %v4540
        %v4655 = vmul.f32 1.0, %v4654
        %v4656 = vrcp.pop %v4541
        %v4657 = vmul.f32 1.0, %v4656
        %v4658 = vrcp.pop %v4542
        %v4659 = vmul.f32 1.0, %v4658
        %v4660 = vrcp.pop %v4543
        %v4661 = vmul.f32 1.0, %v4660
        %v4662 = vrcp.pop %v4544
        %v4663 = vmul.f32 1.0, %v4662
        %v4664 = vrcp.pop %v4545
        %v4665 = vmul.f32 1.0, %v4664
        %v4666 = vrcp.pop %v4546
        %v4667 = vmul.f32 1.0, %v4666
        %v4668 = vrcp.pop %v4547
        %v4669 = vmul.f32 1.0, %v4668
        %v4670 = vrcp.pop %v4548
        %v4671 = vmul.f32 1.0, %v4670
        %v4672 = vrcp.pop %v4549
        %v4673 = vmul.f32 1.0, %v4672
        %v4674 = vrcp.pop %v4550
        %v4675 = vmul.f32 1.0, %v4674
        %v4676 = vrcp.pop %v4551
        %v4677 = vmul.f32 1.0, %v4676
        %v4678 = vrcp.pop %v4552
        %v4679 = vmul.f32 1.0, %v4678
        %v4680 = vrcp.pop %v4553
        %v4681 = vmul.f32 1.0, %v4680
        %v4682 = vrcp.pop %v4554
        %v4683 = vmul.f32 1.0, %v4682
        %v4684 = vrcp.pop %v4555
        %v4685 = vmul.f32 1.0, %v4684
        %v4686 = vrcp.pop %v4556
        %v4687 = vmul.f32 1.0, %v4686
        %v4688 = vrcp.pop %v4557
        %v4689 = vmul.f32 1.0, %v4688
        %v4690 = vrcp.pop %v4558
        %v4691 = vmul.f32 1.0, %v4690
        %v4692 = vrcp.pop %v4559
        %v4693 = vmul.f32 1.0, %v4692
        %v4694 = vrcp.pop %v4560
        %v4695 = vmul.f32 1.0, %v4694
        %v4696 = vrcp.pop %v4561
        %v4697 = vmul.f32 1.0, %v4696
        %v4698 = vrcp.pop %v4562
        %v4699 = vmul.f32 1.0, %v4698
        %v4700 = vrcp.pop %v4563
        %v4701 = vmul.f32 1.0, %v4700
        %v4702 = vrcp.pop %v4564
        %v4703 = vmul.f32 1.0, %v4702
        %v4704 = vrcp.pop %v4565
        %v4705 = vmul.f32 1.0, %v4704
        %v4706 = vrcp.pop %v4566
        %v4707 = vmul.f32 1.0, %v4706
        %v4708 = vrcp.pop %v4567
        %v4709 = vmul.f32 1.0, %v4708
        %v4710 = vrcp.pop %v4568
        %v4711 = vmul.f32 1.0, %v4710
        %v4712 = vrcp.pop %v4569
        %v4713 = vmul.f32 1.0, %v4712
        %v4714 = vrcp.pop %v4570
        %v4715 = vmul.f32 1.0, %v4714
        %v4716 = vrcp.pop %v4571
        %v4717 = vmul.f32 1.0, %v4716
        %v4718 = vrcp.pop %v4572
        %v4719 = vmul.f32 1.0, %v4718
        %v4720 = vrcp.pop %v4573
        %v4721 = vmul.f32 1.0, %v4720
        %v4722 = vrcp.pop %v4574
        %v4723 = vmul.f32 1.0, %v4722
        %v4724 = vrcp.pop %v4575
        %v4725 = vmul.f32 1.0, %v4724
        %v4726 = vrcp.pop %v4576
        %v4727 = vmul.f32 1.0, %v4726
        %v4728 = vrcp.pop %v4577
        %v4729 = vmul.f32 1.0, %v4728
        %v4730 = vrcp.pop %v4578
        %v4731 = vmul.f32 1.0, %v4730
        %v4732 = vrcp.pop %v4579
        %v4733 = vmul.f32 1.0, %v4732
        %v4734 = vrcp.pop %v4580
        %v4735 = vmul.f32 1.0, %v4734
        %v4736 = vrcp.pop %v4581
        %v4737 = vmul.f32 1.0, %v4736
        %v4738 = vrcp.pop %v4582
        %v4739 = vmul.f32 1.0, %v4738
        %v4740 = vrcp.pop %v4583
        %v4741 = vmul.f32 1.0, %v4740
        %v4742 = vrcp.pop %v4584
        %v4743 = vmul.f32 1.0, %v4742
        %v4744 = vrcp.pop %v4585
        %v4745 = vmul.f32 1.0, %v4744
        %v4746 = vrcp.pop %v4586
        %v4747 = vmul.f32 1.0, %v4746
        %v4748 = vrcp.pop %v4587
        %v4749 = vmul.f32 1.0, %v4748
        %v4750 = vrcp.pop %v4588
        %v4751 = vmul.f32 1.0, %v4750
        %v4752 = vrcp.pop %v4589
        %v4753 = vmul.f32 1.0, %v4752
        %v4754 = vrcp.pop %v4590
        %v4755 = vmul.f32 1.0, %v4754
        %v4756 = vrcp.pop %v4591
        %v4757 = vmul.f32 1.0, %v4756
        %v4758 = vrcp.pop %v4592
        %v4759 = vmul.f32 1.0, %v4758
        %v4760 = vrcp.pop %v4593
        %v4761 = vmul.f32 1.0, %v4760
        %v4762 = vrcp.pop %v4594
        %v4763 = vmul.f32 1.0, %v4762
        %v4764 = vrcp.pop %v4595
        %v4765 = vmul.f32 1.0, %v4764
        %v4766 = vrcp.pop %v4596
        %v4767 = vmul.f32 1.0, %v4766
        %v4768 = vrcp.pop %v4597
        %v4769 = vmul.f32 1.0, %v4768
        %v4770 = vrcp.pop %v4598
        %v4771 = vmul.f32 1.0, %v4770
        %v4772 = vrcp.pop %v4599
        %v4773 = vmul.f32 1.0, %v4772
        %v4774 = vrcp.pop %v4600
        %v4775 = vmul.f32 1.0, %v4774
        %v4776 = vrcp.pop %v4601
        %v4777 = vmul.f32 1.0, %v4776
        %v4778 = vrcp.pop %v4602
        %v4779 = vmul.f32 1.0, %v4778
        %v4780 = vrcp.pop %v4603
        %v4781 = vmul.f32 1.0, %v4780
        %v4782 = vrcp.pop %v4604
        %v4783 = vmul.f32 1.0, %v4782
        %v4784 = vrcp.pop %v4605
        %v4785 = vmul.f32 1.0, %v4784
        %v4786 = vrcp.pop %v4606
        %v4787 = vmul.f32 1.0, %v4786
        %v4788 = vrcp.pop %v4607
        %v4789 = vmul.f32 1.0, %v4788
        %v4790 = vrcp.pop %v4608
        %v4791 = vmul.f32 1.0, %v4790
        %v4792 = vrcp.pop %v4609
        %v4793 = vmul.f32 1.0, %v4792
        %v4794 = vrcp.pop %v4610
        %v4795 = vmul.f32 1.0, %v4794
        %v4796 = vrcp.pop %v4611
        %v4797 = vmul.f32 1.0, %v4796
        %v4798 = vrcp.pop %v4612
        %v4799 = vmul.f32 1.0, %v4798
        %v4800 = vrcp.pop %v4613
        %v4801 = vmul.f32 1.0, %v4800
        %v4802 = vrcp.pop %v4614
        %v4803 = vmul.f32 1.0, %v4802
        %v4804 = vrcp.pop %v4615
        %v4805 = vmul.f32 1.0, %v4804
        %v4806 = vrcp.pop %v4616
        %v4807 = vmul.f32 1.0, %v4806
        %v4808 = vrcp.pop %v4617
        %v4809 = vmul.f32 1.0, %v4808
        %v4906 = vcombine.low %v4619, %v4621
        %v4907 = vcombine.low %v4623, %v4625
        %v4908 = vcombine.low %v4627, %v4629
        %v4909 = vcombine.low %v4631, %v4633
        %v4911 = vunpack.c.l.s4 1966171168
        %v4912 = vunpack.c.0.s8 %v4911
        %v4913 = vlaneseq
        %v4914 = vshrl.u32 %v4913, 7
        %v4915 = vsub.s32 %v4912, %v4914
        %v4916 = vrot.slane %v4906, %v4915
        %v4918 = vunpack.c.l.s4 1966171168
        %v4919 = vunpack.c.0.s8 %v4918
        %v4920 = vlaneseq
        %v4921 = vshrl.u32 %v4920, 7
        %v4922 = vsub.s32 %v4919, %v4921
        %v4923 = vrot.slane %v4907, %v4922
        %v4925 = vunpack.c.l.s4 1966171168
        %v4926 = vunpack.c.0.s8 %v4925
        %v4927 = vlaneseq
        %v4928 = vshrl.u32 %v4927, 7
        %v4929 = vsub.s32 %v4926, %v4928
        %v4930 = vrot.slane %v4908, %v4929
        %v4932 = vunpack.c.l.s4 1966171168
        %v4933 = vunpack.c.0.s8 %v4932
        %v4934 = vlaneseq
        %v4935 = vshrl.u32 %v4934, 7
        %v4936 = vsub.s32 %v4933, %v4935
        %v4937 = vrot.slane %v4909, %v4936
        %v4938 = vcombine.low %v4916, %v4923
        %v4939 = vcombine.low %v4930, %v4937
        %v4941 = vunpack.c.l.s4 1966171168
        %v4942 = vunpack.c.0.s8 %v4941
        %v4943 = vlaneseq
        %v4944 = vshrl.u32 %v4943, 7
        %v4945 = vsub.s32 %v4942, %v4944
        %v4946 = vrot.slane %v4938, %v4945
        %v4948 = vunpack.c.l.s4 1966171168
        %v4949 = vunpack.c.0.s8 %v4948
        %v4950 = vlaneseq
        %v4951 = vshrl.u32 %v4950, 7
        %v4952 = vsub.s32 %v4949, %v4951
        %v4953 = vrot.slane %v4939, %v4952
        %v4954 = vcombine.low %v4946, %v4953
        %v4955 = vcombine.low %v4635, %v4637
        %v4956 = vcombine.low %v4639, %v4641
        %v4957 = vcombine.low %v4643, %v4645
        %v4958 = vcombine.low %v4647, %v4649
        %v4960 = vunpack.c.l.s4 1966171168
        %v4961 = vunpack.c.0.s8 %v4960
        %v4962 = vlaneseq
        %v4963 = vshrl.u32 %v4962, 7
        %v4964 = vsub.s32 %v4961, %v4963
        %v4965 = vrot.slane %v4955, %v4964
        %v4967 = vunpack.c.l.s4 1966171168
        %v4968 = vunpack.c.0.s8 %v4967
        %v4969 = vlaneseq
        %v4970 = vshrl.u32 %v4969, 7
        %v4971 = vsub.s32 %v4968, %v4970
        %v4972 = vrot.slane %v4956, %v4971
        %v4974 = vunpack.c.l.s4 1966171168
        %v4975 = vunpack.c.0.s8 %v4974
        %v4976 = vlaneseq
        %v4977 = vshrl.u32 %v4976, 7
        %v4978 = vsub.s32 %v4975, %v4977
        %v4979 = vrot.slane %v4957, %v4978
        %v4981 = vunpack.c.l.s4 1966171168
        %v4982 = vunpack.c.0.s8 %v4981
        %v4983 = vlaneseq
        %v4984 = vshrl.u32 %v4983, 7
        %v4985 = vsub.s32 %v4982, %v4984
        %v4986 = vrot.slane %v4958, %v4985
        %v4987 = vcombine.low %v4965, %v4972
        %v4988 = vcombine.low %v4979, %v4986
        %v4990 = vunpack.c.l.s4 1966171168
        %v4991 = vunpack.c.0.s8 %v4990
        %v4992 = vlaneseq
        %v4993 = vshrl.u32 %v4992, 7
        %v4994 = vsub.s32 %v4991, %v4993
        %v4995 = vrot.slane %v4987, %v4994
        %v4997 = vunpack.c.l.s4 1966171168
        %v4998 = vunpack.c.0.s8 %v4997
        %v4999 = vlaneseq
        %v5000 = vshrl.u32 %v4999, 7
        %v5001 = vsub.s32 %v4998, %v5000
        %v5002 = vrot.slane %v4988, %v5001
        %v5003 = vcombine.low %v4995, %v5002
        %v5004 = vcombine.low %v4651, %v4653
        %v5005 = vcombine.low %v4655, %v4657
        %v5006 = vcombine.low %v4659, %v4661
        %v5007 = vcombine.low %v4663, %v4665
        %v5009 = vunpack.c.l.s4 1966171168
        %v5010 = vunpack.c.0.s8 %v5009
        %v5011 = vlaneseq
        %v5012 = vshrl.u32 %v5011, 7
        %v5013 = vsub.s32 %v5010, %v5012
        %v5014 = vrot.slane %v5004, %v5013
        %v5016 = vunpack.c.l.s4 1966171168
        %v5017 = vunpack.c.0.s8 %v5016
        %v5018 = vlaneseq
        %v5019 = vshrl.u32 %v5018, 7
        %v5020 = vsub.s32 %v5017, %v5019
        %v5021 = vrot.slane %v5005, %v5020
        %v5023 = vunpack.c.l.s4 1966171168
        %v5024 = vunpack.c.0.s8 %v5023
        %v5025 = vlaneseq
        %v5026 = vshrl.u32 %v5025, 7
        %v5027 = vsub.s32 %v5024, %v5026
        %v5028 = vrot.slane %v5006, %v5027
        %v5030 = vunpack.c.l.s4 1966171168
        %v5031 = vunpack.c.0.s8 %v5030
        %v5032 = vlaneseq
        %v5033 = vshrl.u32 %v5032, 7
        %v5034 = vsub.s32 %v5031, %v5033
        %v5035 = vrot.slane %v5007, %v5034
        %v5036 = vcombine.low %v5014, %v5021
        %v5037 = vcombine.low %v5028, %v5035
        %v5039 = vunpack.c.l.s4 1966171168
        %v5040 = vunpack.c.0.s8 %v5039
        %v5041 = vlaneseq
        %v5042 = vshrl.u32 %v5041, 7
        %v5043 = vsub.s32 %v5040, %v5042
        %v5044 = vrot.slane %v5036, %v5043
        %v5046 = vunpack.c.l.s4 1966171168
        %v5047 = vunpack.c.0.s8 %v5046
        %v5048 = vlaneseq
        %v5049 = vshrl.u32 %v5048, 7
        %v5050 = vsub.s32 %v5047, %v5049
        %v5051 = vrot.slane %v5037, %v5050
        %v5052 = vcombine.low %v5044, %v5051
        %v5053 = vcombine.low %v4667, %v4669
        %v5054 = vcombine.low %v4671, %v4673
        %v5055 = vcombine.low %v4675, %v4677
        %v5056 = vcombine.low %v4679, %v4681
        %v5058 = vunpack.c.l.s4 1966171168
        %v5059 = vunpack.c.0.s8 %v5058
        %v5060 = vlaneseq
        %v5061 = vshrl.u32 %v5060, 7
        %v5062 = vsub.s32 %v5059, %v5061
        %v5063 = vrot.slane %v5053, %v5062
        %v5065 = vunpack.c.l.s4 1966171168
        %v5066 = vunpack.c.0.s8 %v5065
        %v5067 = vlaneseq
        %v5068 = vshrl.u32 %v5067, 7
        %v5069 = vsub.s32 %v5066, %v5068
        %v5070 = vrot.slane %v5054, %v5069
        %v5072 = vunpack.c.l.s4 1966171168
        %v5073 = vunpack.c.0.s8 %v5072
        %v5074 = vlaneseq
        %v5075 = vshrl.u32 %v5074, 7
        %v5076 = vsub.s32 %v5073, %v5075
        %v5077 = vrot.slane %v5055, %v5076
        %v5079 = vunpack.c.l.s4 1966171168
        %v5080 = vunpack.c.0.s8 %v5079
        %v5081 = vlaneseq
        %v5082 = vshrl.u32 %v5081, 7
        %v5083 = vsub.s32 %v5080, %v5082
        %v5084 = vrot.slane %v5056, %v5083
        %v5085 = vcombine.low %v5063, %v5070
        %v5086 = vcombine.low %v5077, %v5084
        %v5088 = vunpack.c.l.s4 1966171168
        %v5089 = vunpack.c.0.s8 %v5088
        %v5090 = vlaneseq
        %v5091 = vshrl.u32 %v5090, 7
        %v5092 = vsub.s32 %v5089, %v5091
        %v5093 = vrot.slane %v5085, %v5092
        %v5095 = vunpack.c.l.s4 1966171168
        %v5096 = vunpack.c.0.s8 %v5095
        %v5097 = vlaneseq
        %v5098 = vshrl.u32 %v5097, 7
        %v5099 = vsub.s32 %v5096, %v5098
        %v5100 = vrot.slane %v5086, %v5099
        %v5101 = vcombine.low %v5093, %v5100
        %v5102 = vcombine.low %v4683, %v4685
        %v5103 = vcombine.low %v4687, %v4689
        %v5104 = vcombine.low %v4691, %v4693
        %v5105 = vcombine.low %v4695, %v4697
        %v5107 = vunpack.c.l.s4 1966171168
        %v5108 = vunpack.c.0.s8 %v5107
        %v5109 = vlaneseq
        %v5110 = vshrl.u32 %v5109, 7
        %v5111 = vsub.s32 %v5108, %v5110
        %v5112 = vrot.slane %v5102, %v5111
        %v5114 = vunpack.c.l.s4 1966171168
        %v5115 = vunpack.c.0.s8 %v5114
        %v5116 = vlaneseq
        %v5117 = vshrl.u32 %v5116, 7
        %v5118 = vsub.s32 %v5115, %v5117
        %v5119 = vrot.slane %v5103, %v5118
        %v5121 = vunpack.c.l.s4 1966171168
        %v5122 = vunpack.c.0.s8 %v5121
        %v5123 = vlaneseq
        %v5124 = vshrl.u32 %v5123, 7
        %v5125 = vsub.s32 %v5122, %v5124
        %v5126 = vrot.slane %v5104, %v5125
        %v5128 = vunpack.c.l.s4 1966171168
        %v5129 = vunpack.c.0.s8 %v5128
        %v5130 = vlaneseq
        %v5131 = vshrl.u32 %v5130, 7
        %v5132 = vsub.s32 %v5129, %v5131
        %v5133 = vrot.slane %v5105, %v5132
        %v5134 = vcombine.low %v5112, %v5119
        %v5135 = vcombine.low %v5126, %v5133
        %v5137 = vunpack.c.l.s4 1966171168
        %v5138 = vunpack.c.0.s8 %v5137
        %v5139 = vlaneseq
        %v5140 = vshrl.u32 %v5139, 7
        %v5141 = vsub.s32 %v5138, %v5140
        %v5142 = vrot.slane %v5134, %v5141
        %v5144 = vunpack.c.l.s4 1966171168
        %v5145 = vunpack.c.0.s8 %v5144
        %v5146 = vlaneseq
        %v5147 = vshrl.u32 %v5146, 7
        %v5148 = vsub.s32 %v5145, %v5147
        %v5149 = vrot.slane %v5135, %v5148
        %v5150 = vcombine.low %v5142, %v5149
        %v5151 = vcombine.low %v4699, %v4701
        %v5152 = vcombine.low %v4703, %v4705
        %v5153 = vcombine.low %v4707, %v4709
        %v5154 = vcombine.low %v4711, %v4713
        %v5156 = vunpack.c.l.s4 1966171168
        %v5157 = vunpack.c.0.s8 %v5156
        %v5158 = vlaneseq
        %v5159 = vshrl.u32 %v5158, 7
        %v5160 = vsub.s32 %v5157, %v5159
        %v5161 = vrot.slane %v5151, %v5160
        %v5163 = vunpack.c.l.s4 1966171168
        %v5164 = vunpack.c.0.s8 %v5163
        %v5165 = vlaneseq
        %v5166 = vshrl.u32 %v5165, 7
        %v5167 = vsub.s32 %v5164, %v5166
        %v5168 = vrot.slane %v5152, %v5167
        %v5170 = vunpack.c.l.s4 1966171168
        %v5171 = vunpack.c.0.s8 %v5170
        %v5172 = vlaneseq
        %v5173 = vshrl.u32 %v5172, 7
        %v5174 = vsub.s32 %v5171, %v5173
        %v5175 = vrot.slane %v5153, %v5174
        %v5177 = vunpack.c.l.s4 1966171168
        %v5178 = vunpack.c.0.s8 %v5177
        %v5179 = vlaneseq
        %v5180 = vshrl.u32 %v5179, 7
        %v5181 = vsub.s32 %v5178, %v5180
        %v5182 = vrot.slane %v5154, %v5181
        %v5183 = vcombine.low %v5161, %v5168
        %v5184 = vcombine.low %v5175, %v5182
        %v5186 = vunpack.c.l.s4 1966171168
        %v5187 = vunpack.c.0.s8 %v5186
        %v5188 = vlaneseq
        %v5189 = vshrl.u32 %v5188, 7
        %v5190 = vsub.s32 %v5187, %v5189
        %v5191 = vrot.slane %v5183, %v5190
        %v5193 = vunpack.c.l.s4 1966171168
        %v5194 = vunpack.c.0.s8 %v5193
        %v5195 = vlaneseq
        %v5196 = vshrl.u32 %v5195, 7
        %v5197 = vsub.s32 %v5194, %v5196
        %v5198 = vrot.slane %v5184, %v5197
        %v5199 = vcombine.low %v5191, %v5198
        %v5200 = vcombine.low %v4715, %v4717
        %v5201 = vcombine.low %v4719, %v4721
        %v5202 = vcombine.low %v4723, %v4725
        %v5203 = vcombine.low %v4727, %v4729
        %v5205 = vunpack.c.l.s4 1966171168
        %v5206 = vunpack.c.0.s8 %v5205
        %v5207 = vlaneseq
        %v5208 = vshrl.u32 %v5207, 7
        %v5209 = vsub.s32 %v5206, %v5208
        %v5210 = vrot.slane %v5200, %v5209
        %v5212 = vunpack.c.l.s4 1966171168
        %v5213 = vunpack.c.0.s8 %v5212
        %v5214 = vlaneseq
        %v5215 = vshrl.u32 %v5214, 7
        %v5216 = vsub.s32 %v5213, %v5215
        %v5217 = vrot.slane %v5201, %v5216
        %v5219 = vunpack.c.l.s4 1966171168
        %v5220 = vunpack.c.0.s8 %v5219
        %v5221 = vlaneseq
        %v5222 = vshrl.u32 %v5221, 7
        %v5223 = vsub.s32 %v5220, %v5222
        %v5224 = vrot.slane %v5202, %v5223
        %v5226 = vunpack.c.l.s4 1966171168
        %v5227 = vunpack.c.0.s8 %v5226
        %v5228 = vlaneseq
        %v5229 = vshrl.u32 %v5228, 7
        %v5230 = vsub.s32 %v5227, %v5229
        %v5231 = vrot.slane %v5203, %v5230
        %v5232 = vcombine.low %v5210, %v5217
        %v5233 = vcombine.low %v5224, %v5231
        %v5235 = vunpack.c.l.s4 1966171168
        %v5236 = vunpack.c.0.s8 %v5235
        %v5237 = vlaneseq
        %v5238 = vshrl.u32 %v5237, 7
        %v5239 = vsub.s32 %v5236, %v5238
        %v5240 = vrot.slane %v5232, %v5239
        %v5242 = vunpack.c.l.s4 1966171168
        %v5243 = vunpack.c.0.s8 %v5242
        %v5244 = vlaneseq
        %v5245 = vshrl.u32 %v5244, 7
        %v5246 = vsub.s32 %v5243, %v5245
        %v5247 = vrot.slane %v5233, %v5246
        %v5248 = vcombine.low %v5240, %v5247
        %v5249 = vcombine.low %v4731, %v4733
        %v5250 = vcombine.low %v4735, %v4737
        %v5251 = vcombine.low %v4739, %v4741
        %v5252 = vcombine.low %v4743, %v4745
        %v5254 = vunpack.c.l.s4 1966171168
        %v5255 = vunpack.c.0.s8 %v5254
        %v5256 = vlaneseq
        %v5257 = vshrl.u32 %v5256, 7
        %v5258 = vsub.s32 %v5255, %v5257
        %v5259 = vrot.slane %v5249, %v5258
        %v5261 = vunpack.c.l.s4 1966171168
        %v5262 = vunpack.c.0.s8 %v5261
        %v5263 = vlaneseq
        %v5264 = vshrl.u32 %v5263, 7
        %v5265 = vsub.s32 %v5262, %v5264
        %v5266 = vrot.slane %v5250, %v5265
        %v5268 = vunpack.c.l.s4 1966171168
        %v5269 = vunpack.c.0.s8 %v5268
        %v5270 = vlaneseq
        %v5271 = vshrl.u32 %v5270, 7
        %v5272 = vsub.s32 %v5269, %v5271
        %v5273 = vrot.slane %v5251, %v5272
        %v5275 = vunpack.c.l.s4 1966171168
        %v5276 = vunpack.c.0.s8 %v5275
        %v5277 = vlaneseq
        %v5278 = vshrl.u32 %v5277, 7
        %v5279 = vsub.s32 %v5276, %v5278
        %v5280 = vrot.slane %v5252, %v5279
        %v5281 = vcombine.low %v5259, %v5266
        %v5282 = vcombine.low %v5273, %v5280
        %v5284 = vunpack.c.l.s4 1966171168
        %v5285 = vunpack.c.0.s8 %v5284
        %v5286 = vlaneseq
        %v5287 = vshrl.u32 %v5286, 7
        %v5288 = vsub.s32 %v5285, %v5287
        %v5289 = vrot.slane %v5281, %v5288
        %v5291 = vunpack.c.l.s4 1966171168
        %v5292 = vunpack.c.0.s8 %v5291
        %v5293 = vlaneseq
        %v5294 = vshrl.u32 %v5293, 7
        %v5295 = vsub.s32 %v5292, %v5294
        %v5296 = vrot.slane %v5282, %v5295
        %v5297 = vcombine.low %v5289, %v5296
        %v5298 = vcombine.low %v4747, %v4749
        %v5299 = vcombine.low %v4751, %v4753
        %v5300 = vcombine.low %v4755, %v4757
        %v5301 = vcombine.low %v4759, %v4761
        %v5303 = vunpack.c.l.s4 1966171168
        %v5304 = vunpack.c.0.s8 %v5303
        %v5305 = vlaneseq
        %v5306 = vshrl.u32 %v5305, 7
        %v5307 = vsub.s32 %v5304, %v5306
        %v5308 = vrot.slane %v5298, %v5307
        %v5310 = vunpack.c.l.s4 1966171168
        %v5311 = vunpack.c.0.s8 %v5310
        %v5312 = vlaneseq
        %v5313 = vshrl.u32 %v5312, 7
        %v5314 = vsub.s32 %v5311, %v5313
        %v5315 = vrot.slane %v5299, %v5314
        %v5317 = vunpack.c.l.s4 1966171168
        %v5318 = vunpack.c.0.s8 %v5317
        %v5319 = vlaneseq
        %v5320 = vshrl.u32 %v5319, 7
        %v5321 = vsub.s32 %v5318, %v5320
        %v5322 = vrot.slane %v5300, %v5321
        %v5324 = vunpack.c.l.s4 1966171168
        %v5325 = vunpack.c.0.s8 %v5324
        %v5326 = vlaneseq
        %v5327 = vshrl.u32 %v5326, 7
        %v5328 = vsub.s32 %v5325, %v5327
        %v5329 = vrot.slane %v5301, %v5328
        %v5330 = vcombine.low %v5308, %v5315
        %v5331 = vcombine.low %v5322, %v5329
        %v5333 = vunpack.c.l.s4 1966171168
        %v5334 = vunpack.c.0.s8 %v5333
        %v5335 = vlaneseq
        %v5336 = vshrl.u32 %v5335, 7
        %v5337 = vsub.s32 %v5334, %v5336
        %v5338 = vrot.slane %v5330, %v5337
        %v5340 = vunpack.c.l.s4 1966171168
        %v5341 = vunpack.c.0.s8 %v5340
        %v5342 = vlaneseq
        %v5343 = vshrl.u32 %v5342, 7
        %v5344 = vsub.s32 %v5341, %v5343
        %v5345 = vrot.slane %v5331, %v5344
        %v5346 = vcombine.low %v5338, %v5345
        %v5347 = vcombine.low %v4763, %v4765
        %v5348 = vcombine.low %v4767, %v4769
        %v5349 = vcombine.low %v4771, %v4773
        %v5350 = vcombine.low %v4775, %v4777
        %v5352 = vunpack.c.l.s4 1966171168
        %v5353 = vunpack.c.0.s8 %v5352
        %v5354 = vlaneseq
        %v5355 = vshrl.u32 %v5354, 7
        %v5356 = vsub.s32 %v5353, %v5355
        %v5357 = vrot.slane %v5347, %v5356
        %v5359 = vunpack.c.l.s4 1966171168
        %v5360 = vunpack.c.0.s8 %v5359
        %v5361 = vlaneseq
        %v5362 = vshrl.u32 %v5361, 7
        %v5363 = vsub.s32 %v5360, %v5362
        %v5364 = vrot.slane %v5348, %v5363
        %v5366 = vunpack.c.l.s4 1966171168
        %v5367 = vunpack.c.0.s8 %v5366
        %v5368 = vlaneseq
        %v5369 = vshrl.u32 %v5368, 7
        %v5370 = vsub.s32 %v5367, %v5369
        %v5371 = vrot.slane %v5349, %v5370
        %v5373 = vunpack.c.l.s4 1966171168
        %v5374 = vunpack.c.0.s8 %v5373
        %v5375 = vlaneseq
        %v5376 = vshrl.u32 %v5375, 7
        %v5377 = vsub.s32 %v5374, %v5376
        %v5378 = vrot.slane %v5350, %v5377
        %v5379 = vcombine.low %v5357, %v5364
        %v5380 = vcombine.low %v5371, %v5378
        %v5382 = vunpack.c.l.s4 1966171168
        %v5383 = vunpack.c.0.s8 %v5382
        %v5384 = vlaneseq
        %v5385 = vshrl.u32 %v5384, 7
        %v5386 = vsub.s32 %v5383, %v5385
        %v5387 = vrot.slane %v5379, %v5386
        %v5389 = vunpack.c.l.s4 1966171168
        %v5390 = vunpack.c.0.s8 %v5389
        %v5391 = vlaneseq
        %v5392 = vshrl.u32 %v5391, 7
        %v5393 = vsub.s32 %v5390, %v5392
        %v5394 = vrot.slane %v5380, %v5393
        %v5395 = vcombine.low %v5387, %v5394
        %v5396 = vcombine.low %v4779, %v4781
        %v5397 = vcombine.low %v4783, %v4785
        %v5398 = vcombine.low %v4787, %v4789
        %v5399 = vcombine.low %v4791, %v4793
        %v5401 = vunpack.c.l.s4 1966171168
        %v5402 = vunpack.c.0.s8 %v5401
        %v5403 = vlaneseq
        %v5404 = vshrl.u32 %v5403, 7
        %v5405 = vsub.s32 %v5402, %v5404
        %v5406 = vrot.slane %v5396, %v5405
        %v5408 = vunpack.c.l.s4 1966171168
        %v5409 = vunpack.c.0.s8 %v5408
        %v5410 = vlaneseq
        %v5411 = vshrl.u32 %v5410, 7
        %v5412 = vsub.s32 %v5409, %v5411
        %v5413 = vrot.slane %v5397, %v5412
        %v5415 = vunpack.c.l.s4 1966171168
        %v5416 = vunpack.c.0.s8 %v5415
        %v5417 = vlaneseq
        %v5418 = vshrl.u32 %v5417, 7
        %v5419 = vsub.s32 %v5416, %v5418
        %v5420 = vrot.slane %v5398, %v5419
        %v5422 = vunpack.c.l.s4 1966171168
        %v5423 = vunpack.c.0.s8 %v5422
        %v5424 = vlaneseq
        %v5425 = vshrl.u32 %v5424, 7
        %v5426 = vsub.s32 %v5423, %v5425
        %v5427 = vrot.slane %v5399, %v5426
        %v5428 = vcombine.low %v5406, %v5413
        %v5429 = vcombine.low %v5420, %v5427
        %v5431 = vunpack.c.l.s4 1966171168
        %v5432 = vunpack.c.0.s8 %v5431
        %v5433 = vlaneseq
        %v5434 = vshrl.u32 %v5433, 7
        %v5435 = vsub.s32 %v5432, %v5434
        %v5436 = vrot.slane %v5428, %v5435
        %v5438 = vunpack.c.l.s4 1966171168
        %v5439 = vunpack.c.0.s8 %v5438
        %v5440 = vlaneseq
        %v5441 = vshrl.u32 %v5440, 7
        %v5442 = vsub.s32 %v5439, %v5441
        %v5443 = vrot.slane %v5429, %v5442
        %v5444 = vcombine.low %v5436, %v5443
        %v5445 = vcombine.low %v4795, %v4797
        %v5446 = vcombine.low %v4799, %v4801
        %v5447 = vcombine.low %v4803, %v4805
        %v5448 = vcombine.low %v4807, %v4809
        %v5450 = vunpack.c.l.s4 1966171168
        %v5451 = vunpack.c.0.s8 %v5450
        %v5452 = vlaneseq
        %v5453 = vshrl.u32 %v5452, 7
        %v5454 = vsub.s32 %v5451, %v5453
        %v5455 = vrot.slane %v5445, %v5454
        %v5457 = vunpack.c.l.s4 1966171168
        %v5458 = vunpack.c.0.s8 %v5457
        %v5459 = vlaneseq
        %v5460 = vshrl.u32 %v5459, 7
        %v5461 = vsub.s32 %v5458, %v5460
        %v5462 = vrot.slane %v5446, %v5461
        %v5464 = vunpack.c.l.s4 1966171168
        %v5465 = vunpack.c.0.s8 %v5464
        %v5466 = vlaneseq
        %v5467 = vshrl.u32 %v5466, 7
        %v5468 = vsub.s32 %v5465, %v5467
        %v5469 = vrot.slane %v5447, %v5468
        %v5471 = vunpack.c.l.s4 1966171168
        %v5472 = vunpack.c.0.s8 %v5471
        %v5473 = vlaneseq
        %v5474 = vshrl.u32 %v5473, 7
        %v5475 = vsub.s32 %v5472, %v5474
        %v5476 = vrot.slane %v5448, %v5475
        %v5477 = vcombine.low %v5455, %v5462
        %v5478 = vcombine.low %v5469, %v5476
        %v5480 = vunpack.c.l.s4 1966171168
        %v5481 = vunpack.c.0.s8 %v5480
        %v5482 = vlaneseq
        %v5483 = vshrl.u32 %v5482, 7
        %v5484 = vsub.s32 %v5481, %v5483
        %v5485 = vrot.slane %v5477, %v5484
        %v5487 = vunpack.c.l.s4 1966171168
        %v5488 = vunpack.c.0.s8 %v5487
        %v5489 = vlaneseq
        %v5490 = vshrl.u32 %v5489, 7
        %v5491 = vsub.s32 %v5488, %v5490
        %v5492 = vrot.slane %v5478, %v5491
        %v5493 = vcombine.low %v5485, %v5492
        %5506 = vst [vmem:[%s409] sm:$0xff] %v4954
        %5507 = vst [vmem:[%s409 + $0x8] sm:$0xff] %v5003
        %5508 = vst [vmem:[%s409 + $0x10] sm:$0xff] %v5052
        %5509 = vst [vmem:[%s409 + $0x18] sm:$0xff] %v5101
        %5510 = vst [vmem:[%s409 + $0x20] sm:$0xff] %v5150
        %5511 = vst [vmem:[%s409 + $0x28] sm:$0xff] %v5199
        %5512 = vst [vmem:[%s409 + $0x30] sm:$0xff] %v5248
        %5513 = vst [vmem:[%s409 + $0x38] sm:$0xff] %v5297
        %5514 = vst [vmem:[%s409 + $0x40] sm:$0xff] %v5346
        %5515 = vst [vmem:[%s409 + $0x48] sm:$0xff] %v5395
        %5516 = vst [vmem:[%s409 + $0x50] sm:$0xff] %v5444
        %5517 = vst [vmem:[%s409 + $0x58] sm:$0xff] %v5493
        %s5518 = sand.u32 %s213, 1
        %s5519 = scalar_lea.sflag [#allocation5], %s5518
        %s5520 = sand.u32 %s213, 1
        %s5521 = smul.addr %s5520, 96
        %s5522 = scalar_lea.vmem [#allocation13], %s5521
        // Predicated region
        $region77: #{tpu_custom_call.1} parent=47 // pred_check
          %p5523 = pneg %p223
        $region78: #{tpu_custom_call.1} parent=47 // pred_check_branch
          %5525 = sbr.rel (%p5523) target = $region80
        $region79: #{tpu_custom_call.1} parent=47 // pred_region
          %s5526 = smul.u32 %s28, 2
          %s5527 = sadd.s32 %s5526, %s29
          %s5528 = smul.u32 96, %s5527
          %s5530 = ssub.s32 1536, 1536
          %5531 = vsyncadd %s5519, %s5530
          %s5532 = smul.addr %s5528, 16
          %s5533 = scalar_lea.hbm %s7, %s5532
          %s5535 = sshll.u32 %s5522, 4
          %s5536 = int_to_ptr.vmem [resolvable:$true] %s5535
          %5538 = dma.vmem_to_hbm [thread:$0]  %s5536, 1536, %s5533, %s5519
        $region80: #{tpu_custom_call.1} parent=47 // pred_fallthru
          _
      $region48: #{tpu_custom_call.1} parent=5 // pred_fallthru
        _
      %p5539 = scmp.le.s32.totalorder 2, %s19
      // Predicated region
      $region81: #{tpu_custom_call.1} parent=5 // pred_check
        %p5540 = pneg %p5539
      $region82: #{tpu_custom_call.1} parent=5 // pred_check_branch
        %5542 = sbr.rel (%p5540) target = $region84
      $region83: #{tpu_custom_call.1} parent=5 // pred_region
        %s5543 = ssub.s32 %s19, 2
        // Predicated region
        $region85: #{tpu_custom_call.1} parent=83 // pred_check
          %p5544 = pneg %p229
        $region86: #{tpu_custom_call.1} parent=83 // pred_check_branch
          %5546 = sbr.rel (%p5544) target = $region88
        $region87: #{tpu_custom_call.1} parent=83 // pred_region
          %s5547 = sand.u32 %s214, 1
          %s5548 = scalar_lea.sflag [#allocation5], %s5547
          %s5549 = sand.u32 %s214, 1
          %s5550 = smul.addr %s5549, 96
          %s5551 = scalar_lea.vmem [#allocation13], %s5550
          %5552 = dma.done %s5548, 1536
        $region88: #{tpu_custom_call.1} parent=83 // pred_fallthru
          _
      $region84: #{tpu_custom_call.1} parent=5 // pred_fallthru
        _
    $region6: #{tpu_custom_call.1} parent=1 // loop_footer
      %s23 = sadd.s32 1, %s19
    $region7: #{tpu_custom_call.1} parent=1 // loop_footer_branch
      %18 = sbr.rel target = $region3
    $region8: #{tpu_custom_call.1} parent=1 // loop_exit
      _
    %5553 = vsyncpa [#allocation4], 1
    %s5554 = scalar_lea.sflag [#allocation4], 1
    %5555 = vsyncpa %s5554, 1
    %5556 = vsyncpa [#allocation7], 1
    %5557 = vsyncpa [#allocation10], 1
    %5558 = vsyncpa [#allocation5], 1
    %s5559 = scalar_lea.sflag [#allocation5], 1
    %5560 = vsyncpa %s5559, 1

</llo_original>
